<compile_context>
chip_gen: v6e
topology: v6e:2x2x1
jax: 0.10.0
libtpu: 0.0.40
codegen_flags: <defaults>
</compile_context>

<pallas_src>
import numpy as np
import jax
import jax.numpy as jnp
from jax.experimental import pallas as pl
from jax.experimental.pallas import tpu as pltpu


def ode_fno_kernel(
    inp_ref,     # (TBN, Din)        flattened tokens of [h_0, z]
    wfc0_ref,    # (Din, W)          fc0 weight (in, out)
    bfc0_ref,    # (1, W)
    fwdc_ref,    # (TBM, TBN)        block-diag truncated rDFT, cos part
    fwds_ref,    # (TBM, TBN)        block-diag truncated rDFT, -sin part
    invc_ref,    # (TBN, TBM)        block-diag inverse rDFT, real coeffs
    invs_ref,    # (TBN, TBM)        block-diag inverse rDFT, imag coeffs
    wtop_ref,    # (L, W, modes*2W)  per-mode [wr | wi] laid out in mode blocks
    wbot_ref,    # (L, W, modes*2W)  per-mode [-wi | wr]
    mask_ref,    # (TBM, modes*2W)   each row keeps only its own mode block
    sre_ref,     # (modes*2W, W)     sums real slots over mode blocks
    sim_ref,     # (modes*2W, W)     sums imag slots over mode blocks
    wconv_ref,   # (L, W, W)         1x1 Conv1d weight [l, in, out]
    bconv_ref,   # (L, 1, W)
    w1_ref,      # (W, Fc)           final_fc layer 1
    b1_ref,      # (1, Fc)
    w2_ref,      # (Fc, Dout)        final_fc layer 2
    b2_ref,      # (1, Dout)
    out_ref,     # (TBN, Dout)
):
    f32 = jnp.float32
    # fc0 over all tokens of the batch tile at once
    x = jnp.dot(inp_ref[...], wfc0_ref[...], preferred_element_type=f32) + bfc0_ref[...]

    fwdc, fwds = fwdc_ref[...], fwds_ref[...]
    invc, invs = invc_ref[...], invs_ref[...]
    mask = mask_ref[...]
    sre, sim = sre_ref[...], sim_ref[...]

    num_layers = wconv_ref.shape[0]
    for l in range(num_layers):                       # static unroll over Fourier layers
        # truncated forward rDFT of every batch element at once (block-diagonal)
        xr = jnp.dot(fwdc, x, preferred_element_type=f32)             # (TBM, W)
        xi = jnp.dot(fwds, x, preferred_element_type=f32)             # (TBM, W)
        # per-mode complex channel mixing, done with plain matmuls:
        # compute the result under EVERY mode's weight (mode-blocked columns),
        # mask each row down to its own mode block, then sum blocks back.
        full = (jnp.dot(xr, wtop_ref[l], preferred_element_type=f32)
                + jnp.dot(xi, wbot_ref[l], preferred_element_type=f32))  # (TBM, modes*2W)
        full = full * mask
        o_re = jnp.dot(full, sre, preferred_element_type=f32)         # (TBM, W)
        o_im = jnp.dot(full, sim, preferred_element_type=f32)         # (TBM, W)
        # inverse truncated rDFT (block-diagonal)
        x1 = (jnp.dot(invc, o_re, preferred_element_type=f32)
              + jnp.dot(invs, o_im, preferred_element_type=f32))      # (TBN, W)
        # 1x1 Conv1d == per-token channel matmul + bias
        x2 = jnp.dot(x, wconv_ref[l], preferred_element_type=f32) + bconv_ref[l]
        x = jnp.maximum(x1 + x2, 0.0)                                  # ReLU

    # final_fc: Linear -> ReLU -> Linear (num_fc_layers == 2, the default)
    h = jnp.maximum(jnp.dot(x, w1_ref[...], preferred_element_type=f32) + b1_ref[...], 0.0)
    out_ref[...] = jnp.dot(h, w2_ref[...], preferred_element_type=f32) + b2_ref[...]


def make_dft_matrices(n, modes):
    """Real-valued truncated rDFT / inverse rDFT matrices (mathematically the
    same as torch.fft.rfft / irfft restricted to the first `modes` bins, for
    modes <= n // 2, i.e. no Nyquist bin among retained modes)."""
    assert modes <= n // 2, "kernel assumes no Nyquist bin among retained modes"
    k = np.arange(modes, dtype=np.float64)[:, None]
    nn = np.arange(n, dtype=np.float64)[None, :]
    ang = 2.0 * np.pi * k * nn / n
    fct = np.cos(ang)                          # (modes, N)
    fst = -np.sin(ang)                         # (modes, N)
    c = np.where(k == 0, 1.0, 2.0)             # DC bin counted once
    ict = (c * np.cos(ang) / n).T              # (N, modes)
    ist = (-c * np.sin(ang) / n).T             # (N, modes)
    return fct, fst, ict, ist


def make_spectral_operators(n, modes, tb):
    """Block-diagonal (over a batch tile of size tb) forward / inverse
    truncated rDFT operators, float32, split into cos / sin parts."""
    fct, fst, ict, ist = make_dft_matrices(n, modes)
    eye = np.eye(tb)
    fwdc = np.kron(eye, fct).astype(np.float32)    # (tb*modes, tb*N)
    fwds = np.kron(eye, fst).astype(np.float32)
    invc = np.kron(eye, ict).astype(np.float32)    # (tb*N, tb*modes)
    invs = np.kron(eye, ist).astype(np.float32)
    return fwdc, fwds, invc, invs


def make_mode_select_operators(modes, width, tb):
    """Mask that keeps each (batch, mode) row's own mode block, plus the
    select-sum operators that collapse mode blocks back to (re, im) channels."""
    w2 = 2 * width
    mask = np.tile(np.kron(np.eye(modes), np.ones((1, w2))), (tb, 1)).astype(np.float32)
    sre = np.tile(np.concatenate([np.eye(width), np.zeros((width, width))], axis=0),
                  (modes, 1)).astype(np.float32)                      # (modes*2W, W)
    sim = np.tile(np.concatenate([np.zeros((width, width)), np.eye(width)], axis=0),
                  (modes, 1)).astype(np.float32)                      # (modes*2W, W)
    return mask, sre, sim


def make_spectral_weights(wr, wi):
    """Per-mode complex weights -> mode-blocked real matrices.
    wtop[l, i, k*2W + d] = wr[l,k,i,d] (d<W) / wi[l,k,i,d-W] (d>=W)
    wbot[l, i, k*2W + d] = -wi[l,k,i,d] (d<W) / wr[l,k,i,d-W] (d>=W)."""
    L, modes, W, _ = wr.shape
    top = jnp.concatenate([wr, wi], axis=-1)                 # (L, modes, W, 2W)
    bot = jnp.concatenate([-wi, wr], axis=-1)                # (L, modes, W, 2W)
    wtop = jnp.transpose(top, (0, 2, 1, 3)).reshape(L, W, modes * 2 * W)
    wbot = jnp.transpose(bot, (0, 2, 1, 3)).reshape(L, W, modes * 2 * W)
    return wtop, wbot


def init_params(key, input_dim, output_dim, num_fno_layers, modes, width, fc_width):
    ks = jax.random.split(key, 10)

    def uniform(k, shape, bound):
        return jax.random.uniform(k, shape, jnp.float32, -bound, bound)

    p = {}
    b0 = 1.0 / np.sqrt(input_dim)
    p['wfc0'] = uniform(ks[0], (input_dim, width), b0)                 # (in, out)
    p['bfc0'] = uniform(ks[1], (1, width), b0)
    scale = 1.0 / (width * width)
    p['wr'] = scale * jax.random.uniform(ks[2], (num_fno_layers, modes, width, width), jnp.float32)
    p['wi'] = scale * jax.random.uniform(ks[3], (num_fno_layers, modes, width, width), jnp.float32)
    bc = 1.0 / np.sqrt(width)
    p['wconv'] = uniform(ks[4], (num_fno_layers, width, width), bc)    # [l, in, out]
    p['bconv'] = uniform(ks[5], (num_fno_layers, 1, width), bc)
    p['w1'] = uniform(ks[6], (width, fc_width), bc)
    p['b1'] = uniform(ks[7], (1, fc_width), bc)
    bf = 1.0 / np.sqrt(fc_width)
    p['w2'] = uniform(ks[8], (fc_width, output_dim), bf)
    p['b2'] = uniform(ks[9], (1, output_dim), bf)
    return p


def ode_fno_forward(h0, z, params, *, modes, output_dim, batch_tile=None):
    B, N = h0.shape
    zd = z.shape[1]
    din = 1 + zd
    W = params['wfc0'].shape[1]
    L = params['wr'].shape[0]
    fc_width = params['w1'].shape[1]

    tb = B if batch_tile is None else batch_tile
    assert B % tb == 0
    num_tiles = B // tb
    tbn = tb * N
    tbm = tb * modes
    m2w = modes * 2 * W

    # glue: input concat (h_0 expanded + z broadcast) + flatten to tokens
    inp = jnp.concatenate(
        [h0[:, :, None], jnp.broadcast_to(z[:, None, :], (B, N, zd))], axis=-1)  # (B,N,Din)
    inp = inp.reshape(B * N, din)                                                # (B*N, Din)

    fwdc, fwds, invc, invs = map(jnp.asarray, make_spectral_operators(N, modes, tb))
    mask, sre, sim = map(jnp.asarray, make_mode_select_operators(modes, W, tb))
    wtop, wbot = make_spectral_weights(params['wr'], params['wi'])

    args = [inp, params['wfc0'], params['bfc0'],
            fwdc, fwds, invc, invs,
            wtop, wbot, mask, sre, sim,
            params['wconv'], params['bconv'],
            params['w1'], params['b1'], params['w2'], params['b2']]

    def tiled_spec(a, rows):
        zeros = (0,) * (a.ndim - 1)
        return pl.BlockSpec((rows,) + a.shape[1:], lambda i: (i,) + zeros)

    def full_spec(a):
        zeros = (0,) * a.ndim
        return pl.BlockSpec(a.shape, lambda i: zeros)        # constant: fetched once

    in_specs = [tiled_spec(inp, tbn)] + [full_spec(a) for a in args[1:]]
    out_spec = pl.BlockSpec((tbn, output_dim), lambda i: (i, 0))

    # advisory cost estimate for XLA's scheduler
    layer_flops = (2 * 2 * tbm * tbn * W          # forward rDFT (re, im)
                   + 2 * 2 * tbm * W * m2w        # mode-blocked weight matmuls
                   + 2 * 2 * tbm * m2w * W        # mode select-sum matmuls
                   + 2 * 2 * tbn * tbm * W        # inverse rDFT
                   + 2 * tbn * W * W)             # 1x1 conv
    flops = num_tiles * (2 * tbn * din * W + L * layer_flops
                         + 2 * tbn * W * fc_width + 2 * tbn * fc_width * output_dim)
    bytes_accessed = int(sum(int(np.prod(a.shape)) * a.dtype.itemsize for a in args)
                         + B * N * output_dim * 4)

    out = pl.pallas_call(
        ode_fno_kernel,
        out_shape=jax.ShapeDtypeStruct((B * N, output_dim), jnp.float32),
        grid_spec=pltpu.PrefetchScalarGridSpec(
            num_scalar_prefetch=0,
            grid=(num_tiles,),
            in_specs=in_specs,
            out_specs=out_spec,
        ),
        compiler_params=pltpu.CompilerParams(
            dimension_semantics=("parallel",)),
        cost_estimate=pl.CostEstimate(flops=int(flops), transcendentals=0,
                                      bytes_accessed=bytes_accessed),
    )(*args)

    out = out.reshape(B, N, output_dim)
    if output_dim == 1:
        return out[..., 0]
    return out


def ode_fno_reference(h0, z, params, *, modes, output_dim):
    """Pure-JAX reference using real FFTs (mirrors the torch forward)."""
    B, N = h0.shape
    zd = z.shape[1]
    inp = jnp.concatenate(
        [h0[:, :, None], jnp.broadcast_to(z[:, None, :], (B, N, zd))], axis=-1)
    x = inp @ params['wfc0'] + params['bfc0']                     # (B, N, W)
    L = params['wr'].shape[0]
    for l in range(L):
        x_ft = jnp.fft.rfft(x, axis=1)                            # (B, N//2+1, W)
        wc = params['wr'][l] + 1j * params['wi'][l]               # (modes, W, W) [k,i,o]
        prod = jnp.einsum('bki,kio->bko', x_ft[:, :modes, :], wc)
        out_ft = jnp.zeros_like(x_ft).at[:, :modes, :].set(prod)
        x1 = jnp.fft.irfft(out_ft, n=N, axis=1)
        x2 = x @ params['wconv'][l] + params['bconv'][l]
        x = jax.nn.relu(x1 + x2)
    h = jax.nn.relu(x @ params['w1'] + params['b1'])
    y = h @ params['w2'] + params['b2']
    if output_dim == 1:
        return y[..., 0]
    return y


if __name__ == "__main__":
    # Small shapes consistent with the module's forward(h_0, z).
    B, N = 2, 32            # batch, grid_size
    z_dim = 3
    input_dim = 1 + z_dim   # concat([h_0_expanded, z_expanded], -1)
    output_dim = 1
    num_fno_layers = 2
    modes = 8
    width = 32
    fc_width = 64

    key = jax.random.PRNGKey(0)
    kp, kh, kz = jax.random.split(key, 3)
    params = init_params(kp, input_dim, output_dim, num_fno_layers, modes, width, fc_width)
    h0 = jax.random.normal(kh, (B, N), jnp.float32)
    z = jax.random.normal(kz, (B, z_dim), jnp.float32)

    out = ode_fno_forward(h0, z, params, modes=modes, output_dim=output_dim)
    out = jax.block_until_ready(out)
    assert out.shape == (B, N), out.shape

    ref = jax.block_until_ready(
        ode_fno_reference(h0, z, params, modes=modes, output_dim=output_dim))
    err = float(jnp.max(jnp.abs(out - ref)))
    assert err < 5e-3, f"max abs err {err}"

    print("KERNEL_OK")
</pallas_src>

<mosaic_0001>
module attributes {stable_mosaic.version = 11 : i64} {
  func.func @ode_fno_kernel(%arg0: i32, %arg1: memref<64x4xf32, #tpu.memory_space<vmem>>, %arg2: memref<4x32xf32, #tpu.memory_space<vmem>>, %arg3: memref<1x32xf32, #tpu.memory_space<vmem>>, %arg4: memref<16x64xf32, #tpu.memory_space<vmem>>, %arg5: memref<16x64xf32, #tpu.memory_space<vmem>>, %arg6: memref<64x16xf32, #tpu.memory_space<vmem>>, %arg7: memref<64x16xf32, #tpu.memory_space<vmem>>, %arg8: memref<2x32x512xf32, #tpu.memory_space<vmem>>, %arg9: memref<2x32x512xf32, #tpu.memory_space<vmem>>, %arg10: memref<16x512xf32, #tpu.memory_space<vmem>>, %arg11: memref<512x32xf32, #tpu.memory_space<vmem>>, %arg12: memref<512x32xf32, #tpu.memory_space<vmem>>, %arg13: memref<2x32x32xf32, #tpu.memory_space<vmem>>, %arg14: memref<2x1x32xf32, #tpu.memory_space<vmem>>, %arg15: memref<32x64xf32, #tpu.memory_space<vmem>>, %arg16: memref<1x64xf32, #tpu.memory_space<vmem>>, %arg17: memref<64x1xf32, #tpu.memory_space<vmem>>, %arg18: memref<1x1xf32, #tpu.memory_space<vmem>>, %arg19: memref<64x1xf32, #tpu.memory_space<vmem>>) attributes {dimension_semantics = [#tpu.dimension_semantics<parallel>], iteration_bounds = array<i64: 1>, scalar_prefetch = 0 : i64, scratch_operands = 0 : i64, tpu.core_type = #tpu.core_type<tc>, window_params = [{transform_indices = @transform_0, window_bounds = array<i64: 64, 4>}, {pipeline_mode = #tpu.pipeline_mode<synchronous>, transform_indices = @transform_1, window_bounds = array<i64: 4, 32>}, {pipeline_mode = #tpu.pipeline_mode<synchronous>, transform_indices = @transform_2, window_bounds = array<i64: 1, 32>}, {pipeline_mode = #tpu.pipeline_mode<synchronous>, transform_indices = @transform_3, window_bounds = array<i64: 16, 64>}, {pipeline_mode = #tpu.pipeline_mode<synchronous>, transform_indices = @transform_4, window_bounds = array<i64: 16, 64>}, {pipeline_mode = #tpu.pipeline_mode<synchronous>, transform_indices = @transform_5, window_bounds = array<i64: 64, 16>}, {pipeline_mode = #tpu.pipeline_mode<synchronous>, transform_indices = @transform_6, window_bounds = array<i64: 64, 16>}, {pipeline_mode = #tpu.pipeline_mode<synchronous>, transform_indices = @transform_7, window_bounds = array<i64: 2, 32, 512>}, {pipeline_mode = #tpu.pipeline_mode<synchronous>, transform_indices = @transform_8, window_bounds = array<i64: 2, 32, 512>}, {pipeline_mode = #tpu.pipeline_mode<synchronous>, transform_indices = @transform_9, window_bounds = array<i64: 16, 512>}, {pipeline_mode = #tpu.pipeline_mode<synchronous>, transform_indices = @transform_10, window_bounds = array<i64: 512, 32>}, {pipeline_mode = #tpu.pipeline_mode<synchronous>, transform_indices = @transform_11, window_bounds = array<i64: 512, 32>}, {pipeline_mode = #tpu.pipeline_mode<synchronous>, transform_indices = @transform_12, window_bounds = array<i64: 2, 32, 32>}, {pipeline_mode = #tpu.pipeline_mode<synchronous>, transform_indices = @transform_13, window_bounds = array<i64: 2, 1, 32>}, {pipeline_mode = #tpu.pipeline_mode<synchronous>, transform_indices = @transform_14, window_bounds = array<i64: 32, 64>}, {pipeline_mode = #tpu.pipeline_mode<synchronous>, transform_indices = @transform_15, window_bounds = array<i64: 1, 64>}, {pipeline_mode = #tpu.pipeline_mode<synchronous>, transform_indices = @transform_16, window_bounds = array<i64: 64, 1>}, {pipeline_mode = #tpu.pipeline_mode<synchronous>, transform_indices = @transform_17, window_bounds = array<i64: 1, 1>}, {transform_indices = @transform_18, window_bounds = array<i64: 64, 1>}]} {
    %c0 = arith.constant 0 : index
    %c0_0 = arith.constant 0 : index
    %0 = vector.load %arg1[%c0, %c0_0] : memref<64x4xf32, #tpu.memory_space<vmem>>, vector<64x4xf32>
    %c0_1 = arith.constant 0 : index
    %c0_2 = arith.constant 0 : index
    %1 = vector.load %arg2[%c0_1, %c0_2] : memref<4x32xf32, #tpu.memory_space<vmem>>, vector<4x32xf32>
    %cst = arith.constant dense<0.000000e+00> : vector<64x32xf32>
    %2 = tpu.matmul %0, %1, %cst {dimension_numbers = #tpu.dot_dimension_numbers<[1], [0], [0], [1], [0, 0, 1, 1], [], []>} : vector<64x4xf32>, vector<4x32xf32>, vector<64x32xf32> -> vector<64x32xf32>
    %c0_3 = arith.constant 0 : index
    %c0_4 = arith.constant 0 : index
    %3 = vector.load %arg3[%c0_3, %c0_4] : memref<1x32xf32, #tpu.memory_space<vmem>>, vector<1x32xf32>
    %4 = vector.broadcast %3 : vector<1x32xf32> to vector<64x32xf32>
    %5 = arith.addf %2, %4 : vector<64x32xf32>
    %c0_5 = arith.constant 0 : index
    %c0_6 = arith.constant 0 : index
    %6 = vector.load %arg4[%c0_5, %c0_6] : memref<16x64xf32, #tpu.memory_space<vmem>>, vector<16x64xf32>
    %c0_7 = arith.constant 0 : index
    %c0_8 = arith.constant 0 : index
    %7 = vector.load %arg5[%c0_7, %c0_8] : memref<16x64xf32, #tpu.memory_space<vmem>>, vector<16x64xf32>
    %c0_9 = arith.constant 0 : index
    %c0_10 = arith.constant 0 : index
    %8 = vector.load %arg6[%c0_9, %c0_10] : memref<64x16xf32, #tpu.memory_space<vmem>>, vector<64x16xf32>
    %c0_11 = arith.constant 0 : index
    %c0_12 = arith.constant 0 : index
    %9 = vector.load %arg7[%c0_11, %c0_12] : memref<64x16xf32, #tpu.memory_space<vmem>>, vector<64x16xf32>
    %c0_13 = arith.constant 0 : index
    %c0_14 = arith.constant 0 : index
    %10 = vector.load %arg10[%c0_13, %c0_14] : memref<16x512xf32, #tpu.memory_space<vmem>>, vector<16x512xf32>
    %c0_15 = arith.constant 0 : index
    %c0_16 = arith.constant 0 : index
    %11 = vector.load %arg11[%c0_15, %c0_16] : memref<512x32xf32, #tpu.memory_space<vmem>>, vector<512x32xf32>
    %c0_17 = arith.constant 0 : index
    %c0_18 = arith.constant 0 : index
    %12 = vector.load %arg12[%c0_17, %c0_18] : memref<512x32xf32, #tpu.memory_space<vmem>>, vector<512x32xf32>
    %cst_19 = arith.constant dense<0.000000e+00> : vector<16x32xf32>
    %13 = tpu.matmul %6, %5, %cst_19 {dimension_numbers = #tpu.dot_dimension_numbers<[1], [0], [0], [1], [0, 0, 1, 1], [], []>} : vector<16x64xf32>, vector<64x32xf32>, vector<16x32xf32> -> vector<16x32xf32>
    %cst_20 = arith.constant dense<0.000000e+00> : vector<16x32xf32>
    %14 = tpu.matmul %7, %5, %cst_20 {dimension_numbers = #tpu.dot_dimension_numbers<[1], [0], [0], [1], [0, 0, 1, 1], [], []>} : vector<16x64xf32>, vector<64x32xf32>, vector<16x32xf32> -> vector<16x32xf32>
    %c0_21 = arith.constant 0 : index
    %c0_22 = arith.constant 0 : index
    %c0_23 = arith.constant 0 : index
    %15 = vector.load %arg8[%c0_21, %c0_22, %c0_23] : memref<2x32x512xf32, #tpu.memory_space<vmem>>, vector<1x32x512xf32>
    %16 = vector.shape_cast %15 : vector<1x32x512xf32> to vector<32x512xf32>
    %cst_24 = arith.constant dense<0.000000e+00> : vector<16x512xf32>
    %17 = tpu.matmul %13, %16, %cst_24 {dimension_numbers = #tpu.dot_dimension_numbers<[1], [0], [0], [1], [0, 0, 1, 1], [], []>} : vector<16x32xf32>, vector<32x512xf32>, vector<16x512xf32> -> vector<16x512xf32>
    %c0_25 = arith.constant 0 : index
    %c0_26 = arith.constant 0 : index
    %c0_27 = arith.constant 0 : index
    %18 = vector.load %arg9[%c0_25, %c0_26, %c0_27] : memref<2x32x512xf32, #tpu.memory_space<vmem>>, vector<1x32x512xf32>
    %19 = vector.shape_cast %18 : vector<1x32x512xf32> to vector<32x512xf32>
    %cst_28 = arith.constant dense<0.000000e+00> : vector<16x512xf32>
    %20 = tpu.matmul %14, %19, %cst_28 {dimension_numbers = #tpu.dot_dimension_numbers<[1], [0], [0], [1], [0, 0, 1, 1], [], []>} : vector<16x32xf32>, vector<32x512xf32>, vector<16x512xf32> -> vector<16x512xf32>
    %21 = arith.addf %17, %20 : vector<16x512xf32>
    %22 = arith.mulf %21, %10 : vector<16x512xf32>
    %cst_29 = arith.constant dense<0.000000e+00> : vector<16x32xf32>
    %23 = tpu.matmul %22, %11, %cst_29 {dimension_numbers = #tpu.dot_dimension_numbers<[1], [0], [0], [1], [0, 0, 1, 1], [], []>} : vector<16x512xf32>, vector<512x32xf32>, vector<16x32xf32> -> vector<16x32xf32>
    %cst_30 = arith.constant dense<0.000000e+00> : vector<16x32xf32>
    %24 = tpu.matmul %22, %12, %cst_30 {dimension_numbers = #tpu.dot_dimension_numbers<[1], [0], [0], [1], [0, 0, 1, 1], [], []>} : vector<16x512xf32>, vector<512x32xf32>, vector<16x32xf32> -> vector<16x32xf32>
    %cst_31 = arith.constant dense<0.000000e+00> : vector<64x32xf32>
    %25 = tpu.matmul %8, %23, %cst_31 {dimension_numbers = #tpu.dot_dimension_numbers<[1], [0], [0], [1], [0, 0, 1, 1], [], []>} : vector<64x16xf32>, vector<16x32xf32>, vector<64x32xf32> -> vector<64x32xf32>
    %cst_32 = arith.constant dense<0.000000e+00> : vector<64x32xf32>
    %26 = tpu.matmul %9, %24, %cst_32 {dimension_numbers = #tpu.dot_dimension_numbers<[1], [0], [0], [1], [0, 0, 1, 1], [], []>} : vector<64x16xf32>, vector<16x32xf32>, vector<64x32xf32> -> vector<64x32xf32>
    %27 = arith.addf %25, %26 : vector<64x32xf32>
    %c0_33 = arith.constant 0 : index
    %c0_34 = arith.constant 0 : index
    %c0_35 = arith.constant 0 : index
    %28 = vector.load %arg13[%c0_33, %c0_34, %c0_35] : memref<2x32x32xf32, #tpu.memory_space<vmem>>, vector<1x32x32xf32>
    %29 = vector.shape_cast %28 : vector<1x32x32xf32> to vector<32x32xf32>
    %cst_36 = arith.constant dense<0.000000e+00> : vector<64x32xf32>
    %30 = tpu.matmul %5, %29, %cst_36 {dimension_numbers = #tpu.dot_dimension_numbers<[1], [0], [0], [1], [0, 0, 1, 1], [], []>} : vector<64x32xf32>, vector<32x32xf32>, vector<64x32xf32> -> vector<64x32xf32>
    %c0_37 = arith.constant 0 : index
    %c0_38 = arith.constant 0 : index
    %c0_39 = arith.constant 0 : index
    %31 = vector.load %arg14[%c0_37, %c0_38, %c0_39] : memref<2x1x32xf32, #tpu.memory_space<vmem>>, vector<1x1x32xf32>
    %32 = vector.shape_cast %31 : vector<1x1x32xf32> to vector<1x32xf32>
    %33 = vector.broadcast %32 : vector<1x32xf32> to vector<64x32xf32>
    %34 = arith.addf %30, %33 : vector<64x32xf32>
    %35 = arith.addf %27, %34 : vector<64x32xf32>
    %cst_40 = arith.constant 0.000000e+00 : f32
    %36 = vector.broadcast %cst_40 : f32 to vector<64x32xf32>
    %37 = arith.maximumf %35, %36 : vector<64x32xf32>
    %cst_41 = arith.constant dense<0.000000e+00> : vector<16x32xf32>
    %38 = tpu.matmul %6, %37, %cst_41 {dimension_numbers = #tpu.dot_dimension_numbers<[1], [0], [0], [1], [0, 0, 1, 1], [], []>} : vector<16x64xf32>, vector<64x32xf32>, vector<16x32xf32> -> vector<16x32xf32>
    %cst_42 = arith.constant dense<0.000000e+00> : vector<16x32xf32>
    %39 = tpu.matmul %7, %37, %cst_42 {dimension_numbers = #tpu.dot_dimension_numbers<[1], [0], [0], [1], [0, 0, 1, 1], [], []>} : vector<16x64xf32>, vector<64x32xf32>, vector<16x32xf32> -> vector<16x32xf32>
    %c1 = arith.constant 1 : index
    %c0_43 = arith.constant 0 : index
    %c0_44 = arith.constant 0 : index
    %40 = vector.load %arg8[%c1, %c0_43, %c0_44] : memref<2x32x512xf32, #tpu.memory_space<vmem>>, vector<1x32x512xf32>
    %41 = vector.shape_cast %40 : vector<1x32x512xf32> to vector<32x512xf32>
    %cst_45 = arith.constant dense<0.000000e+00> : vector<16x512xf32>
    %42 = tpu.matmul %38, %41, %cst_45 {dimension_numbers = #tpu.dot_dimension_numbers<[1], [0], [0], [1], [0, 0, 1, 1], [], []>} : vector<16x32xf32>, vector<32x512xf32>, vector<16x512xf32> -> vector<16x512xf32>
    %c1_46 = arith.constant 1 : index
    %c0_47 = arith.constant 0 : index
    %c0_48 = arith.constant 0 : index
    %43 = vector.load %arg9[%c1_46, %c0_47, %c0_48] : memref<2x32x512xf32, #tpu.memory_space<vmem>>, vector<1x32x512xf32>
    %44 = vector.shape_cast %43 : vector<1x32x512xf32> to vector<32x512xf32>
    %cst_49 = arith.constant dense<0.000000e+00> : vector<16x512xf32>
    %45 = tpu.matmul %39, %44, %cst_49 {dimension_numbers = #tpu.dot_dimension_numbers<[1], [0], [0], [1], [0, 0, 1, 1], [], []>} : vector<16x32xf32>, vector<32x512xf32>, vector<16x512xf32> -> vector<16x512xf32>
    %46 = arith.addf %42, %45 : vector<16x512xf32>
    %47 = arith.mulf %46, %10 : vector<16x512xf32>
    %cst_50 = arith.constant dense<0.000000e+00> : vector<16x32xf32>
    %48 = tpu.matmul %47, %11, %cst_50 {dimension_numbers = #tpu.dot_dimension_numbers<[1], [0], [0], [1], [0, 0, 1, 1], [], []>} : vector<16x512xf32>, vector<512x32xf32>, vector<16x32xf32> -> vector<16x32xf32>
    %cst_51 = arith.constant dense<0.000000e+00> : vector<16x32xf32>
    %49 = tpu.matmul %47, %12, %cst_51 {dimension_numbers = #tpu.dot_dimension_numbers<[1], [0], [0], [1], [0, 0, 1, 1], [], []>} : vector<16x512xf32>, vector<512x32xf32>, vector<16x32xf32> -> vector<16x32xf32>
    %cst_52 = arith.constant dense<0.000000e+00> : vector<64x32xf32>
    %50 = tpu.matmul %8, %48, %cst_52 {dimension_numbers = #tpu.dot_dimension_numbers<[1], [0], [0], [1], [0, 0, 1, 1], [], []>} : vector<64x16xf32>, vector<16x32xf32>, vector<64x32xf32> -> vector<64x32xf32>
    %cst_53 = arith.constant dense<0.000000e+00> : vector<64x32xf32>
    %51 = tpu.matmul %9, %49, %cst_53 {dimension_numbers = #tpu.dot_dimension_numbers<[1], [0], [0], [1], [0, 0, 1, 1], [], []>} : vector<64x16xf32>, vector<16x32xf32>, vector<64x32xf32> -> vector<64x32xf32>
    %52 = arith.addf %50, %51 : vector<64x32xf32>
    %c1_54 = arith.constant 1 : index
    %c0_55 = arith.constant 0 : index
    %c0_56 = arith.constant 0 : index
    %53 = vector.load %arg13[%c1_54, %c0_55, %c0_56] : memref<2x32x32xf32, #tpu.memory_space<vmem>>, vector<1x32x32xf32>
    %54 = vector.shape_cast %53 : vector<1x32x32xf32> to vector<32x32xf32>
    %cst_57 = arith.constant dense<0.000000e+00> : vector<64x32xf32>
    %55 = tpu.matmul %37, %54, %cst_57 {dimension_numbers = #tpu.dot_dimension_numbers<[1], [0], [0], [1], [0, 0, 1, 1], [], []>} : vector<64x32xf32>, vector<32x32xf32>, vector<64x32xf32> -> vector<64x32xf32>
    %c1_58 = arith.constant 1 : index
    %c0_59 = arith.constant 0 : index
    %c0_60 = arith.constant 0 : index
    %56 = vector.load %arg14[%c1_58, %c0_59, %c0_60] : memref<2x1x32xf32, #tpu.memory_space<vmem>>, vector<1x1x32xf32>
    %57 = vector.shape_cast %56 : vector<1x1x32xf32> to vector<1x32xf32>
    %58 = vector.broadcast %57 : vector<1x32xf32> to vector<64x32xf32>
    %59 = arith.addf %55, %58 : vector<64x32xf32>
    %60 = arith.addf %52, %59 : vector<64x32xf32>
    %cst_61 = arith.constant 0.000000e+00 : f32
    %61 = vector.broadcast %cst_61 : f32 to vector<64x32xf32>
    %62 = arith.maximumf %60, %61 : vector<64x32xf32>
    %c0_62 = arith.constant 0 : index
    %c0_63 = arith.constant 0 : index
    %63 = vector.load %arg15[%c0_62, %c0_63] : memref<32x64xf32, #tpu.memory_space<vmem>>, vector<32x64xf32>
    %cst_64 = arith.constant dense<0.000000e+00> : vector<64x64xf32>
    %64 = tpu.matmul %62, %63, %cst_64 {dimension_numbers = #tpu.dot_dimension_numbers<[1], [0], [0], [1], [0, 0, 1, 1], [], []>} : vector<64x32xf32>, vector<32x64xf32>, vector<64x64xf32> -> vector<64x64xf32>
    %c0_65 = arith.constant 0 : index
    %c0_66 = arith.constant 0 : index
    %65 = vector.load %arg16[%c0_65, %c0_66] : memref<1x64xf32, #tpu.memory_space<vmem>>, vector<1x64xf32>
    %66 = vector.broadcast %65 : vector<1x64xf32> to vector<64x64xf32>
    %67 = arith.addf %64, %66 : vector<64x64xf32>
    %cst_67 = arith.constant 0.000000e+00 : f32
    %68 = vector.broadcast %cst_67 : f32 to vector<64x64xf32>
    %69 = arith.maximumf %67, %68 : vector<64x64xf32>
    %c0_68 = arith.constant 0 : index
    %c0_69 = arith.constant 0 : index
    %70 = vector.load %arg17[%c0_68, %c0_69] : memref<64x1xf32, #tpu.memory_space<vmem>>, vector<64x1xf32>
    %cst_70 = arith.constant dense<0.000000e+00> : vector<64x1xf32>
    %71 = tpu.matmul %69, %70, %cst_70 {dimension_numbers = #tpu.dot_dimension_numbers<[1], [0], [0], [1], [0, 0, 1, 1], [], []>} : vector<64x64xf32>, vector<64x1xf32>, vector<64x1xf32> -> vector<64x1xf32>
    %c0_71 = arith.constant 0 : index
    %c0_72 = arith.constant 0 : index
    %72 = vector.load %arg18[%c0_71, %c0_72] : memref<1x1xf32, #tpu.memory_space<vmem>>, vector<1x1xf32>
    %73 = vector.broadcast %72 : vector<1x1xf32> to vector<64x1xf32>
    %74 = arith.addf %71, %73 : vector<64x1xf32>
    %c0_73 = arith.constant 0 : index
    %c0_74 = arith.constant 0 : index
    %75 = vector.load %arg19[%c0_73, %c0_74] : memref<64x1xf32, #tpu.memory_space<vmem>>, vector<64x1xf32>
    tpu.vector_store %arg19[%c0_73, %c0_74], %74 {strides = array<i32>} : memref<64x1xf32, #tpu.memory_space<vmem>>, vector<64x1xf32>,
    return
  }
  func.func @transform_0(%arg0: i32) -> (i32, i32) {
    %c0_i32 = arith.constant 0 : i32
    %c0_i32_0 = arith.constant 0 : i32
    return %arg0, %c0_i32 : i32, i32
  }
  func.func @transform_1(%arg0: i32) -> (i32, i32) {
    %c0_i32 = arith.constant 0 : i32
    %c0_i32_0 = arith.constant 0 : i32
    %c0_i32_1 = arith.constant 0 : i32
    return %c0_i32, %c0_i32_0 : i32, i32
  }
  func.func @transform_2(%arg0: i32) -> (i32, i32) {
    %c0_i32 = arith.constant 0 : i32
    %c0_i32_0 = arith.constant 0 : i32
    %c0_i32_1 = arith.constant 0 : i32
    return %c0_i32, %c0_i32_0 : i32, i32
  }
  func.func @transform_3(%arg0: i32) -> (i32, i32) {
    %c0_i32 = arith.constant 0 : i32
    %c0_i32_0 = arith.constant 0 : i32
    %c0_i32_1 = arith.constant 0 : i32
    return %c0_i32, %c0_i32_0 : i32, i32
  }
  func.func @transform_4(%arg0: i32) -> (i32, i32) {
    %c0_i32 = arith.constant 0 : i32
    %c0_i32_0 = arith.constant 0 : i32
    %c0_i32_1 = arith.constant 0 : i32
    return %c0_i32, %c0_i32_0 : i32, i32
  }
  func.func @transform_5(%arg0: i32) -> (i32, i32) {
    %c0_i32 = arith.constant 0 : i32
    %c0_i32_0 = arith.constant 0 : i32
    %c0_i32_1 = arith.constant 0 : i32
    return %c0_i32, %c0_i32_0 : i32, i32
  }
  func.func @transform_6(%arg0: i32) -> (i32, i32) {
    %c0_i32 = arith.constant 0 : i32
    %c0_i32_0 = arith.constant 0 : i32
    %c0_i32_1 = arith.constant 0 : i32
    return %c0_i32, %c0_i32_0 : i32, i32
  }
  func.func @transform_7(%arg0: i32) -> (i32, i32, i32) {
    %c0_i32 = arith.constant 0 : i32
    %c0_i32_0 = arith.constant 0 : i32
    %c0_i32_1 = arith.constant 0 : i32
    %c0_i32_2 = arith.constant 0 : i32
    return %c0_i32, %c0_i32_0, %c0_i32_1 : i32, i32, i32
  }
  func.func @transform_8(%arg0: i32) -> (i32, i32, i32) {
    %c0_i32 = arith.constant 0 : i32
    %c0_i32_0 = arith.constant 0 : i32
    %c0_i32_1 = arith.constant 0 : i32
    %c0_i32_2 = arith.constant 0 : i32
    return %c0_i32, %c0_i32_0, %c0_i32_1 : i32, i32, i32
  }
  func.func @transform_9(%arg0: i32) -> (i32, i32) {
    %c0_i32 = arith.constant 0 : i32
    %c0_i32_0 = arith.constant 0 : i32
    %c0_i32_1 = arith.constant 0 : i32
    return %c0_i32, %c0_i32_0 : i32, i32
  }
  func.func @transform_10(%arg0: i32) -> (i32, i32) {
    %c0_i32 = arith.constant 0 : i32
    %c0_i32_0 = arith.constant 0 : i32
    %c0_i32_1 = arith.constant 0 : i32
    return %c0_i32, %c0_i32_0 : i32, i32
  }
  func.func @transform_11(%arg0: i32) -> (i32, i32) {
    %c0_i32 = arith.constant 0 : i32
    %c0_i32_0 = arith.constant 0 : i32
    %c0_i32_1 = arith.constant 0 : i32
    return %c0_i32, %c0_i32_0 : i32, i32
  }
  func.func @transform_12(%arg0: i32) -> (i32, i32, i32) {
    %c0_i32 = arith.constant 0 : i32
    %c0_i32_0 = arith.constant 0 : i32
    %c0_i32_1 = arith.constant 0 : i32
    %c0_i32_2 = arith.constant 0 : i32
    return %c0_i32, %c0_i32_0, %c0_i32_1 : i32, i32, i32
  }
  func.func @transform_13(%arg0: i32) -> (i32, i32, i32) {
    %c0_i32 = arith.constant 0 : i32
    %c0_i32_0 = arith.constant 0 : i32
    %c0_i32_1 = arith.constant 0 : i32
    %c0_i32_2 = arith.constant 0 : i32
    return %c0_i32, %c0_i32_0, %c0_i32_1 : i32, i32, i32
  }
  func.func @transform_14(%arg0: i32) -> (i32, i32) {
    %c0_i32 = arith.constant 0 : i32
    %c0_i32_0 = arith.constant 0 : i32
    %c0_i32_1 = arith.constant 0 : i32
    return %c0_i32, %c0_i32_0 : i32, i32
  }
  func.func @transform_15(%arg0: i32) -> (i32, i32) {
    %c0_i32 = arith.constant 0 : i32
    %c0_i32_0 = arith.constant 0 : i32
    %c0_i32_1 = arith.constant 0 : i32
    return %c0_i32, %c0_i32_0 : i32, i32
  }
  func.func @transform_16(%arg0: i32) -> (i32, i32) {
    %c0_i32 = arith.constant 0 : i32
    %c0_i32_0 = arith.constant 0 : i32
    %c0_i32_1 = arith.constant 0 : i32
    return %c0_i32, %c0_i32_0 : i32, i32
  }
  func.func @transform_17(%arg0: i32) -> (i32, i32) {
    %c0_i32 = arith.constant 0 : i32
    %c0_i32_0 = arith.constant 0 : i32
    %c0_i32_1 = arith.constant 0 : i32
    return %c0_i32, %c0_i32_0 : i32, i32
  }
  func.func @transform_18(%arg0: i32) -> (i32, i32) {
    %c0_i32 = arith.constant 0 : i32
    %c0_i32_0 = arith.constant 0 : i32
    return %arg0, %c0_i32 : i32, i32
  }
}

</mosaic_0001>

<llo_original>
// kernel: tpu_custom_call.1
$region0: #{tpu_custom_call.1}
  #allocation0 [shape = 'u32[]', space=smem, size = 0x4, offset = 0x4, fixed_abs, tag = 'smem constant byte address 0x4 - core index']
  #allocation1 [shape = 'u32[144,128]{1,0:T(1,128)}', space=vmem, size = 0x12000, scoped, tag = 'internal scratch']
  #allocation2 [shape = 'f32[1,1]{1,0:T(1,128)S(1)}', space=vmem, size = 0x200, scoped, tag = 'scoped memory for tpu_custom_call.1']
  %s0 = inlined_call_operand.vmem [shape: f32[64,4], index: 0, kind: input, shape index: {}]
  %s1 = inlined_call_operand.vmem [shape: f32[4,32], index: 1, kind: input, shape index: {}]
  %s2 = inlined_call_operand.vmem [shape: f32[1,32], index: 2, kind: input, shape index: {}]
  %s3 = inlined_call_operand.vmem [shape: f32[16,64], index: 3, kind: input, shape index: {}]
  %s4 = inlined_call_operand.vmem [shape: f32[16,64], index: 4, kind: input, shape index: {}]
  %s5 = inlined_call_operand.vmem [shape: f32[64,16], index: 5, kind: input, shape index: {}]
  %s6 = inlined_call_operand.vmem [shape: f32[64,16], index: 6, kind: input, shape index: {}]
  %s7 = inlined_call_operand.vmem [shape: f32[2,32,512], index: 7, kind: input, shape index: {}]
  %s8 = inlined_call_operand.vmem [shape: f32[2,32,512], index: 8, kind: input, shape index: {}]
  %s9 = inlined_call_operand.vmem [shape: f32[16,512], index: 9, kind: input, shape index: {}]
  %s10 = inlined_call_operand.vmem [shape: f32[512,32], index: 10, kind: input, shape index: {}]
  %s11 = inlined_call_operand.vmem [shape: f32[512,32], index: 11, kind: input, shape index: {}]
  %s12 = inlined_call_operand.vmem [shape: f32[2,32,32], index: 12, kind: input, shape index: {}]
  %s13 = inlined_call_operand.vmem [shape: f32[2,1,32], index: 13, kind: input, shape index: {}]
  %s14 = inlined_call_operand.vmem [shape: f32[32,64], index: 14, kind: input, shape index: {}]
  %s15 = inlined_call_operand.vmem [shape: f32[1,64], index: 15, kind: input, shape index: {}]
  %s16 = inlined_call_operand.vmem [shape: f32[64,1], index: 16, kind: input, shape index: {}]
  %s17 = inlined_call_operand.<no memory space> [shape: f32[1,1], index: 17, kind: input, shape index: {}]
  %s18 = inlined_call_operand.vmem [shape: f32[64,1], index: 18, kind: output, shape index: {}]
  %s19 = sld [smem:[#allocation0]]
  $region82: #{tpu_custom_call.1} parent=0
    _
  %s21 = ssub.s32 1, %s19
  %s22 = scalar_select 0, %s21, %s19
  %v23 = vstv %s17
  %24 = vst [vmem:[#allocation2] sm:$0x1] %v23
  // Predicated region
  $region2: #{tpu_custom_call.1} parent=0 // pred_check
    _
  $region3: #{tpu_custom_call.1} parent=0 // pred_check_branch
    %26 = sbr.rel (0) target = $region5
  $region4: #{tpu_custom_call.1} parent=0 // pred_region
    _
  $region5: #{tpu_custom_call.1} parent=0 // pred_fallthru
    _
  // Predicated region
  $region6: #{tpu_custom_call.1} parent=0 // pred_check
    _
  $region7: #{tpu_custom_call.1} parent=0 // pred_check_branch
    %28 = sbr.rel (0) target = $region9
  $region8: #{tpu_custom_call.1} parent=0 // pred_region
    _
  $region9: #{tpu_custom_call.1} parent=0 // pred_fallthru
    _
  // Predicated region
  $region10: #{tpu_custom_call.1} parent=0 // pred_check
    _
  $region11: #{tpu_custom_call.1} parent=0 // pred_check_branch
    %30 = sbr.rel (0) target = $region13
  $region12: #{tpu_custom_call.1} parent=0 // pred_region
    _
  $region13: #{tpu_custom_call.1} parent=0 // pred_fallthru
    _
  // Predicated region
  $region14: #{tpu_custom_call.1} parent=0 // pred_check
    _
  $region15: #{tpu_custom_call.1} parent=0 // pred_check_branch
    %32 = sbr.rel (0) target = $region17
  $region16: #{tpu_custom_call.1} parent=0 // pred_region
    _
  $region17: #{tpu_custom_call.1} parent=0 // pred_fallthru
    _
  // Predicated region
  $region18: #{tpu_custom_call.1} parent=0 // pred_check
    _
  $region19: #{tpu_custom_call.1} parent=0 // pred_check_branch
    %34 = sbr.rel (0) target = $region21
  $region20: #{tpu_custom_call.1} parent=0 // pred_region
    _
  $region21: #{tpu_custom_call.1} parent=0 // pred_fallthru
    _
  // Predicated region
  $region22: #{tpu_custom_call.1} parent=0 // pred_check
    _
  $region23: #{tpu_custom_call.1} parent=0 // pred_check_branch
    %36 = sbr.rel (0) target = $region25
  $region24: #{tpu_custom_call.1} parent=0 // pred_region
    _
  $region25: #{tpu_custom_call.1} parent=0 // pred_fallthru
    _
  // Predicated region
  $region26: #{tpu_custom_call.1} parent=0 // pred_check
    _
  $region27: #{tpu_custom_call.1} parent=0 // pred_check_branch
    %38 = sbr.rel (0) target = $region29
  $region28: #{tpu_custom_call.1} parent=0 // pred_region
    _
  $region29: #{tpu_custom_call.1} parent=0 // pred_fallthru
    _
  // Predicated region
  $region30: #{tpu_custom_call.1} parent=0 // pred_check
    _
  $region31: #{tpu_custom_call.1} parent=0 // pred_check_branch
    %40 = sbr.rel (0) target = $region33
  $region32: #{tpu_custom_call.1} parent=0 // pred_region
    _
  $region33: #{tpu_custom_call.1} parent=0 // pred_fallthru
    _
  // Predicated region
  $region34: #{tpu_custom_call.1} parent=0 // pred_check
    _
  $region35: #{tpu_custom_call.1} parent=0 // pred_check_branch
    %42 = sbr.rel (0) target = $region37
  $region36: #{tpu_custom_call.1} parent=0 // pred_region
    _
  $region37: #{tpu_custom_call.1} parent=0 // pred_fallthru
    _
  // Predicated region
  $region38: #{tpu_custom_call.1} parent=0 // pred_check
    _
  $region39: #{tpu_custom_call.1} parent=0 // pred_check_branch
    %44 = sbr.rel (0) target = $region41
  $region40: #{tpu_custom_call.1} parent=0 // pred_region
    _
  $region41: #{tpu_custom_call.1} parent=0 // pred_fallthru
    _
  // Predicated region
  $region42: #{tpu_custom_call.1} parent=0 // pred_check
    _
  $region43: #{tpu_custom_call.1} parent=0 // pred_check_branch
    %46 = sbr.rel (0) target = $region45
  $region44: #{tpu_custom_call.1} parent=0 // pred_region
    _
  $region45: #{tpu_custom_call.1} parent=0 // pred_fallthru
    _
  // Predicated region
  $region46: #{tpu_custom_call.1} parent=0 // pred_check
    _
  $region47: #{tpu_custom_call.1} parent=0 // pred_check_branch
    %48 = sbr.rel (0) target = $region49
  $region48: #{tpu_custom_call.1} parent=0 // pred_region
    _
  $region49: #{tpu_custom_call.1} parent=0 // pred_fallthru
    _
  // Predicated region
  $region50: #{tpu_custom_call.1} parent=0 // pred_check
    _
  $region51: #{tpu_custom_call.1} parent=0 // pred_check_branch
    %50 = sbr.rel (0) target = $region53
  $region52: #{tpu_custom_call.1} parent=0 // pred_region
    _
  $region53: #{tpu_custom_call.1} parent=0 // pred_fallthru
    _
  // Predicated region
  $region54: #{tpu_custom_call.1} parent=0 // pred_check
    _
  $region55: #{tpu_custom_call.1} parent=0 // pred_check_branch
    %52 = sbr.rel (0) target = $region57
  $region56: #{tpu_custom_call.1} parent=0 // pred_region
    _
  $region57: #{tpu_custom_call.1} parent=0 // pred_fallthru
    _
  // Predicated region
  $region58: #{tpu_custom_call.1} parent=0 // pred_check
    _
  $region59: #{tpu_custom_call.1} parent=0 // pred_check_branch
    %54 = sbr.rel (0) target = $region61
  $region60: #{tpu_custom_call.1} parent=0 // pred_region
    _
  $region61: #{tpu_custom_call.1} parent=0 // pred_fallthru
    _
  // Predicated region
  $region62: #{tpu_custom_call.1} parent=0 // pred_check
    _
  $region63: #{tpu_custom_call.1} parent=0 // pred_check_branch
    %56 = sbr.rel (0) target = $region65
  $region64: #{tpu_custom_call.1} parent=0 // pred_region
    _
  $region65: #{tpu_custom_call.1} parent=0 // pred_fallthru
    _
  // Predicated region
  $region66: #{tpu_custom_call.1} parent=0 // pred_check
    _
  $region67: #{tpu_custom_call.1} parent=0 // pred_check_branch
    %58 = sbr.rel (0) target = $region69
  $region68: #{tpu_custom_call.1} parent=0 // pred_region
    _
  $region69: #{tpu_custom_call.1} parent=0 // pred_fallthru
    _
  // Predicated region
  $region70: #{tpu_custom_call.1} parent=0 // pred_check
    _
  $region71: #{tpu_custom_call.1} parent=0 // pred_check_branch
    %60 = sbr.rel (0) target = $region73
  $region72: #{tpu_custom_call.1} parent=0 // pred_region
    _
  $region73: #{tpu_custom_call.1} parent=0 // pred_fallthru
    _
  %v61 = vld [vmem:[%s0] sm:$0xff]
  %v62 = vld [vmem:[%s0 + $0x8] sm:$0xff]
  %v63 = vld [vmem:[%s0 + $0x10] sm:$0xff]
  %v64 = vld [vmem:[%s0 + $0x18] sm:$0xff]
  %v65 = vld [vmem:[%s0 + $0x20] sm:$0xff]
  %v66 = vld [vmem:[%s0 + $0x28] sm:$0xff]
  %v67 = vld [vmem:[%s0 + $0x30] sm:$0xff]
  %v68 = vld [vmem:[%s0 + $0x38] sm:$0xff]
  %v69 = vld [vmem:[%s1] sm:$0xf]
  %v70 = vld [vmem:[%s2] sm:$0x1]
  %v72 = vlaneseq
  %v73 = vshrl.u32 %v72, 7
  %v74 = vsub.s32 0, %v73
  %v75 = vrot.slane %v70, %v74
  %vm77 = vcmask 31744
  %v79 = vsel %vm77, %v61, 0
  %v82 = vsel %vm77, %v62, 0
  %v85 = vsel %vm77, %v63, 0
  %v88 = vsel %vm77, %v64, 0
  %v91 = vsel %vm77, %v65, 0
  %v94 = vsel %vm77, %v66, 0
  %v97 = vsel %vm77, %v67, 0
  %v100 = vsel %vm77, %v68, 0
  %vm102 = vcmask 1043456
  %v104 = vsel %vm102, %v69, 0
  %106 = vmatprep.subr.mxu0 0.0
  %107 = vmatpush1.msra.mxu0 0.0
  %108 = vmatprep.subr.mxu0 0.0
  %109 = vmatpush1.msra.mxu0 0.0
  %110 = vmatprep.subr.mxu0 0.0
  %111 = vmatpush1.msra.mxu0 0.0
  %112 = vmatprep.subr.mxu0 0.0
  %113 = vmatpush1.msra.mxu0 0.0
  %114 = vmatprep.subr.mxu0 0.0
  %115 = vmatpush1.msra.mxu0 0.0
  %116 = vmatprep.subr.mxu0 0.0
  %117 = vmatpush1.msra.mxu0 0.0
  %118 = vmatprep.subr.mxu0 0.0
  %119 = vmatpush1.msra.mxu0 0.0
  %120 = vmatprep.subr.mxu0 0.0
  %121 = vmatpush1.msra.mxu0 0.0
  %122 = vmatprep.subr.mxu0 0.0
  %123 = vmatpush1.msra.mxu0 0.0
  %124 = vmatprep.subr.mxu0 0.0
  %125 = vmatpush1.msra.mxu0 0.0
  %126 = vmatprep.subr.mxu0 0.0
  %127 = vmatpush1.msra.mxu0 0.0
  %128 = vmatprep.subr.mxu0 0.0
  %129 = vmatpush1.msra.mxu0 0.0
  %130 = vmatprep.subr.mxu0 0.0
  %131 = vmatpush1.msra.mxu0 0.0
  %132 = vmatprep.subr.mxu0 0.0
  %133 = vmatpush1.msra.mxu0 0.0
  %134 = vmatprep.subr.mxu0 0.0
  %135 = vmatpush1.msra.mxu0 0.0
  %136 = vmatprep.subr.mxu0 0.0
  %137 = vmatpush1.msra.mxu0 %v104
  %138 = vmatprep.subr.mxu0 0.0
  %139 = vmatpush2.msra.mxu0 0.0
  %140 = vmatprep.subr.mxu0 0.0
  %141 = vmatpush2.msra.mxu0 0.0
  %142 = vmatprep.subr.mxu0 0.0
  %143 = vmatpush2.msra.mxu0 0.0
  %144 = vmatprep.subr.mxu0 0.0
  %145 = vmatpush2.msra.mxu0 0.0
  %146 = vmatprep.subr.mxu0 0.0
  %147 = vmatpush2.msra.mxu0 0.0
  %148 = vmatprep.subr.mxu0 0.0
  %149 = vmatpush2.msra.mxu0 0.0
  %150 = vmatprep.subr.mxu0 0.0
  %151 = vmatpush2.msra.mxu0 0.0
  %152 = vmatprep.subr.mxu0 0.0
  %153 = vmatpush2.msra.mxu0 0.0
  %154 = vmatprep.subr.mxu0 0.0
  %155 = vmatpush2.msra.mxu0 0.0
  %156 = vmatprep.subr.mxu0 0.0
  %157 = vmatpush2.msra.mxu0 0.0
  %158 = vmatprep.subr.mxu0 0.0
  %159 = vmatpush2.msra.mxu0 0.0
  %160 = vmatprep.subr.mxu0 0.0
  %161 = vmatpush2.msra.mxu0 0.0
  %162 = vmatprep.subr.mxu0 0.0
  %163 = vmatpush2.msra.mxu0 0.0
  %164 = vmatprep.subr.mxu0 0.0
  %165 = vmatpush2.msra.mxu0 0.0
  %166 = vmatprep.subr.mxu0 0.0
  %167 = vmatpush2.msra.mxu0 0.0
  %168 = vmatprep.subr.mxu0 0.0
  %169 = vmatpush2.msra.mxu0 0.0
  %170 = vmatprep.mubr.f32.mxu0 0.0
  %171 = vmatmul.mubr.f32.gmra.mxu0 %v79
  %v172 = vpop.f32.mrf.mxu0
  %v173 = vadd.f32 %v75, %v172
  %v174 = vpop.f32.mrf.mxu0
  %175 = vmatprep.mubr.f32.mxu0 0.0
  %176 = vmatmul.mubr.f32.gmra.mxu0 %v82
  %v177 = vpop.f32.mrf.mxu0
  %v178 = vadd.f32 %v75, %v177
  %v179 = vpop.f32.mrf.mxu0
  %180 = vmatprep.mubr.f32.mxu0 0.0
  %181 = vmatmul.mubr.f32.gmra.mxu0 %v85
  %v182 = vpop.f32.mrf.mxu0
  %v183 = vadd.f32 %v75, %v182
  %v184 = vpop.f32.mrf.mxu0
  %185 = vmatprep.mubr.f32.mxu0 0.0
  %186 = vmatmul.mubr.f32.gmra.mxu0 %v88
  %v187 = vpop.f32.mrf.mxu0
  %v188 = vadd.f32 %v75, %v187
  %v189 = vpop.f32.mrf.mxu0
  %190 = vmatprep.mubr.f32.mxu0 0.0
  %191 = vmatmul.mubr.f32.gmra.mxu0 %v91
  %v192 = vpop.f32.mrf.mxu0
  %v193 = vadd.f32 %v75, %v192
  %v194 = vpop.f32.mrf.mxu0
  %195 = vmatprep.mubr.f32.mxu0 0.0
  %196 = vmatmul.mubr.f32.gmra.mxu0 %v94
  %v197 = vpop.f32.mrf.mxu0
  %v198 = vadd.f32 %v75, %v197
  %v199 = vpop.f32.mrf.mxu0
  %200 = vmatprep.mubr.f32.mxu0 0.0
  %201 = vmatmul.mubr.f32.gmra.mxu0 %v97
  %v202 = vpop.f32.mrf.mxu0
  %v203 = vadd.f32 %v75, %v202
  %v204 = vpop.f32.mrf.mxu0
  %205 = vmatprep.mubr.f32.mxu0 0.0
  %206 = vmatmul.mubr.f32.gmra.mxu0 %v100
  %v207 = vpop.f32.mrf.mxu0
  %v208 = vadd.f32 %v75, %v207
  %v209 = vpop.f32.mrf.mxu0
  %210 = vdwg.mxu0
  %v211 = vld [vmem:[%s3] sm:$0xff]
  %v212 = vld [vmem:[%s3 + $0x8] sm:$0xff]
  %v213 = vld [vmem:[%s4] sm:$0xff]
  %v214 = vld [vmem:[%s4 + $0x8] sm:$0xff]
  %v215 = vld [vmem:[%s5] sm:$0xff]
  %v216 = vld [vmem:[%s5 + $0x8] sm:$0xff]
  %v217 = vld [vmem:[%s5 + $0x10] sm:$0xff]
  %v218 = vld [vmem:[%s5 + $0x18] sm:$0xff]
  %v219 = vld [vmem:[%s5 + $0x20] sm:$0xff]
  %v220 = vld [vmem:[%s5 + $0x28] sm:$0xff]
  %v221 = vld [vmem:[%s5 + $0x30] sm:$0xff]
  %v222 = vld [vmem:[%s5 + $0x38] sm:$0xff]
  %v223 = vld [vmem:[%s6] sm:$0xff]
  %v224 = vld [vmem:[%s6 + $0x8] sm:$0xff]
  %v225 = vld [vmem:[%s6 + $0x10] sm:$0xff]
  %v226 = vld [vmem:[%s6 + $0x18] sm:$0xff]
  %v227 = vld [vmem:[%s6 + $0x20] sm:$0xff]
  %v228 = vld [vmem:[%s6 + $0x28] sm:$0xff]
  %v229 = vld [vmem:[%s6 + $0x30] sm:$0xff]
  %v230 = vld [vmem:[%s6 + $0x38] sm:$0xff]
  %v231 = vld [vmem:[%s9] sm:$0xff]
  %v232 = vld [vmem:[%s9 + $0x8] sm:$0xff]
  %v233 = vld [vmem:[%s9 + $0x10] sm:$0xff]
  %v234 = vld [vmem:[%s9 + $0x18] sm:$0xff]
  %v235 = vld [vmem:[%s9 + $0x20] sm:$0xff]
  %v236 = vld [vmem:[%s9 + $0x28] sm:$0xff]
  %v237 = vld [vmem:[%s9 + $0x30] sm:$0xff]
  %v238 = vld [vmem:[%s9 + $0x38] sm:$0xff]
  %v239 = vld [vmem:[%s10] sm:$0xff]
  %v240 = vld [vmem:[%s10 + $0x8] sm:$0xff]
  %v241 = vld [vmem:[%s10 + $0x10] sm:$0xff]
  %v242 = vld [vmem:[%s10 + $0x18] sm:$0xff]
  %v243 = vld [vmem:[%s10 + $0x20] sm:$0xff]
  %v244 = vld [vmem:[%s10 + $0x28] sm:$0xff]
  %v245 = vld [vmem:[%s10 + $0x30] sm:$0xff]
  %v246 = vld [vmem:[%s10 + $0x38] sm:$0xff]
  %v247 = vld [vmem:[%s10 + $0x40] sm:$0xff]
  %v248 = vld [vmem:[%s10 + $0x48] sm:$0xff]
  %v249 = vld [vmem:[%s10 + $0x50] sm:$0xff]
  %v250 = vld [vmem:[%s10 + $0x58] sm:$0xff]
  %v251 = vld [vmem:[%s10 + $0x60] sm:$0xff]
  %v252 = vld [vmem:[%s10 + $0x68] sm:$0xff]
  %v253 = vld [vmem:[%s10 + $0x70] sm:$0xff]
  %v254 = vld [vmem:[%s10 + $0x78] sm:$0xff]
  %v255 = vld [vmem:[%s10 + $0x80] sm:$0xff]
  %v256 = vld [vmem:[%s10 + $0x88] sm:$0xff]
  %v257 = vld [vmem:[%s10 + $0x90] sm:$0xff]
  %v258 = vld [vmem:[%s10 + $0x98] sm:$0xff]
  %v259 = vld [vmem:[%s10 + $0xa0] sm:$0xff]
  %v260 = vld [vmem:[%s10 + $0xa8] sm:$0xff]
  %v261 = vld [vmem:[%s10 + $0xb0] sm:$0xff]
  %v262 = vld [vmem:[%s10 + $0xb8] sm:$0xff]
  %v263 = vld [vmem:[%s10 + $0xc0] sm:$0xff]
  %v264 = vld [vmem:[%s10 + $0xc8] sm:$0xff]
  %v265 = vld [vmem:[%s10 + $0xd0] sm:$0xff]
  %v266 = vld [vmem:[%s10 + $0xd8] sm:$0xff]
  %v267 = vld [vmem:[%s10 + $0xe0] sm:$0xff]
  %v268 = vld [vmem:[%s10 + $0xe8] sm:$0xff]
  %v269 = vld [vmem:[%s10 + $0xf0] sm:$0xff]
  %v270 = vld [vmem:[%s10 + $0xf8] sm:$0xff]
  %v271 = vld [vmem:[%s10 + $0x100] sm:$0xff]
  %v272 = vld [vmem:[%s10 + $0x108] sm:$0xff]
  %v273 = vld [vmem:[%s10 + $0x110] sm:$0xff]
  %v274 = vld [vmem:[%s10 + $0x118] sm:$0xff]
  %v275 = vld [vmem:[%s10 + $0x120] sm:$0xff]
  %v276 = vld [vmem:[%s10 + $0x128] sm:$0xff]
  %v277 = vld [vmem:[%s10 + $0x130] sm:$0xff]
  %v278 = vld [vmem:[%s10 + $0x138] sm:$0xff]
  %v279 = vld [vmem:[%s10 + $0x140] sm:$0xff]
  %v280 = vld [vmem:[%s10 + $0x148] sm:$0xff]
  %v281 = vld [vmem:[%s10 + $0x150] sm:$0xff]
  %v282 = vld [vmem:[%s10 + $0x158] sm:$0xff]
  %v283 = vld [vmem:[%s10 + $0x160] sm:$0xff]
  %v284 = vld [vmem:[%s10 + $0x168] sm:$0xff]
  %v285 = vld [vmem:[%s10 + $0x170] sm:$0xff]
  %v286 = vld [vmem:[%s10 + $0x178] sm:$0xff]
  %v287 = vld [vmem:[%s10 + $0x180] sm:$0xff]
  %v288 = vld [vmem:[%s10 + $0x188] sm:$0xff]
  %v289 = vld [vmem:[%s10 + $0x190] sm:$0xff]
  %v290 = vld [vmem:[%s10 + $0x198] sm:$0xff]
  %v291 = vld [vmem:[%s10 + $0x1a0] sm:$0xff]
  %v292 = vld [vmem:[%s10 + $0x1a8] sm:$0xff]
  %v293 = vld [vmem:[%s10 + $0x1b0] sm:$0xff]
  %v294 = vld [vmem:[%s10 + $0x1b8] sm:$0xff]
  %v295 = vld [vmem:[%s10 + $0x1c0] sm:$0xff]
  %v296 = vld [vmem:[%s10 + $0x1c8] sm:$0xff]
  %v297 = vld [vmem:[%s10 + $0x1d0] sm:$0xff]
  %v298 = vld [vmem:[%s10 + $0x1d8] sm:$0xff]
  %v299 = vld [vmem:[%s10 + $0x1e0] sm:$0xff]
  %v300 = vld [vmem:[%s10 + $0x1e8] sm:$0xff]
  %v301 = vld [vmem:[%s10 + $0x1f0] sm:$0xff]
  %v302 = vld [vmem:[%s10 + $0x1f8] sm:$0xff]
  %v303 = vld [vmem:[%s11] sm:$0xff]
  %v304 = vld [vmem:[%s11 + $0x8] sm:$0xff]
  %v305 = vld [vmem:[%s11 + $0x10] sm:$0xff]
  %v306 = vld [vmem:[%s11 + $0x18] sm:$0xff]
  %v307 = vld [vmem:[%s11 + $0x20] sm:$0xff]
  %v308 = vld [vmem:[%s11 + $0x28] sm:$0xff]
  %v309 = vld [vmem:[%s11 + $0x30] sm:$0xff]
  %v310 = vld [vmem:[%s11 + $0x38] sm:$0xff]
  %v311 = vld [vmem:[%s11 + $0x40] sm:$0xff]
  %v312 = vld [vmem:[%s11 + $0x48] sm:$0xff]
  %v313 = vld [vmem:[%s11 + $0x50] sm:$0xff]
  %v314 = vld [vmem:[%s11 + $0x58] sm:$0xff]
  %v315 = vld [vmem:[%s11 + $0x60] sm:$0xff]
  %v316 = vld [vmem:[%s11 + $0x68] sm:$0xff]
  %v317 = vld [vmem:[%s11 + $0x70] sm:$0xff]
  %v318 = vld [vmem:[%s11 + $0x78] sm:$0xff]
  %v319 = vld [vmem:[%s11 + $0x80] sm:$0xff]
  %v320 = vld [vmem:[%s11 + $0x88] sm:$0xff]
  %v321 = vld [vmem:[%s11 + $0x90] sm:$0xff]
  %v322 = vld [vmem:[%s11 + $0x98] sm:$0xff]
  %v323 = vld [vmem:[%s11 + $0xa0] sm:$0xff]
  %v324 = vld [vmem:[%s11 + $0xa8] sm:$0xff]
  %v325 = vld [vmem:[%s11 + $0xb0] sm:$0xff]
  %v326 = vld [vmem:[%s11 + $0xb8] sm:$0xff]
  %v327 = vld [vmem:[%s11 + $0xc0] sm:$0xff]
  %v328 = vld [vmem:[%s11 + $0xc8] sm:$0xff]
  %v329 = vld [vmem:[%s11 + $0xd0] sm:$0xff]
  %v330 = vld [vmem:[%s11 + $0xd8] sm:$0xff]
  %v331 = vld [vmem:[%s11 + $0xe0] sm:$0xff]
  %v332 = vld [vmem:[%s11 + $0xe8] sm:$0xff]
  %v333 = vld [vmem:[%s11 + $0xf0] sm:$0xff]
  %v334 = vld [vmem:[%s11 + $0xf8] sm:$0xff]
  %v335 = vld [vmem:[%s11 + $0x100] sm:$0xff]
  %v336 = vld [vmem:[%s11 + $0x108] sm:$0xff]
  %v337 = vld [vmem:[%s11 + $0x110] sm:$0xff]
  %v338 = vld [vmem:[%s11 + $0x118] sm:$0xff]
  %v339 = vld [vmem:[%s11 + $0x120] sm:$0xff]
  %v340 = vld [vmem:[%s11 + $0x128] sm:$0xff]
  %v341 = vld [vmem:[%s11 + $0x130] sm:$0xff]
  %v342 = vld [vmem:[%s11 + $0x138] sm:$0xff]
  %v343 = vld [vmem:[%s11 + $0x140] sm:$0xff]
  %v344 = vld [vmem:[%s11 + $0x148] sm:$0xff]
  %v345 = vld [vmem:[%s11 + $0x150] sm:$0xff]
  %v346 = vld [vmem:[%s11 + $0x158] sm:$0xff]
  %v347 = vld [vmem:[%s11 + $0x160] sm:$0xff]
  %v348 = vld [vmem:[%s11 + $0x168] sm:$0xff]
  %v349 = vld [vmem:[%s11 + $0x170] sm:$0xff]
  %v350 = vld [vmem:[%s11 + $0x178] sm:$0xff]
  %v351 = vld [vmem:[%s11 + $0x180] sm:$0xff]
  %v352 = vld [vmem:[%s11 + $0x188] sm:$0xff]
  %v353 = vld [vmem:[%s11 + $0x190] sm:$0xff]
  %v354 = vld [vmem:[%s11 + $0x198] sm:$0xff]
  %v355 = vld [vmem:[%s11 + $0x1a0] sm:$0xff]
  %v356 = vld [vmem:[%s11 + $0x1a8] sm:$0xff]
  %v357 = vld [vmem:[%s11 + $0x1b0] sm:$0xff]
  %v358 = vld [vmem:[%s11 + $0x1b8] sm:$0xff]
  %v359 = vld [vmem:[%s11 + $0x1c0] sm:$0xff]
  %v360 = vld [vmem:[%s11 + $0x1c8] sm:$0xff]
  %v361 = vld [vmem:[%s11 + $0x1d0] sm:$0xff]
  %v362 = vld [vmem:[%s11 + $0x1d8] sm:$0xff]
  %v363 = vld [vmem:[%s11 + $0x1e0] sm:$0xff]
  %v364 = vld [vmem:[%s11 + $0x1e8] sm:$0xff]
  %v365 = vld [vmem:[%s11 + $0x1f0] sm:$0xff]
  %v366 = vld [vmem:[%s11 + $0x1f8] sm:$0xff]
  %vm367 = vcmask 523264
  %v369 = vsel %vm367, %v211, 0
  %v372 = vsel %vm367, %v212, 0
  %374 = vmatprep.subr.mxu0 0.0
  %375 = vmatpush1.msra.mxu0 0.0
  %376 = vmatprep.subr.mxu0 0.0
  %377 = vmatpush1.msra.mxu0 0.0
  %378 = vmatprep.subr.mxu0 0.0
  %379 = vmatpush1.msra.mxu0 0.0
  %380 = vmatprep.subr.mxu0 0.0
  %381 = vmatpush1.msra.mxu0 0.0
  %382 = vmatprep.subr.mxu0 0.0
  %383 = vmatpush1.msra.mxu0 0.0
  %384 = vmatprep.subr.mxu0 0.0
  %385 = vmatpush1.msra.mxu0 0.0
  %386 = vmatprep.subr.mxu0 0.0
  %387 = vmatpush1.msra.mxu0 0.0
  %388 = vmatprep.subr.mxu0 0.0
  %389 = vmatpush1.msra.mxu0 0.0
  %390 = vmatprep.subr.mxu0 0.0
  %391 = vmatpush1.msra.mxu0 %v208
  %392 = vmatprep.subr.mxu0 0.0
  %393 = vmatpush1.msra.mxu0 %v203
  %394 = vmatprep.subr.mxu0 0.0
  %395 = vmatpush1.msra.mxu0 %v198
  %396 = vmatprep.subr.mxu0 0.0
  %397 = vmatpush1.msra.mxu0 %v193
  %398 = vmatprep.subr.mxu0 0.0
  %399 = vmatpush1.msra.mxu0 %v188
  %400 = vmatprep.subr.mxu0 0.0
  %401 = vmatpush1.msra.mxu0 %v183
  %402 = vmatprep.subr.mxu0 0.0
  %403 = vmatpush1.msra.mxu0 %v178
  %404 = vmatprep.subr.mxu0 0.0
  %405 = vmatpush1.msra.mxu0 %v173
  %406 = vmatprep.subr.mxu0 0.0
  %407 = vmatpush2.msra.mxu0 0.0
  %408 = vmatprep.subr.mxu0 0.0
  %409 = vmatpush2.msra.mxu0 0.0
  %410 = vmatprep.subr.mxu0 0.0
  %411 = vmatpush2.msra.mxu0 0.0
  %412 = vmatprep.subr.mxu0 0.0
  %413 = vmatpush2.msra.mxu0 0.0
  %414 = vmatprep.subr.mxu0 0.0
  %415 = vmatpush2.msra.mxu0 0.0
  %416 = vmatprep.subr.mxu0 0.0
  %417 = vmatpush2.msra.mxu0 0.0
  %418 = vmatprep.subr.mxu0 0.0
  %419 = vmatpush2.msra.mxu0 0.0
  %420 = vmatprep.subr.mxu0 0.0
  %421 = vmatpush2.msra.mxu0 0.0
  %422 = vmatprep.subr.mxu0 0.0
  %423 = vmatpush2.msra.mxu0 0.0
  %424 = vmatprep.subr.mxu0 0.0
  %425 = vmatpush2.msra.mxu0 0.0
  %426 = vmatprep.subr.mxu0 0.0
  %427 = vmatpush2.msra.mxu0 0.0
  %428 = vmatprep.subr.mxu0 0.0
  %429 = vmatpush2.msra.mxu0 0.0
  %430 = vmatprep.subr.mxu0 0.0
  %431 = vmatpush2.msra.mxu0 0.0
  %432 = vmatprep.subr.mxu0 0.0
  %433 = vmatpush2.msra.mxu0 0.0
  %434 = vmatprep.subr.mxu0 0.0
  %435 = vmatpush2.msra.mxu0 0.0
  %436 = vmatprep.subr.mxu0 0.0
  %437 = vmatpush2.msra.mxu0 0.0
  %438 = vmatprep.mubr.f32.mxu0 0.0
  %439 = vmatmul.mubr.f32.gmra.mxu0 %v369
  %v440 = vpop.f32.mrf.mxu0
  %v441 = vadd.f32 0.0, %v440
  %v442 = vpop.f32.mrf.mxu0
  %443 = vmatprep.mubr.f32.mxu0 0.0
  %444 = vmatmul.mubr.f32.gmra.mxu0 %v372
  %v445 = vpop.f32.mrf.mxu0
  %v446 = vadd.f32 0.0, %v445
  %v447 = vpop.f32.mrf.mxu0
  %448 = vdwg.mxu0
  %v450 = vsel %vm367, %v213, 0
  %v453 = vsel %vm367, %v214, 0
  %455 = vmatprep.subr.mxu0 0.0
  %456 = vmatpush1.msra.mxu0 0.0
  %457 = vmatprep.subr.mxu0 0.0
  %458 = vmatpush1.msra.mxu0 0.0
  %459 = vmatprep.subr.mxu0 0.0
  %460 = vmatpush1.msra.mxu0 0.0
  %461 = vmatprep.subr.mxu0 0.0
  %462 = vmatpush1.msra.mxu0 0.0
  %463 = vmatprep.subr.mxu0 0.0
  %464 = vmatpush1.msra.mxu0 0.0
  %465 = vmatprep.subr.mxu0 0.0
  %466 = vmatpush1.msra.mxu0 0.0
  %467 = vmatprep.subr.mxu0 0.0
  %468 = vmatpush1.msra.mxu0 0.0
  %469 = vmatprep.subr.mxu0 0.0
  %470 = vmatpush1.msra.mxu0 0.0
  %471 = vmatprep.subr.mxu0 0.0
  %472 = vmatpush1.msra.mxu0 %v208
  %473 = vmatprep.subr.mxu0 0.0
  %474 = vmatpush1.msra.mxu0 %v203
  %475 = vmatprep.subr.mxu0 0.0
  %476 = vmatpush1.msra.mxu0 %v198
  %477 = vmatprep.subr.mxu0 0.0
  %478 = vmatpush1.msra.mxu0 %v193
  %479 = vmatprep.subr.mxu0 0.0
  %480 = vmatpush1.msra.mxu0 %v188
  %481 = vmatprep.subr.mxu0 0.0
  %482 = vmatpush1.msra.mxu0 %v183
  %483 = vmatprep.subr.mxu0 0.0
  %484 = vmatpush1.msra.mxu0 %v178
  %485 = vmatprep.subr.mxu0 0.0
  %486 = vmatpush1.msra.mxu0 %v173
  %487 = vmatprep.subr.mxu0 0.0
  %488 = vmatpush2.msra.mxu0 0.0
  %489 = vmatprep.subr.mxu0 0.0
  %490 = vmatpush2.msra.mxu0 0.0
  %491 = vmatprep.subr.mxu0 0.0
  %492 = vmatpush2.msra.mxu0 0.0
  %493 = vmatprep.subr.mxu0 0.0
  %494 = vmatpush2.msra.mxu0 0.0
  %495 = vmatprep.subr.mxu0 0.0
  %496 = vmatpush2.msra.mxu0 0.0
  %497 = vmatprep.subr.mxu0 0.0
  %498 = vmatpush2.msra.mxu0 0.0
  %499 = vmatprep.subr.mxu0 0.0
  %500 = vmatpush2.msra.mxu0 0.0
  %501 = vmatprep.subr.mxu0 0.0
  %502 = vmatpush2.msra.mxu0 0.0
  %503 = vmatprep.subr.mxu0 0.0
  %504 = vmatpush2.msra.mxu0 0.0
  %505 = vmatprep.subr.mxu0 0.0
  %506 = vmatpush2.msra.mxu0 0.0
  %507 = vmatprep.subr.mxu0 0.0
  %508 = vmatpush2.msra.mxu0 0.0
  %509 = vmatprep.subr.mxu0 0.0
  %510 = vmatpush2.msra.mxu0 0.0
  %511 = vmatprep.subr.mxu0 0.0
  %512 = vmatpush2.msra.mxu0 0.0
  %513 = vmatprep.subr.mxu0 0.0
  %514 = vmatpush2.msra.mxu0 0.0
  %515 = vmatprep.subr.mxu0 0.0
  %516 = vmatpush2.msra.mxu0 0.0
  %517 = vmatprep.subr.mxu0 0.0
  %518 = vmatpush2.msra.mxu0 0.0
  %519 = vmatprep.mubr.f32.mxu0 0.0
  %520 = vmatmul.mubr.f32.gmra.mxu0 %v450
  %v521 = vpop.f32.mrf.mxu0
  %v522 = vadd.f32 0.0, %v521
  %v523 = vpop.f32.mrf.mxu0
  %524 = vmatprep.mubr.f32.mxu0 0.0
  %525 = vmatmul.mubr.f32.gmra.mxu0 %v453
  %v526 = vpop.f32.mrf.mxu0
  %v527 = vadd.f32 0.0, %v526
  %v528 = vpop.f32.mrf.mxu0
  %529 = vdwg.mxu0
  %v530 = vld [vmem:[%s7] sm:$0xff]
  %v531 = vld [vmem:[%s7 + $0x8] sm:$0xff]
  %v532 = vld [vmem:[%s7 + $0x10] sm:$0xff]
  %v533 = vld [vmem:[%s7 + $0x18] sm:$0xff]
  %v534 = vld [vmem:[%s7 + $0x20] sm:$0xff]
  %v535 = vld [vmem:[%s7 + $0x28] sm:$0xff]
  %v536 = vld [vmem:[%s7 + $0x30] sm:$0xff]
  %v537 = vld [vmem:[%s7 + $0x38] sm:$0xff]
  %v538 = vld [vmem:[%s7 + $0x40] sm:$0xff]
  %v539 = vld [vmem:[%s7 + $0x48] sm:$0xff]
  %v540 = vld [vmem:[%s7 + $0x50] sm:$0xff]
  %v541 = vld [vmem:[%s7 + $0x58] sm:$0xff]
  %v542 = vld [vmem:[%s7 + $0x60] sm:$0xff]
  %v543 = vld [vmem:[%s7 + $0x68] sm:$0xff]
  %v544 = vld [vmem:[%s7 + $0x70] sm:$0xff]
  %v545 = vld [vmem:[%s7 + $0x78] sm:$0xff]
  %v546 = vld [vmem:[%s8] sm:$0xff]
  %v547 = vld [vmem:[%s8 + $0x8] sm:$0xff]
  %v548 = vld [vmem:[%s8 + $0x10] sm:$0xff]
  %v549 = vld [vmem:[%s8 + $0x18] sm:$0xff]
  %v550 = vld [vmem:[%s8 + $0x20] sm:$0xff]
  %v551 = vld [vmem:[%s8 + $0x28] sm:$0xff]
  %v552 = vld [vmem:[%s8 + $0x30] sm:$0xff]
  %v553 = vld [vmem:[%s8 + $0x38] sm:$0xff]
  %v554 = vld [vmem:[%s8 + $0x40] sm:$0xff]
  %v555 = vld [vmem:[%s8 + $0x48] sm:$0xff]
  %v556 = vld [vmem:[%s8 + $0x50] sm:$0xff]
  %v557 = vld [vmem:[%s8 + $0x58] sm:$0xff]
  %v558 = vld [vmem:[%s8 + $0x60] sm:$0xff]
  %v559 = vld [vmem:[%s8 + $0x68] sm:$0xff]
  %v560 = vld [vmem:[%s8 + $0x70] sm:$0xff]
  %v561 = vld [vmem:[%s8 + $0x78] sm:$0xff]
  %vm562 = vcmask 261120
  %v564 = vsel %vm562, %v522, 0
  %v567 = vsel %vm562, %v527, 0
  %569 = vmatprep.subr.mxu0 0.0
  %570 = vmatpush1.msra.mxu0 0.0
  %571 = vmatprep.subr.mxu0 0.0
  %572 = vmatpush1.msra.mxu0 0.0
  %573 = vmatprep.subr.mxu0 0.0
  %574 = vmatpush1.msra.mxu0 0.0
  %575 = vmatprep.subr.mxu0 0.0
  %576 = vmatpush1.msra.mxu0 0.0
  %577 = vmatprep.subr.mxu0 0.0
  %578 = vmatpush1.msra.mxu0 0.0
  %579 = vmatprep.subr.mxu0 0.0
  %580 = vmatpush1.msra.mxu0 0.0
  %581 = vmatprep.subr.mxu0 0.0
  %582 = vmatpush1.msra.mxu0 0.0
  %583 = vmatprep.subr.mxu0 0.0
  %584 = vmatpush1.msra.mxu0 0.0
  %585 = vmatprep.subr.mxu0 0.0
  %586 = vmatpush1.msra.mxu0 0.0
  %587 = vmatprep.subr.mxu0 0.0
  %588 = vmatpush1.msra.mxu0 0.0
  %589 = vmatprep.subr.mxu0 0.0
  %590 = vmatpush1.msra.mxu0 0.0
  %591 = vmatprep.subr.mxu0 0.0
  %592 = vmatpush1.msra.mxu0 0.0
  %593 = vmatprep.subr.mxu0 %v559
  %594 = vmatpush1.msra.mxu0 %v558
  %595 = vmatprep.subr.mxu0 %v555
  %596 = vmatpush1.msra.mxu0 %v554
  %597 = vmatprep.subr.mxu0 %v551
  %598 = vmatpush1.msra.mxu0 %v550
  %599 = vmatprep.subr.mxu0 %v547
  %600 = vmatpush1.msra.mxu0 %v546
  %601 = vmatprep.subr.mxu0 0.0
  %602 = vmatpush2.msra.mxu0 0.0
  %603 = vmatprep.subr.mxu0 0.0
  %604 = vmatpush2.msra.mxu0 0.0
  %605 = vmatprep.subr.mxu0 0.0
  %606 = vmatpush2.msra.mxu0 0.0
  %607 = vmatprep.subr.mxu0 0.0
  %608 = vmatpush2.msra.mxu0 0.0
  %609 = vmatprep.subr.mxu0 0.0
  %610 = vmatpush2.msra.mxu0 0.0
  %611 = vmatprep.subr.mxu0 0.0
  %612 = vmatpush2.msra.mxu0 0.0
  %613 = vmatprep.subr.mxu0 0.0
  %614 = vmatpush2.msra.mxu0 0.0
  %615 = vmatprep.subr.mxu0 0.0
  %616 = vmatpush2.msra.mxu0 0.0
  %617 = vmatprep.subr.mxu0 0.0
  %618 = vmatpush2.msra.mxu0 0.0
  %619 = vmatprep.subr.mxu0 0.0
  %620 = vmatpush2.msra.mxu0 0.0
  %621 = vmatprep.subr.mxu0 0.0
  %622 = vmatpush2.msra.mxu0 0.0
  %623 = vmatprep.subr.mxu0 0.0
  %624 = vmatpush2.msra.mxu0 0.0
  %625 = vmatprep.subr.mxu0 0.0
  %626 = vmatpush2.msra.mxu0 0.0
  %627 = vmatprep.subr.mxu0 0.0
  %628 = vmatpush2.msra.mxu0 0.0
  %629 = vmatprep.subr.mxu0 0.0
  %630 = vmatpush2.msra.mxu0 0.0
  %631 = vmatprep.subr.mxu0 0.0
  %632 = vmatpush2.msra.mxu0 0.0
  %633 = vmatprep.mubr.f32.mxu0 0.0
  %634 = vmatmul.mubr.f32.gmra.mxu0 %v564
  %v635 = vpop.f32.mrf.mxu0
  %v636 = vadd.f32 0.0, %v635
  %v637 = vpop.f32.mrf.mxu0
  %v638 = vadd.f32 0.0, %v637
  %639 = vmatprep.mubr.f32.mxu0 0.0
  %640 = vmatmul.mubr.f32.gmra.mxu0 %v567
  %v641 = vpop.f32.mrf.mxu0
  %v642 = vadd.f32 0.0, %v641
  %v643 = vpop.f32.mrf.mxu0
  %v644 = vadd.f32 0.0, %v643
  %645 = vdwg.mxu0
  %646 = vmatprep.subr.mxu0 0.0
  %647 = vmatpush1.msra.mxu0 0.0
  %648 = vmatprep.subr.mxu0 0.0
  %649 = vmatpush1.msra.mxu0 0.0
  %650 = vmatprep.subr.mxu0 0.0
  %651 = vmatpush1.msra.mxu0 0.0
  %652 = vmatprep.subr.mxu0 0.0
  %653 = vmatpush1.msra.mxu0 0.0
  %654 = vmatprep.subr.mxu0 0.0
  %655 = vmatpush1.msra.mxu0 0.0
  %656 = vmatprep.subr.mxu0 0.0
  %657 = vmatpush1.msra.mxu0 0.0
  %658 = vmatprep.subr.mxu0 0.0
  %659 = vmatpush1.msra.mxu0 0.0
  %660 = vmatprep.subr.mxu0 0.0
  %661 = vmatpush1.msra.mxu0 0.0
  %662 = vmatprep.subr.mxu0 0.0
  %663 = vmatpush1.msra.mxu0 0.0
  %664 = vmatprep.subr.mxu0 0.0
  %665 = vmatpush1.msra.mxu0 0.0
  %666 = vmatprep.subr.mxu0 0.0
  %667 = vmatpush1.msra.mxu0 0.0
  %668 = vmatprep.subr.mxu0 0.0
  %669 = vmatpush1.msra.mxu0 0.0
  %670 = vmatprep.subr.mxu0 %v561
  %671 = vmatpush1.msra.mxu0 %v560
  %672 = vmatprep.subr.mxu0 %v557
  %673 = vmatpush1.msra.mxu0 %v556
  %674 = vmatprep.subr.mxu0 %v553
  %675 = vmatpush1.msra.mxu0 %v552
  %676 = vmatprep.subr.mxu0 %v549
  %677 = vmatpush1.msra.mxu0 %v548
  %678 = vmatprep.subr.mxu0 0.0
  %679 = vmatpush2.msra.mxu0 0.0
  %680 = vmatprep.subr.mxu0 0.0
  %681 = vmatpush2.msra.mxu0 0.0
  %682 = vmatprep.subr.mxu0 0.0
  %683 = vmatpush2.msra.mxu0 0.0
  %684 = vmatprep.subr.mxu0 0.0
  %685 = vmatpush2.msra.mxu0 0.0
  %686 = vmatprep.subr.mxu0 0.0
  %687 = vmatpush2.msra.mxu0 0.0
  %688 = vmatprep.subr.mxu0 0.0
  %689 = vmatpush2.msra.mxu0 0.0
  %690 = vmatprep.subr.mxu0 0.0
  %691 = vmatpush2.msra.mxu0 0.0
  %692 = vmatprep.subr.mxu0 0.0
  %693 = vmatpush2.msra.mxu0 0.0
  %694 = vmatprep.subr.mxu0 0.0
  %695 = vmatpush2.msra.mxu0 0.0
  %696 = vmatprep.subr.mxu0 0.0
  %697 = vmatpush2.msra.mxu0 0.0
  %698 = vmatprep.subr.mxu0 0.0
  %699 = vmatpush2.msra.mxu0 0.0
  %700 = vmatprep.subr.mxu0 0.0
  %701 = vmatpush2.msra.mxu0 0.0
  %702 = vmatprep.subr.mxu0 0.0
  %703 = vmatpush2.msra.mxu0 0.0
  %704 = vmatprep.subr.mxu0 0.0
  %705 = vmatpush2.msra.mxu0 0.0
  %706 = vmatprep.subr.mxu0 0.0
  %707 = vmatpush2.msra.mxu0 0.0
  %708 = vmatprep.subr.mxu0 0.0
  %709 = vmatpush2.msra.mxu0 0.0
  %710 = vmatprep.mubr.f32.mxu0 0.0
  %711 = vmatmul.mubr.f32.gmra.mxu0 %v564
  %v712 = vpop.f32.mrf.mxu0
  %v713 = vadd.f32 0.0, %v712
  %v714 = vpop.f32.mrf.mxu0
  %v715 = vadd.f32 0.0, %v714
  %716 = vmatprep.mubr.f32.mxu0 0.0
  %717 = vmatmul.mubr.f32.gmra.mxu0 %v567
  %v718 = vpop.f32.mrf.mxu0
  %v719 = vadd.f32 0.0, %v718
  %v720 = vpop.f32.mrf.mxu0
  %v721 = vadd.f32 0.0, %v720
  %722 = vdwg.mxu0
  %v724 = vsel %vm562, %v441, 0
  %v727 = vsel %vm562, %v446, 0
  %729 = vmatprep.subr.mxu0 0.0
  %730 = vmatpush1.msra.mxu0 0.0
  %731 = vmatprep.subr.mxu0 0.0
  %732 = vmatpush1.msra.mxu0 0.0
  %733 = vmatprep.subr.mxu0 0.0
  %734 = vmatpush1.msra.mxu0 0.0
  %735 = vmatprep.subr.mxu0 0.0
  %736 = vmatpush1.msra.mxu0 0.0
  %737 = vmatprep.subr.mxu0 0.0
  %738 = vmatpush1.msra.mxu0 0.0
  %739 = vmatprep.subr.mxu0 0.0
  %740 = vmatpush1.msra.mxu0 0.0
  %741 = vmatprep.subr.mxu0 0.0
  %742 = vmatpush1.msra.mxu0 0.0
  %743 = vmatprep.subr.mxu0 0.0
  %744 = vmatpush1.msra.mxu0 0.0
  %745 = vmatprep.subr.mxu0 0.0
  %746 = vmatpush1.msra.mxu0 0.0
  %747 = vmatprep.subr.mxu0 0.0
  %748 = vmatpush1.msra.mxu0 0.0
  %749 = vmatprep.subr.mxu0 0.0
  %750 = vmatpush1.msra.mxu0 0.0
  %751 = vmatprep.subr.mxu0 0.0
  %752 = vmatpush1.msra.mxu0 0.0
  %753 = vmatprep.subr.mxu0 %v543
  %754 = vmatpush1.msra.mxu0 %v542
  %755 = vmatprep.subr.mxu0 %v539
  %756 = vmatpush1.msra.mxu0 %v538
  %757 = vmatprep.subr.mxu0 %v535
  %758 = vmatpush1.msra.mxu0 %v534
  %759 = vmatprep.subr.mxu0 %v531
  %760 = vmatpush1.msra.mxu0 %v530
  %761 = vmatprep.subr.mxu0 0.0
  %762 = vmatpush2.msra.mxu0 0.0
  %763 = vmatprep.subr.mxu0 0.0
  %764 = vmatpush2.msra.mxu0 0.0
  %765 = vmatprep.subr.mxu0 0.0
  %766 = vmatpush2.msra.mxu0 0.0
  %767 = vmatprep.subr.mxu0 0.0
  %768 = vmatpush2.msra.mxu0 0.0
  %769 = vmatprep.subr.mxu0 0.0
  %770 = vmatpush2.msra.mxu0 0.0
  %771 = vmatprep.subr.mxu0 0.0
  %772 = vmatpush2.msra.mxu0 0.0
  %773 = vmatprep.subr.mxu0 0.0
  %774 = vmatpush2.msra.mxu0 0.0
  %775 = vmatprep.subr.mxu0 0.0
  %776 = vmatpush2.msra.mxu0 0.0
  %777 = vmatprep.subr.mxu0 0.0
  %778 = vmatpush2.msra.mxu0 0.0
  %779 = vmatprep.subr.mxu0 0.0
  %780 = vmatpush2.msra.mxu0 0.0
  %781 = vmatprep.subr.mxu0 0.0
  %782 = vmatpush2.msra.mxu0 0.0
  %783 = vmatprep.subr.mxu0 0.0
  %784 = vmatpush2.msra.mxu0 0.0
  %785 = vmatprep.subr.mxu0 0.0
  %786 = vmatpush2.msra.mxu0 0.0
  %787 = vmatprep.subr.mxu0 0.0
  %788 = vmatpush2.msra.mxu0 0.0
  %789 = vmatprep.subr.mxu0 0.0
  %790 = vmatpush2.msra.mxu0 0.0
  %791 = vmatprep.subr.mxu0 0.0
  %792 = vmatpush2.msra.mxu0 0.0
  %793 = vmatprep.mubr.f32.mxu0 0.0
  %794 = vmatmul.mubr.f32.gmra.mxu0 %v724
  %v795 = vpop.f32.mrf.mxu0
  %v796 = vadd.f32 %v636, %v795
  %v797 = vpop.f32.mrf.mxu0
  %v798 = vadd.f32 %v638, %v797
  %799 = vmatprep.mubr.f32.mxu0 0.0
  %800 = vmatmul.mubr.f32.gmra.mxu0 %v727
  %v801 = vpop.f32.mrf.mxu0
  %v802 = vadd.f32 %v642, %v801
  %v803 = vpop.f32.mrf.mxu0
  %v804 = vadd.f32 %v644, %v803
  %805 = vdwg.mxu0
  %806 = vmatprep.subr.mxu0 0.0
  %807 = vmatpush1.msra.mxu0 0.0
  %808 = vmatprep.subr.mxu0 0.0
  %809 = vmatpush1.msra.mxu0 0.0
  %810 = vmatprep.subr.mxu0 0.0
  %811 = vmatpush1.msra.mxu0 0.0
  %812 = vmatprep.subr.mxu0 0.0
  %813 = vmatpush1.msra.mxu0 0.0
  %814 = vmatprep.subr.mxu0 0.0
  %815 = vmatpush1.msra.mxu0 0.0
  %816 = vmatprep.subr.mxu0 0.0
  %817 = vmatpush1.msra.mxu0 0.0
  %818 = vmatprep.subr.mxu0 0.0
  %819 = vmatpush1.msra.mxu0 0.0
  %820 = vmatprep.subr.mxu0 0.0
  %821 = vmatpush1.msra.mxu0 0.0
  %822 = vmatprep.subr.mxu0 0.0
  %823 = vmatpush1.msra.mxu0 0.0
  %824 = vmatprep.subr.mxu0 0.0
  %825 = vmatpush1.msra.mxu0 0.0
  %826 = vmatprep.subr.mxu0 0.0
  %827 = vmatpush1.msra.mxu0 0.0
  %828 = vmatprep.subr.mxu0 0.0
  %829 = vmatpush1.msra.mxu0 0.0
  %830 = vmatprep.subr.mxu0 %v545
  %831 = vmatpush1.msra.mxu0 %v544
  %832 = vmatprep.subr.mxu0 %v541
  %833 = vmatpush1.msra.mxu0 %v540
  %834 = vmatprep.subr.mxu0 %v537
  %835 = vmatpush1.msra.mxu0 %v536
  %836 = vmatprep.subr.mxu0 %v533
  %837 = vmatpush1.msra.mxu0 %v532
  %838 = vmatprep.subr.mxu0 0.0
  %839 = vmatpush2.msra.mxu0 0.0
  %840 = vmatprep.subr.mxu0 0.0
  %841 = vmatpush2.msra.mxu0 0.0
  %842 = vmatprep.subr.mxu0 0.0
  %843 = vmatpush2.msra.mxu0 0.0
  %844 = vmatprep.subr.mxu0 0.0
  %845 = vmatpush2.msra.mxu0 0.0
  %846 = vmatprep.subr.mxu0 0.0
  %847 = vmatpush2.msra.mxu0 0.0
  %848 = vmatprep.subr.mxu0 0.0
  %849 = vmatpush2.msra.mxu0 0.0
  %850 = vmatprep.subr.mxu0 0.0
  %851 = vmatpush2.msra.mxu0 0.0
  %852 = vmatprep.subr.mxu0 0.0
  %853 = vmatpush2.msra.mxu0 0.0
  %854 = vmatprep.subr.mxu0 0.0
  %855 = vmatpush2.msra.mxu0 0.0
  %856 = vmatprep.subr.mxu0 0.0
  %857 = vmatpush2.msra.mxu0 0.0
  %858 = vmatprep.subr.mxu0 0.0
  %859 = vmatpush2.msra.mxu0 0.0
  %860 = vmatprep.subr.mxu0 0.0
  %861 = vmatpush2.msra.mxu0 0.0
  %862 = vmatprep.subr.mxu0 0.0
  %863 = vmatpush2.msra.mxu0 0.0
  %864 = vmatprep.subr.mxu0 0.0
  %865 = vmatpush2.msra.mxu0 0.0
  %866 = vmatprep.subr.mxu0 0.0
  %867 = vmatpush2.msra.mxu0 0.0
  %868 = vmatprep.subr.mxu0 0.0
  %869 = vmatpush2.msra.mxu0 0.0
  %870 = vmatprep.mubr.f32.mxu0 0.0
  %871 = vmatmul.mubr.f32.gmra.mxu0 %v724
  %v872 = vpop.f32.mrf.mxu0
  %v873 = vadd.f32 %v713, %v872
  %v874 = vpop.f32.mrf.mxu0
  %v875 = vadd.f32 %v715, %v874
  %876 = vmatprep.mubr.f32.mxu0 0.0
  %877 = vmatmul.mubr.f32.gmra.mxu0 %v727
  %v878 = vpop.f32.mrf.mxu0
  %v879 = vadd.f32 %v719, %v878
  %v880 = vpop.f32.mrf.mxu0
  %v881 = vadd.f32 %v721, %v880
  %882 = vdwg.mxu0
  %v883 = vmul.f32 %v796, %v231
  %v884 = vmul.f32 %v798, %v232
  %v885 = vmul.f32 %v873, %v233
  %v886 = vmul.f32 %v875, %v234
  %v887 = vmul.f32 %v802, %v235
  %v888 = vmul.f32 %v804, %v236
  %v889 = vmul.f32 %v879, %v237
  %v890 = vmul.f32 %v881, %v238
  %891 = vmatprep.subr.mxu0 0.0
  %892 = vmatpush1.msra.mxu0 %v254
  %893 = vmatprep.subr.mxu0 0.0
  %894 = vmatpush1.msra.mxu0 %v253
  %895 = vmatprep.subr.mxu0 0.0
  %896 = vmatpush1.msra.mxu0 %v252
  %897 = vmatprep.subr.mxu0 0.0
  %898 = vmatpush1.msra.mxu0 %v251
  %899 = vmatprep.subr.mxu0 0.0
  %900 = vmatpush1.msra.mxu0 %v250
  %901 = vmatprep.subr.mxu0 0.0
  %902 = vmatpush1.msra.mxu0 %v249
  %903 = vmatprep.subr.mxu0 0.0
  %904 = vmatpush1.msra.mxu0 %v248
  %905 = vmatprep.subr.mxu0 0.0
  %906 = vmatpush1.msra.mxu0 %v247
  %907 = vmatprep.subr.mxu0 0.0
  %908 = vmatpush1.msra.mxu0 %v246
  %909 = vmatprep.subr.mxu0 0.0
  %910 = vmatpush1.msra.mxu0 %v245
  %911 = vmatprep.subr.mxu0 0.0
  %912 = vmatpush1.msra.mxu0 %v244
  %913 = vmatprep.subr.mxu0 0.0
  %914 = vmatpush1.msra.mxu0 %v243
  %915 = vmatprep.subr.mxu0 0.0
  %916 = vmatpush1.msra.mxu0 %v242
  %917 = vmatprep.subr.mxu0 0.0
  %918 = vmatpush1.msra.mxu0 %v241
  %919 = vmatprep.subr.mxu0 0.0
  %920 = vmatpush1.msra.mxu0 %v240
  %921 = vmatprep.subr.mxu0 0.0
  %922 = vmatpush1.msra.mxu0 %v239
  %923 = vmatprep.subr.mxu0 0.0
  %924 = vmatpush2.msra.mxu0 %v270
  %925 = vmatprep.subr.mxu0 0.0
  %926 = vmatpush2.msra.mxu0 %v269
  %927 = vmatprep.subr.mxu0 0.0
  %928 = vmatpush2.msra.mxu0 %v268
  %929 = vmatprep.subr.mxu0 0.0
  %930 = vmatpush2.msra.mxu0 %v267
  %931 = vmatprep.subr.mxu0 0.0
  %932 = vmatpush2.msra.mxu0 %v266
  %933 = vmatprep.subr.mxu0 0.0
  %934 = vmatpush2.msra.mxu0 %v265
  %935 = vmatprep.subr.mxu0 0.0
  %936 = vmatpush2.msra.mxu0 %v264
  %937 = vmatprep.subr.mxu0 0.0
  %938 = vmatpush2.msra.mxu0 %v263
  %939 = vmatprep.subr.mxu0 0.0
  %940 = vmatpush2.msra.mxu0 %v262
  %941 = vmatprep.subr.mxu0 0.0
  %942 = vmatpush2.msra.mxu0 %v261
  %943 = vmatprep.subr.mxu0 0.0
  %944 = vmatpush2.msra.mxu0 %v260
  %945 = vmatprep.subr.mxu0 0.0
  %946 = vmatpush2.msra.mxu0 %v259
  %947 = vmatprep.subr.mxu0 0.0
  %948 = vmatpush2.msra.mxu0 %v258
  %949 = vmatprep.subr.mxu0 0.0
  %950 = vmatpush2.msra.mxu0 %v257
  %951 = vmatprep.subr.mxu0 0.0
  %952 = vmatpush2.msra.mxu0 %v256
  %953 = vmatprep.subr.mxu0 0.0
  %954 = vmatpush2.msra.mxu0 %v255
  %955 = vmatprep.mubr.f32.mxu0 %v884
  %956 = vmatmul.mubr.f32.gmra.mxu0 %v883
  %v957 = vpop.f32.mrf.mxu0
  %v958 = vadd.f32 0.0, %v957
  %v959 = vpop.f32.mrf.mxu0
  %960 = vmatprep.mubr.f32.mxu0 %v888
  %961 = vmatmul.mubr.f32.gmra.mxu0 %v887
  %v962 = vpop.f32.mrf.mxu0
  %v963 = vadd.f32 0.0, %v962
  %v964 = vpop.f32.mrf.mxu0
  %965 = vdwg.mxu0
  %966 = vmatprep.subr.mxu0 0.0
  %967 = vmatpush1.msra.mxu0 %v286
  %968 = vmatprep.subr.mxu0 0.0
  %969 = vmatpush1.msra.mxu0 %v285
  %970 = vmatprep.subr.mxu0 0.0
  %971 = vmatpush1.msra.mxu0 %v284
  %972 = vmatprep.subr.mxu0 0.0
  %973 = vmatpush1.msra.mxu0 %v283
  %974 = vmatprep.subr.mxu0 0.0
  %975 = vmatpush1.msra.mxu0 %v282
  %976 = vmatprep.subr.mxu0 0.0
  %977 = vmatpush1.msra.mxu0 %v281
  %978 = vmatprep.subr.mxu0 0.0
  %979 = vmatpush1.msra.mxu0 %v280
  %980 = vmatprep.subr.mxu0 0.0
  %981 = vmatpush1.msra.mxu0 %v279
  %982 = vmatprep.subr.mxu0 0.0
  %983 = vmatpush1.msra.mxu0 %v278
  %984 = vmatprep.subr.mxu0 0.0
  %985 = vmatpush1.msra.mxu0 %v277
  %986 = vmatprep.subr.mxu0 0.0
  %987 = vmatpush1.msra.mxu0 %v276
  %988 = vmatprep.subr.mxu0 0.0
  %989 = vmatpush1.msra.mxu0 %v275
  %990 = vmatprep.subr.mxu0 0.0
  %991 = vmatpush1.msra.mxu0 %v274
  %992 = vmatprep.subr.mxu0 0.0
  %993 = vmatpush1.msra.mxu0 %v273
  %994 = vmatprep.subr.mxu0 0.0
  %995 = vmatpush1.msra.mxu0 %v272
  %996 = vmatprep.subr.mxu0 0.0
  %997 = vmatpush1.msra.mxu0 %v271
  %998 = vmatprep.subr.mxu0 0.0
  %999 = vmatpush2.msra.mxu0 %v302
  %1000 = vmatprep.subr.mxu0 0.0
  %1001 = vmatpush2.msra.mxu0 %v301
  %1002 = vmatprep.subr.mxu0 0.0
  %1003 = vmatpush2.msra.mxu0 %v300
  %1004 = vmatprep.subr.mxu0 0.0
  %1005 = vmatpush2.msra.mxu0 %v299
  %1006 = vmatprep.subr.mxu0 0.0
  %1007 = vmatpush2.msra.mxu0 %v298
  %1008 = vmatprep.subr.mxu0 0.0
  %1009 = vmatpush2.msra.mxu0 %v297
  %1010 = vmatprep.subr.mxu0 0.0
  %1011 = vmatpush2.msra.mxu0 %v296
  %1012 = vmatprep.subr.mxu0 0.0
  %1013 = vmatpush2.msra.mxu0 %v295
  %1014 = vmatprep.subr.mxu0 0.0
  %1015 = vmatpush2.msra.mxu0 %v294
  %1016 = vmatprep.subr.mxu0 0.0
  %1017 = vmatpush2.msra.mxu0 %v293
  %1018 = vmatprep.subr.mxu0 0.0
  %1019 = vmatpush2.msra.mxu0 %v292
  %1020 = vmatprep.subr.mxu0 0.0
  %1021 = vmatpush2.msra.mxu0 %v291
  %1022 = vmatprep.subr.mxu0 0.0
  %1023 = vmatpush2.msra.mxu0 %v290
  %1024 = vmatprep.subr.mxu0 0.0
  %1025 = vmatpush2.msra.mxu0 %v289
  %1026 = vmatprep.subr.mxu0 0.0
  %1027 = vmatpush2.msra.mxu0 %v288
  %1028 = vmatprep.subr.mxu0 0.0
  %1029 = vmatpush2.msra.mxu0 %v287
  %1030 = vmatprep.mubr.f32.mxu0 %v886
  %1031 = vmatmul.mubr.f32.gmra.mxu0 %v885
  %v1032 = vpop.f32.mrf.mxu0
  %v1033 = vadd.f32 %v958, %v1032
  %v1034 = vpop.f32.mrf.mxu0
  %1035 = vmatprep.mubr.f32.mxu0 %v890
  %1036 = vmatmul.mubr.f32.gmra.mxu0 %v889
  %v1037 = vpop.f32.mrf.mxu0
  %v1038 = vadd.f32 %v963, %v1037
  %v1039 = vpop.f32.mrf.mxu0
  %1040 = vdwg.mxu0
  %1041 = vmatprep.subr.mxu0 0.0
  %1042 = vmatpush1.msra.mxu0 %v318
  %1043 = vmatprep.subr.mxu0 0.0
  %1044 = vmatpush1.msra.mxu0 %v317
  %1045 = vmatprep.subr.mxu0 0.0
  %1046 = vmatpush1.msra.mxu0 %v316
  %1047 = vmatprep.subr.mxu0 0.0
  %1048 = vmatpush1.msra.mxu0 %v315
  %1049 = vmatprep.subr.mxu0 0.0
  %1050 = vmatpush1.msra.mxu0 %v314
  %1051 = vmatprep.subr.mxu0 0.0
  %1052 = vmatpush1.msra.mxu0 %v313
  %1053 = vmatprep.subr.mxu0 0.0
  %1054 = vmatpush1.msra.mxu0 %v312
  %1055 = vmatprep.subr.mxu0 0.0
  %1056 = vmatpush1.msra.mxu0 %v311
  %1057 = vmatprep.subr.mxu0 0.0
  %1058 = vmatpush1.msra.mxu0 %v310
  %1059 = vmatprep.subr.mxu0 0.0
  %1060 = vmatpush1.msra.mxu0 %v309
  %1061 = vmatprep.subr.mxu0 0.0
  %1062 = vmatpush1.msra.mxu0 %v308
  %1063 = vmatprep.subr.mxu0 0.0
  %1064 = vmatpush1.msra.mxu0 %v307
  %1065 = vmatprep.subr.mxu0 0.0
  %1066 = vmatpush1.msra.mxu0 %v306
  %1067 = vmatprep.subr.mxu0 0.0
  %1068 = vmatpush1.msra.mxu0 %v305
  %1069 = vmatprep.subr.mxu0 0.0
  %1070 = vmatpush1.msra.mxu0 %v304
  %1071 = vmatprep.subr.mxu0 0.0
  %1072 = vmatpush1.msra.mxu0 %v303
  %1073 = vmatprep.subr.mxu0 0.0
  %1074 = vmatpush2.msra.mxu0 %v334
  %1075 = vmatprep.subr.mxu0 0.0
  %1076 = vmatpush2.msra.mxu0 %v333
  %1077 = vmatprep.subr.mxu0 0.0
  %1078 = vmatpush2.msra.mxu0 %v332
  %1079 = vmatprep.subr.mxu0 0.0
  %1080 = vmatpush2.msra.mxu0 %v331
  %1081 = vmatprep.subr.mxu0 0.0
  %1082 = vmatpush2.msra.mxu0 %v330
  %1083 = vmatprep.subr.mxu0 0.0
  %1084 = vmatpush2.msra.mxu0 %v329
  %1085 = vmatprep.subr.mxu0 0.0
  %1086 = vmatpush2.msra.mxu0 %v328
  %1087 = vmatprep.subr.mxu0 0.0
  %1088 = vmatpush2.msra.mxu0 %v327
  %1089 = vmatprep.subr.mxu0 0.0
  %1090 = vmatpush2.msra.mxu0 %v326
  %1091 = vmatprep.subr.mxu0 0.0
  %1092 = vmatpush2.msra.mxu0 %v325
  %1093 = vmatprep.subr.mxu0 0.0
  %1094 = vmatpush2.msra.mxu0 %v324
  %1095 = vmatprep.subr.mxu0 0.0
  %1096 = vmatpush2.msra.mxu0 %v323
  %1097 = vmatprep.subr.mxu0 0.0
  %1098 = vmatpush2.msra.mxu0 %v322
  %1099 = vmatprep.subr.mxu0 0.0
  %1100 = vmatpush2.msra.mxu0 %v321
  %1101 = vmatprep.subr.mxu0 0.0
  %1102 = vmatpush2.msra.mxu0 %v320
  %1103 = vmatprep.subr.mxu0 0.0
  %1104 = vmatpush2.msra.mxu0 %v319
  %1105 = vmatprep.mubr.f32.mxu0 %v884
  %1106 = vmatmul.mubr.f32.gmra.mxu0 %v883
  %v1107 = vpop.f32.mrf.mxu0
  %v1108 = vadd.f32 0.0, %v1107
  %v1109 = vpop.f32.mrf.mxu0
  %1110 = vmatprep.mubr.f32.mxu0 %v888
  %1111 = vmatmul.mubr.f32.gmra.mxu0 %v887
  %v1112 = vpop.f32.mrf.mxu0
  %v1113 = vadd.f32 0.0, %v1112
  %v1114 = vpop.f32.mrf.mxu0
  %1115 = vdwg.mxu0
  %1116 = vmatprep.subr.mxu0 0.0
  %1117 = vmatpush1.msra.mxu0 %v350
  %1118 = vmatprep.subr.mxu0 0.0
  %1119 = vmatpush1.msra.mxu0 %v349
  %1120 = vmatprep.subr.mxu0 0.0
  %1121 = vmatpush1.msra.mxu0 %v348
  %1122 = vmatprep.subr.mxu0 0.0
  %1123 = vmatpush1.msra.mxu0 %v347
  %1124 = vmatprep.subr.mxu0 0.0
  %1125 = vmatpush1.msra.mxu0 %v346
  %1126 = vmatprep.subr.mxu0 0.0
  %1127 = vmatpush1.msra.mxu0 %v345
  %1128 = vmatprep.subr.mxu0 0.0
  %1129 = vmatpush1.msra.mxu0 %v344
  %1130 = vmatprep.subr.mxu0 0.0
  %1131 = vmatpush1.msra.mxu0 %v343
  %1132 = vmatprep.subr.mxu0 0.0
  %1133 = vmatpush1.msra.mxu0 %v342
  %1134 = vmatprep.subr.mxu0 0.0
  %1135 = vmatpush1.msra.mxu0 %v341
  %1136 = vmatprep.subr.mxu0 0.0
  %1137 = vmatpush1.msra.mxu0 %v340
  %1138 = vmatprep.subr.mxu0 0.0
  %1139 = vmatpush1.msra.mxu0 %v339
  %1140 = vmatprep.subr.mxu0 0.0
  %1141 = vmatpush1.msra.mxu0 %v338
  %1142 = vmatprep.subr.mxu0 0.0
  %1143 = vmatpush1.msra.mxu0 %v337
  %1144 = vmatprep.subr.mxu0 0.0
  %1145 = vmatpush1.msra.mxu0 %v336
  %1146 = vmatprep.subr.mxu0 0.0
  %1147 = vmatpush1.msra.mxu0 %v335
  %1148 = vmatprep.subr.mxu0 0.0
  %1149 = vmatpush2.msra.mxu0 %v366
  %1150 = vmatprep.subr.mxu0 0.0
  %1151 = vmatpush2.msra.mxu0 %v365
  %1152 = vmatprep.subr.mxu0 0.0
  %1153 = vmatpush2.msra.mxu0 %v364
  %1154 = vmatprep.subr.mxu0 0.0
  %1155 = vmatpush2.msra.mxu0 %v363
  %1156 = vmatprep.subr.mxu0 0.0
  %1157 = vmatpush2.msra.mxu0 %v362
  %1158 = vmatprep.subr.mxu0 0.0
  %1159 = vmatpush2.msra.mxu0 %v361
  %1160 = vmatprep.subr.mxu0 0.0
  %1161 = vmatpush2.msra.mxu0 %v360
  %1162 = vmatprep.subr.mxu0 0.0
  %1163 = vmatpush2.msra.mxu0 %v359
  %1164 = vmatprep.subr.mxu0 0.0
  %1165 = vmatpush2.msra.mxu0 %v358
  %1166 = vmatprep.subr.mxu0 0.0
  %1167 = vmatpush2.msra.mxu0 %v357
  %1168 = vmatprep.subr.mxu0 0.0
  %1169 = vmatpush2.msra.mxu0 %v356
  %1170 = vmatprep.subr.mxu0 0.0
  %1171 = vmatpush2.msra.mxu0 %v355
  %1172 = vmatprep.subr.mxu0 0.0
  %1173 = vmatpush2.msra.mxu0 %v354
  %1174 = vmatprep.subr.mxu0 0.0
  %1175 = vmatpush2.msra.mxu0 %v353
  %1176 = vmatprep.subr.mxu0 0.0
  %1177 = vmatpush2.msra.mxu0 %v352
  %1178 = vmatprep.subr.mxu0 0.0
  %1179 = vmatpush2.msra.mxu0 %v351
  %1180 = vmatprep.mubr.f32.mxu0 %v886
  %1181 = vmatmul.mubr.f32.gmra.mxu0 %v885
  %v1182 = vpop.f32.mrf.mxu0
  %v1183 = vadd.f32 %v1108, %v1182
  %v1184 = vpop.f32.mrf.mxu0
  %1185 = vmatprep.mubr.f32.mxu0 %v890
  %1186 = vmatmul.mubr.f32.gmra.mxu0 %v889
  %v1187 = vpop.f32.mrf.mxu0
  %v1188 = vadd.f32 %v1113, %v1187
  %v1189 = vpop.f32.mrf.mxu0
  %1190 = vdwg.mxu0
  %vm1191 = vcmask 130048
  %v1193 = vsel %vm1191, %v223, 0
  %v1196 = vsel %vm1191, %v224, 0
  %v1199 = vsel %vm1191, %v225, 0
  %v1202 = vsel %vm1191, %v226, 0
  %v1205 = vsel %vm1191, %v227, 0
  %v1208 = vsel %vm1191, %v228, 0
  %v1211 = vsel %vm1191, %v229, 0
  %v1214 = vsel %vm1191, %v230, 0
  %1216 = vmatprep.subr.mxu0 0.0
  %1217 = vmatpush1.msra.mxu0 0.0
  %1218 = vmatprep.subr.mxu0 0.0
  %1219 = vmatpush1.msra.mxu0 0.0
  %1220 = vmatprep.subr.mxu0 0.0
  %1221 = vmatpush1.msra.mxu0 0.0
  %1222 = vmatprep.subr.mxu0 0.0
  %1223 = vmatpush1.msra.mxu0 0.0
  %1224 = vmatprep.subr.mxu0 0.0
  %1225 = vmatpush1.msra.mxu0 0.0
  %1226 = vmatprep.subr.mxu0 0.0
  %1227 = vmatpush1.msra.mxu0 0.0
  %1228 = vmatprep.subr.mxu0 0.0
  %1229 = vmatpush1.msra.mxu0 0.0
  %1230 = vmatprep.subr.mxu0 0.0
  %1231 = vmatpush1.msra.mxu0 0.0
  %1232 = vmatprep.subr.mxu0 0.0
  %1233 = vmatpush1.msra.mxu0 0.0
  %1234 = vmatprep.subr.mxu0 0.0
  %1235 = vmatpush1.msra.mxu0 0.0
  %1236 = vmatprep.subr.mxu0 0.0
  %1237 = vmatpush1.msra.mxu0 0.0
  %1238 = vmatprep.subr.mxu0 0.0
  %1239 = vmatpush1.msra.mxu0 0.0
  %1240 = vmatprep.subr.mxu0 0.0
  %1241 = vmatpush1.msra.mxu0 0.0
  %1242 = vmatprep.subr.mxu0 0.0
  %1243 = vmatpush1.msra.mxu0 0.0
  %1244 = vmatprep.subr.mxu0 0.0
  %1245 = vmatpush1.msra.mxu0 %v1188
  %1246 = vmatprep.subr.mxu0 0.0
  %1247 = vmatpush1.msra.mxu0 %v1183
  %1248 = vmatprep.subr.mxu0 0.0
  %1249 = vmatpush2.msra.mxu0 0.0
  %1250 = vmatprep.subr.mxu0 0.0
  %1251 = vmatpush2.msra.mxu0 0.0
  %1252 = vmatprep.subr.mxu0 0.0
  %1253 = vmatpush2.msra.mxu0 0.0
  %1254 = vmatprep.subr.mxu0 0.0
  %1255 = vmatpush2.msra.mxu0 0.0
  %1256 = vmatprep.subr.mxu0 0.0
  %1257 = vmatpush2.msra.mxu0 0.0
  %1258 = vmatprep.subr.mxu0 0.0
  %1259 = vmatpush2.msra.mxu0 0.0
  %1260 = vmatprep.subr.mxu0 0.0
  %1261 = vmatpush2.msra.mxu0 0.0
  %1262 = vmatprep.subr.mxu0 0.0
  %1263 = vmatpush2.msra.mxu0 0.0
  %1264 = vmatprep.subr.mxu0 0.0
  %1265 = vmatpush2.msra.mxu0 0.0
  %1266 = vmatprep.subr.mxu0 0.0
  %1267 = vmatpush2.msra.mxu0 0.0
  %1268 = vmatprep.subr.mxu0 0.0
  %1269 = vmatpush2.msra.mxu0 0.0
  %1270 = vmatprep.subr.mxu0 0.0
  %1271 = vmatpush2.msra.mxu0 0.0
  %1272 = vmatprep.subr.mxu0 0.0
  %1273 = vmatpush2.msra.mxu0 0.0
  %1274 = vmatprep.subr.mxu0 0.0
  %1275 = vmatpush2.msra.mxu0 0.0
  %1276 = vmatprep.subr.mxu0 0.0
  %1277 = vmatpush2.msra.mxu0 0.0
  %1278 = vmatprep.subr.mxu0 0.0
  %1279 = vmatpush2.msra.mxu0 0.0
  %1280 = vmatprep.mubr.f32.mxu0 0.0
  %1281 = vmatmul.mubr.f32.gmra.mxu0 %v1193
  %v1282 = vpop.f32.mrf.mxu0
  %v1283 = vadd.f32 0.0, %v1282
  %v1284 = vpop.f32.mrf.mxu0
  %1285 = vmatprep.mubr.f32.mxu0 0.0
  %1286 = vmatmul.mubr.f32.gmra.mxu0 %v1196
  %v1287 = vpop.f32.mrf.mxu0
  %v1288 = vadd.f32 0.0, %v1287
  %v1289 = vpop.f32.mrf.mxu0
  %1290 = vmatprep.mubr.f32.mxu0 0.0
  %1291 = vmatmul.mubr.f32.gmra.mxu0 %v1199
  %v1292 = vpop.f32.mrf.mxu0
  %v1293 = vadd.f32 0.0, %v1292
  %v1294 = vpop.f32.mrf.mxu0
  %1295 = vmatprep.mubr.f32.mxu0 0.0
  %1296 = vmatmul.mubr.f32.gmra.mxu0 %v1202
  %v1297 = vpop.f32.mrf.mxu0
  %v1298 = vadd.f32 0.0, %v1297
  %v1299 = vpop.f32.mrf.mxu0
  %1300 = vmatprep.mubr.f32.mxu0 0.0
  %1301 = vmatmul.mubr.f32.gmra.mxu0 %v1205
  %v1302 = vpop.f32.mrf.mxu0
  %v1303 = vadd.f32 0.0, %v1302
  %v1304 = vpop.f32.mrf.mxu0
  %1305 = vmatprep.mubr.f32.mxu0 0.0
  %1306 = vmatmul.mubr.f32.gmra.mxu0 %v1208
  %v1307 = vpop.f32.mrf.mxu0
  %v1308 = vadd.f32 0.0, %v1307
  %v1309 = vpop.f32.mrf.mxu0
  %1310 = vmatprep.mubr.f32.mxu0 0.0
  %1311 = vmatmul.mubr.f32.gmra.mxu0 %v1211
  %v1312 = vpop.f32.mrf.mxu0
  %v1313 = vadd.f32 0.0, %v1312
  %v1314 = vpop.f32.mrf.mxu0
  %1315 = vmatprep.mubr.f32.mxu0 0.0
  %1316 = vmatmul.mubr.f32.gmra.mxu0 %v1214
  %v1317 = vpop.f32.mrf.mxu0
  %v1318 = vadd.f32 0.0, %v1317
  %v1319 = vpop.f32.mrf.mxu0
  %1320 = vdwg.mxu0
  %v1322 = vsel %vm1191, %v215, 0
  %v1325 = vsel %vm1191, %v216, 0
  %v1328 = vsel %vm1191, %v217, 0
  %v1331 = vsel %vm1191, %v218, 0
  %v1334 = vsel %vm1191, %v219, 0
  %v1337 = vsel %vm1191, %v220, 0
  %v1340 = vsel %vm1191, %v221, 0
  %v1343 = vsel %vm1191, %v222, 0
  %1345 = vmatprep.subr.mxu0 0.0
  %1346 = vmatpush1.msra.mxu0 0.0
  %1347 = vmatprep.subr.mxu0 0.0
  %1348 = vmatpush1.msra.mxu0 0.0
  %1349 = vmatprep.subr.mxu0 0.0
  %1350 = vmatpush1.msra.mxu0 0.0
  %1351 = vmatprep.subr.mxu0 0.0
  %1352 = vmatpush1.msra.mxu0 0.0
  %1353 = vmatprep.subr.mxu0 0.0
  %1354 = vmatpush1.msra.mxu0 0.0
  %1355 = vmatprep.subr.mxu0 0.0
  %1356 = vmatpush1.msra.mxu0 0.0
  %1357 = vmatprep.subr.mxu0 0.0
  %1358 = vmatpush1.msra.mxu0 0.0
  %1359 = vmatprep.subr.mxu0 0.0
  %1360 = vmatpush1.msra.mxu0 0.0
  %1361 = vmatprep.subr.mxu0 0.0
  %1362 = vmatpush1.msra.mxu0 0.0
  %1363 = vmatprep.subr.mxu0 0.0
  %1364 = vmatpush1.msra.mxu0 0.0
  %1365 = vmatprep.subr.mxu0 0.0
  %1366 = vmatpush1.msra.mxu0 0.0
  %1367 = vmatprep.subr.mxu0 0.0
  %1368 = vmatpush1.msra.mxu0 0.0
  %1369 = vmatprep.subr.mxu0 0.0
  %1370 = vmatpush1.msra.mxu0 0.0
  %1371 = vmatprep.subr.mxu0 0.0
  %1372 = vmatpush1.msra.mxu0 0.0
  %1373 = vmatprep.subr.mxu0 0.0
  %1374 = vmatpush1.msra.mxu0 %v1038
  %1375 = vmatprep.subr.mxu0 0.0
  %1376 = vmatpush1.msra.mxu0 %v1033
  %1377 = vmatprep.subr.mxu0 0.0
  %1378 = vmatpush2.msra.mxu0 0.0
  %1379 = vmatprep.subr.mxu0 0.0
  %1380 = vmatpush2.msra.mxu0 0.0
  %1381 = vmatprep.subr.mxu0 0.0
  %1382 = vmatpush2.msra.mxu0 0.0
  %1383 = vmatprep.subr.mxu0 0.0
  %1384 = vmatpush2.msra.mxu0 0.0
  %1385 = vmatprep.subr.mxu0 0.0
  %1386 = vmatpush2.msra.mxu0 0.0
  %1387 = vmatprep.subr.mxu0 0.0
  %1388 = vmatpush2.msra.mxu0 0.0
  %1389 = vmatprep.subr.mxu0 0.0
  %1390 = vmatpush2.msra.mxu0 0.0
  %1391 = vmatprep.subr.mxu0 0.0
  %1392 = vmatpush2.msra.mxu0 0.0
  %1393 = vmatprep.subr.mxu0 0.0
  %1394 = vmatpush2.msra.mxu0 0.0
  %1395 = vmatprep.subr.mxu0 0.0
  %1396 = vmatpush2.msra.mxu0 0.0
  %1397 = vmatprep.subr.mxu0 0.0
  %1398 = vmatpush2.msra.mxu0 0.0
  %1399 = vmatprep.subr.mxu0 0.0
  %1400 = vmatpush2.msra.mxu0 0.0
  %1401 = vmatprep.subr.mxu0 0.0
  %1402 = vmatpush2.msra.mxu0 0.0
  %1403 = vmatprep.subr.mxu0 0.0
  %1404 = vmatpush2.msra.mxu0 0.0
  %1405 = vmatprep.subr.mxu0 0.0
  %1406 = vmatpush2.msra.mxu0 0.0
  %1407 = vmatprep.subr.mxu0 0.0
  %1408 = vmatpush2.msra.mxu0 0.0
  %1409 = vmatprep.mubr.f32.mxu0 0.0
  %1410 = vmatmul.mubr.f32.gmra.mxu0 %v1322
  %v1411 = vpop.f32.mrf.mxu0
  %v1412 = vadd.f32 %v1283, %v1411
  %v1413 = vpop.f32.mrf.mxu0
  %1414 = vmatprep.mubr.f32.mxu0 0.0
  %1415 = vmatmul.mubr.f32.gmra.mxu0 %v1325
  %v1416 = vpop.f32.mrf.mxu0
  %v1417 = vadd.f32 %v1288, %v1416
  %v1418 = vpop.f32.mrf.mxu0
  %1419 = vmatprep.mubr.f32.mxu0 0.0
  %1420 = vmatmul.mubr.f32.gmra.mxu0 %v1328
  %v1421 = vpop.f32.mrf.mxu0
  %v1422 = vadd.f32 %v1293, %v1421
  %v1423 = vpop.f32.mrf.mxu0
  %1424 = vmatprep.mubr.f32.mxu0 0.0
  %1425 = vmatmul.mubr.f32.gmra.mxu0 %v1331
  %v1426 = vpop.f32.mrf.mxu0
  %v1427 = vadd.f32 %v1298, %v1426
  %v1428 = vpop.f32.mrf.mxu0
  %1429 = vmatprep.mubr.f32.mxu0 0.0
  %1430 = vmatmul.mubr.f32.gmra.mxu0 %v1334
  %v1431 = vpop.f32.mrf.mxu0
  %v1432 = vadd.f32 %v1303, %v1431
  %v1433 = vpop.f32.mrf.mxu0
  %1434 = vmatprep.mubr.f32.mxu0 0.0
  %1435 = vmatmul.mubr.f32.gmra.mxu0 %v1337
  %v1436 = vpop.f32.mrf.mxu0
  %v1437 = vadd.f32 %v1308, %v1436
  %v1438 = vpop.f32.mrf.mxu0
  %1439 = vmatprep.mubr.f32.mxu0 0.0
  %1440 = vmatmul.mubr.f32.gmra.mxu0 %v1340
  %v1441 = vpop.f32.mrf.mxu0
  %v1442 = vadd.f32 %v1313, %v1441
  %v1443 = vpop.f32.mrf.mxu0
  %1444 = vmatprep.mubr.f32.mxu0 0.0
  %1445 = vmatmul.mubr.f32.gmra.mxu0 %v1343
  %v1446 = vpop.f32.mrf.mxu0
  %v1447 = vadd.f32 %v1318, %v1446
  %v1448 = vpop.f32.mrf.mxu0
  %1449 = vdwg.mxu0
  %v1450 = vld [vmem:[%s12] sm:$0xff]
  %v1451 = vld [vmem:[%s12 + $0x8] sm:$0xff]
  %v1452 = vld [vmem:[%s12 + $0x10] sm:$0xff]
  %v1453 = vld [vmem:[%s12 + $0x18] sm:$0xff]
  %v1454 = vld [vmem:[%s13] sm:$0x1]
  %v1456 = vlaneseq
  %v1457 = vshrl.u32 %v1456, 7
  %v1458 = vsub.s32 0, %v1457
  %v1459 = vrot.slane %v1454, %v1458
  %v1462 = vsel %vm562, %v173, 0
  %v1465 = vsel %vm562, %v178, 0
  %v1468 = vsel %vm562, %v183, 0
  %v1471 = vsel %vm562, %v188, 0
  %v1474 = vsel %vm562, %v193, 0
  %v1477 = vsel %vm562, %v198, 0
  %v1480 = vsel %vm562, %v203, 0
  %v1483 = vsel %vm562, %v208, 0
  %1485 = vmatprep.subr.mxu0 0.0
  %1486 = vmatpush1.msra.mxu0 0.0
  %1487 = vmatprep.subr.mxu0 0.0
  %1488 = vmatpush1.msra.mxu0 0.0
  %1489 = vmatprep.subr.mxu0 0.0
  %1490 = vmatpush1.msra.mxu0 0.0
  %1491 = vmatprep.subr.mxu0 0.0
  %1492 = vmatpush1.msra.mxu0 0.0
  %1493 = vmatprep.subr.mxu0 0.0
  %1494 = vmatpush1.msra.mxu0 0.0
  %1495 = vmatprep.subr.mxu0 0.0
  %1496 = vmatpush1.msra.mxu0 0.0
  %1497 = vmatprep.subr.mxu0 0.0
  %1498 = vmatpush1.msra.mxu0 0.0
  %1499 = vmatprep.subr.mxu0 0.0
  %1500 = vmatpush1.msra.mxu0 0.0
  %1501 = vmatprep.subr.mxu0 0.0
  %1502 = vmatpush1.msra.mxu0 0.0
  %1503 = vmatprep.subr.mxu0 0.0
  %1504 = vmatpush1.msra.mxu0 0.0
  %1505 = vmatprep.subr.mxu0 0.0
  %1506 = vmatpush1.msra.mxu0 0.0
  %1507 = vmatprep.subr.mxu0 0.0
  %1508 = vmatpush1.msra.mxu0 0.0
  %1509 = vmatprep.subr.mxu0 0.0
  %1510 = vmatpush1.msra.mxu0 %v1453
  %1511 = vmatprep.subr.mxu0 0.0
  %1512 = vmatpush1.msra.mxu0 %v1452
  %1513 = vmatprep.subr.mxu0 0.0
  %1514 = vmatpush1.msra.mxu0 %v1451
  %1515 = vmatprep.subr.mxu0 0.0
  %1516 = vmatpush1.msra.mxu0 %v1450
  %1517 = vmatprep.subr.mxu0 0.0
  %1518 = vmatpush2.msra.mxu0 0.0
  %1519 = vmatprep.subr.mxu0 0.0
  %1520 = vmatpush2.msra.mxu0 0.0
  %1521 = vmatprep.subr.mxu0 0.0
  %1522 = vmatpush2.msra.mxu0 0.0
  %1523 = vmatprep.subr.mxu0 0.0
  %1524 = vmatpush2.msra.mxu0 0.0
  %1525 = vmatprep.subr.mxu0 0.0
  %1526 = vmatpush2.msra.mxu0 0.0
  %1527 = vmatprep.subr.mxu0 0.0
  %1528 = vmatpush2.msra.mxu0 0.0
  %1529 = vmatprep.subr.mxu0 0.0
  %1530 = vmatpush2.msra.mxu0 0.0
  %1531 = vmatprep.subr.mxu0 0.0
  %1532 = vmatpush2.msra.mxu0 0.0
  %1533 = vmatprep.subr.mxu0 0.0
  %1534 = vmatpush2.msra.mxu0 0.0
  %1535 = vmatprep.subr.mxu0 0.0
  %1536 = vmatpush2.msra.mxu0 0.0
  %1537 = vmatprep.subr.mxu0 0.0
  %1538 = vmatpush2.msra.mxu0 0.0
  %1539 = vmatprep.subr.mxu0 0.0
  %1540 = vmatpush2.msra.mxu0 0.0
  %1541 = vmatprep.subr.mxu0 0.0
  %1542 = vmatpush2.msra.mxu0 0.0
  %1543 = vmatprep.subr.mxu0 0.0
  %1544 = vmatpush2.msra.mxu0 0.0
  %1545 = vmatprep.subr.mxu0 0.0
  %1546 = vmatpush2.msra.mxu0 0.0
  %1547 = vmatprep.subr.mxu0 0.0
  %1548 = vmatpush2.msra.mxu0 0.0
  %1549 = vmatprep.mubr.f32.mxu0 0.0
  %1550 = vmatmul.mubr.f32.gmra.mxu0 %v1462
  %v1551 = vpop.f32.mrf.mxu0
  %v1552 = vadd.f32 %v1459, %v1551
  %v1553 = vpop.f32.mrf.mxu0
  %1554 = vmatprep.mubr.f32.mxu0 0.0
  %1555 = vmatmul.mubr.f32.gmra.mxu0 %v1465
  %v1556 = vpop.f32.mrf.mxu0
  %v1557 = vadd.f32 %v1459, %v1556
  %v1558 = vpop.f32.mrf.mxu0
  %1559 = vmatprep.mubr.f32.mxu0 0.0
  %1560 = vmatmul.mubr.f32.gmra.mxu0 %v1468
  %v1561 = vpop.f32.mrf.mxu0
  %v1562 = vadd.f32 %v1459, %v1561
  %v1563 = vpop.f32.mrf.mxu0
  %1564 = vmatprep.mubr.f32.mxu0 0.0
  %1565 = vmatmul.mubr.f32.gmra.mxu0 %v1471
  %v1566 = vpop.f32.mrf.mxu0
  %v1567 = vadd.f32 %v1459, %v1566
  %v1568 = vpop.f32.mrf.mxu0
  %1569 = vmatprep.mubr.f32.mxu0 0.0
  %1570 = vmatmul.mubr.f32.gmra.mxu0 %v1474
  %v1571 = vpop.f32.mrf.mxu0
  %v1572 = vadd.f32 %v1459, %v1571
  %v1573 = vpop.f32.mrf.mxu0
  %1574 = vmatprep.mubr.f32.mxu0 0.0
  %1575 = vmatmul.mubr.f32.gmra.mxu0 %v1477
  %v1576 = vpop.f32.mrf.mxu0
  %v1577 = vadd.f32 %v1459, %v1576
  %v1578 = vpop.f32.mrf.mxu0
  %1579 = vmatprep.mubr.f32.mxu0 0.0
  %1580 = vmatmul.mubr.f32.gmra.mxu0 %v1480
  %v1581 = vpop.f32.mrf.mxu0
  %v1582 = vadd.f32 %v1459, %v1581
  %v1583 = vpop.f32.mrf.mxu0
  %1584 = vmatprep.mubr.f32.mxu0 0.0
  %1585 = vmatmul.mubr.f32.gmra.mxu0 %v1483
  %v1586 = vpop.f32.mrf.mxu0
  %v1587 = vadd.f32 %v1459, %v1586
  %v1588 = vpop.f32.mrf.mxu0
  %1589 = vdwg.mxu0
  %v1590 = vadd.f32 %v1412, %v1552
  %v1591 = vadd.f32 %v1417, %v1557
  %v1592 = vadd.f32 %v1422, %v1562
  %v1593 = vadd.f32 %v1427, %v1567
  %v1594 = vadd.f32 %v1432, %v1572
  %v1595 = vadd.f32 %v1437, %v1577
  %v1596 = vadd.f32 %v1442, %v1582
  %v1597 = vadd.f32 %v1447, %v1587
  %v1598 = vmax.f32 %v1590, 0.0
  %v1599 = vmax.f32 %v1591, 0.0
  %v1600 = vmax.f32 %v1592, 0.0
  %v1601 = vmax.f32 %v1593, 0.0
  %v1602 = vmax.f32 %v1594, 0.0
  %v1603 = vmax.f32 %v1595, 0.0
  %v1604 = vmax.f32 %v1596, 0.0
  %v1605 = vmax.f32 %v1597, 0.0
  %1606 = vmatprep.subr.mxu0 0.0
  %1607 = vmatpush1.msra.mxu0 0.0
  %1608 = vmatprep.subr.mxu0 0.0
  %1609 = vmatpush1.msra.mxu0 0.0
  %1610 = vmatprep.subr.mxu0 0.0
  %1611 = vmatpush1.msra.mxu0 0.0
  %1612 = vmatprep.subr.mxu0 0.0
  %1613 = vmatpush1.msra.mxu0 0.0
  %1614 = vmatprep.subr.mxu0 0.0
  %1615 = vmatpush1.msra.mxu0 0.0
  %1616 = vmatprep.subr.mxu0 0.0
  %1617 = vmatpush1.msra.mxu0 0.0
  %1618 = vmatprep.subr.mxu0 0.0
  %1619 = vmatpush1.msra.mxu0 0.0
  %1620 = vmatprep.subr.mxu0 0.0
  %1621 = vmatpush1.msra.mxu0 0.0
  %1622 = vmatprep.subr.mxu0 0.0
  %1623 = vmatpush1.msra.mxu0 %v1605
  %1624 = vmatprep.subr.mxu0 0.0
  %1625 = vmatpush1.msra.mxu0 %v1604
  %1626 = vmatprep.subr.mxu0 0.0
  %1627 = vmatpush1.msra.mxu0 %v1603
  %1628 = vmatprep.subr.mxu0 0.0
  %1629 = vmatpush1.msra.mxu0 %v1602
  %1630 = vmatprep.subr.mxu0 0.0
  %1631 = vmatpush1.msra.mxu0 %v1601
  %1632 = vmatprep.subr.mxu0 0.0
  %1633 = vmatpush1.msra.mxu0 %v1600
  %1634 = vmatprep.subr.mxu0 0.0
  %1635 = vmatpush1.msra.mxu0 %v1599
  %1636 = vmatprep.subr.mxu0 0.0
  %1637 = vmatpush1.msra.mxu0 %v1598
  %1638 = vmatprep.subr.mxu0 0.0
  %1639 = vmatpush2.msra.mxu0 0.0
  %1640 = vmatprep.subr.mxu0 0.0
  %1641 = vmatpush2.msra.mxu0 0.0
  %1642 = vmatprep.subr.mxu0 0.0
  %1643 = vmatpush2.msra.mxu0 0.0
  %1644 = vmatprep.subr.mxu0 0.0
  %1645 = vmatpush2.msra.mxu0 0.0
  %1646 = vmatprep.subr.mxu0 0.0
  %1647 = vmatpush2.msra.mxu0 0.0
  %1648 = vmatprep.subr.mxu0 0.0
  %1649 = vmatpush2.msra.mxu0 0.0
  %1650 = vmatprep.subr.mxu0 0.0
  %1651 = vmatpush2.msra.mxu0 0.0
  %1652 = vmatprep.subr.mxu0 0.0
  %1653 = vmatpush2.msra.mxu0 0.0
  %1654 = vmatprep.subr.mxu0 0.0
  %1655 = vmatpush2.msra.mxu0 0.0
  %1656 = vmatprep.subr.mxu0 0.0
  %1657 = vmatpush2.msra.mxu0 0.0
  %1658 = vmatprep.subr.mxu0 0.0
  %1659 = vmatpush2.msra.mxu0 0.0
  %1660 = vmatprep.subr.mxu0 0.0
  %1661 = vmatpush2.msra.mxu0 0.0
  %1662 = vmatprep.subr.mxu0 0.0
  %1663 = vmatpush2.msra.mxu0 0.0
  %1664 = vmatprep.subr.mxu0 0.0
  %1665 = vmatpush2.msra.mxu0 0.0
  %1666 = vmatprep.subr.mxu0 0.0
  %1667 = vmatpush2.msra.mxu0 0.0
  %1668 = vmatprep.subr.mxu0 0.0
  %1669 = vmatpush2.msra.mxu0 0.0
  %1670 = vmatprep.mubr.f32.mxu0 0.0
  %1671 = vmatmul.mubr.f32.gmra.mxu0 %v369
  %v1672 = vpop.f32.mrf.mxu0
  %v1673 = vadd.f32 0.0, %v1672
  %v1674 = vpop.f32.mrf.mxu0
  %1675 = vmatprep.mubr.f32.mxu0 0.0
  %1676 = vmatmul.mubr.f32.gmra.mxu0 %v372
  %v1677 = vpop.f32.mrf.mxu0
  %v1678 = vadd.f32 0.0, %v1677
  %v1679 = vpop.f32.mrf.mxu0
  %1680 = vdwg.mxu0
  %1681 = vmatprep.subr.mxu0 0.0
  %1682 = vmatpush1.msra.mxu0 0.0
  %1683 = vmatprep.subr.mxu0 0.0
  %1684 = vmatpush1.msra.mxu0 0.0
  %1685 = vmatprep.subr.mxu0 0.0
  %1686 = vmatpush1.msra.mxu0 0.0
  %1687 = vmatprep.subr.mxu0 0.0
  %1688 = vmatpush1.msra.mxu0 0.0
  %1689 = vmatprep.subr.mxu0 0.0
  %1690 = vmatpush1.msra.mxu0 0.0
  %1691 = vmatprep.subr.mxu0 0.0
  %1692 = vmatpush1.msra.mxu0 0.0
  %1693 = vmatprep.subr.mxu0 0.0
  %1694 = vmatpush1.msra.mxu0 0.0
  %1695 = vmatprep.subr.mxu0 0.0
  %1696 = vmatpush1.msra.mxu0 0.0
  %1697 = vmatprep.subr.mxu0 0.0
  %1698 = vmatpush1.msra.mxu0 %v1605
  %1699 = vmatprep.subr.mxu0 0.0
  %1700 = vmatpush1.msra.mxu0 %v1604
  %1701 = vmatprep.subr.mxu0 0.0
  %1702 = vmatpush1.msra.mxu0 %v1603
  %1703 = vmatprep.subr.mxu0 0.0
  %1704 = vmatpush1.msra.mxu0 %v1602
  %1705 = vmatprep.subr.mxu0 0.0
  %1706 = vmatpush1.msra.mxu0 %v1601
  %1707 = vmatprep.subr.mxu0 0.0
  %1708 = vmatpush1.msra.mxu0 %v1600
  %1709 = vmatprep.subr.mxu0 0.0
  %1710 = vmatpush1.msra.mxu0 %v1599
  %1711 = vmatprep.subr.mxu0 0.0
  %1712 = vmatpush1.msra.mxu0 %v1598
  %1713 = vmatprep.subr.mxu0 0.0
  %1714 = vmatpush2.msra.mxu0 0.0
  %1715 = vmatprep.subr.mxu0 0.0
  %1716 = vmatpush2.msra.mxu0 0.0
  %1717 = vmatprep.subr.mxu0 0.0
  %1718 = vmatpush2.msra.mxu0 0.0
  %1719 = vmatprep.subr.mxu0 0.0
  %1720 = vmatpush2.msra.mxu0 0.0
  %1721 = vmatprep.subr.mxu0 0.0
  %1722 = vmatpush2.msra.mxu0 0.0
  %1723 = vmatprep.subr.mxu0 0.0
  %1724 = vmatpush2.msra.mxu0 0.0
  %1725 = vmatprep.subr.mxu0 0.0
  %1726 = vmatpush2.msra.mxu0 0.0
  %1727 = vmatprep.subr.mxu0 0.0
  %1728 = vmatpush2.msra.mxu0 0.0
  %1729 = vmatprep.subr.mxu0 0.0
  %1730 = vmatpush2.msra.mxu0 0.0
  %1731 = vmatprep.subr.mxu0 0.0
  %1732 = vmatpush2.msra.mxu0 0.0
  %1733 = vmatprep.subr.mxu0 0.0
  %1734 = vmatpush2.msra.mxu0 0.0
  %1735 = vmatprep.subr.mxu0 0.0
  %1736 = vmatpush2.msra.mxu0 0.0
  %1737 = vmatprep.subr.mxu0 0.0
  %1738 = vmatpush2.msra.mxu0 0.0
  %1739 = vmatprep.subr.mxu0 0.0
  %1740 = vmatpush2.msra.mxu0 0.0
  %1741 = vmatprep.subr.mxu0 0.0
  %1742 = vmatpush2.msra.mxu0 0.0
  %1743 = vmatprep.subr.mxu0 0.0
  %1744 = vmatpush2.msra.mxu0 0.0
  %1745 = vmatprep.mubr.f32.mxu0 0.0
  %1746 = vmatmul.mubr.f32.gmra.mxu0 %v450
  %v1747 = vpop.f32.mrf.mxu0
  %v1748 = vadd.f32 0.0, %v1747
  %v1749 = vpop.f32.mrf.mxu0
  %1750 = vmatprep.mubr.f32.mxu0 0.0
  %1751 = vmatmul.mubr.f32.gmra.mxu0 %v453
  %v1752 = vpop.f32.mrf.mxu0
  %v1753 = vadd.f32 0.0, %v1752
  %v1754 = vpop.f32.mrf.mxu0
  %1755 = vdwg.mxu0
  %s1756 = scalar_lea.vmem %s7, 128
  %v1757 = vld [vmem:[%s1756] sm:$0xff]
  %v1758 = vld [vmem:[%s1756 + $0x8] sm:$0xff]
  %v1759 = vld [vmem:[%s1756 + $0x10] sm:$0xff]
  %v1760 = vld [vmem:[%s1756 + $0x18] sm:$0xff]
  %v1761 = vld [vmem:[%s1756 + $0x20] sm:$0xff]
  %v1762 = vld [vmem:[%s1756 + $0x28] sm:$0xff]
  %v1763 = vld [vmem:[%s1756 + $0x30] sm:$0xff]
  %v1764 = vld [vmem:[%s1756 + $0x38] sm:$0xff]
  %v1765 = vld [vmem:[%s1756 + $0x40] sm:$0xff]
  %v1766 = vld [vmem:[%s1756 + $0x48] sm:$0xff]
  %v1767 = vld [vmem:[%s1756 + $0x50] sm:$0xff]
  %v1768 = vld [vmem:[%s1756 + $0x58] sm:$0xff]
  %v1769 = vld [vmem:[%s1756 + $0x60] sm:$0xff]
  %v1770 = vld [vmem:[%s1756 + $0x68] sm:$0xff]
  %v1771 = vld [vmem:[%s1756 + $0x70] sm:$0xff]
  %v1772 = vld [vmem:[%s1756 + $0x78] sm:$0xff]
  %s1773 = scalar_lea.vmem %s8, 128
  %v1774 = vld [vmem:[%s1773] sm:$0xff]
  %v1775 = vld [vmem:[%s1773 + $0x8] sm:$0xff]
  %v1776 = vld [vmem:[%s1773 + $0x10] sm:$0xff]
  %v1777 = vld [vmem:[%s1773 + $0x18] sm:$0xff]
  %v1778 = vld [vmem:[%s1773 + $0x20] sm:$0xff]
  %v1779 = vld [vmem:[%s1773 + $0x28] sm:$0xff]
  %v1780 = vld [vmem:[%s1773 + $0x30] sm:$0xff]
  %v1781 = vld [vmem:[%s1773 + $0x38] sm:$0xff]
  %v1782 = vld [vmem:[%s1773 + $0x40] sm:$0xff]
  %v1783 = vld [vmem:[%s1773 + $0x48] sm:$0xff]
  %v1784 = vld [vmem:[%s1773 + $0x50] sm:$0xff]
  %v1785 = vld [vmem:[%s1773 + $0x58] sm:$0xff]
  %v1786 = vld [vmem:[%s1773 + $0x60] sm:$0xff]
  %v1787 = vld [vmem:[%s1773 + $0x68] sm:$0xff]
  %v1788 = vld [vmem:[%s1773 + $0x70] sm:$0xff]
  %v1789 = vld [vmem:[%s1773 + $0x78] sm:$0xff]
  %v1791 = vsel %vm562, %v1748, 0
  %v1794 = vsel %vm562, %v1753, 0
  %1796 = vmatprep.subr.mxu0 0.0
  %1797 = vmatpush1.msra.mxu0 0.0
  %1798 = vmatprep.subr.mxu0 0.0
  %1799 = vmatpush1.msra.mxu0 0.0
  %1800 = vmatprep.subr.mxu0 0.0
  %1801 = vmatpush1.msra.mxu0 0.0
  %1802 = vmatprep.subr.mxu0 0.0
  %1803 = vmatpush1.msra.mxu0 0.0
  %1804 = vmatprep.subr.mxu0 0.0
  %1805 = vmatpush1.msra.mxu0 0.0
  %1806 = vmatprep.subr.mxu0 0.0
  %1807 = vmatpush1.msra.mxu0 0.0
  %1808 = vmatprep.subr.mxu0 0.0
  %1809 = vmatpush1.msra.mxu0 0.0
  %1810 = vmatprep.subr.mxu0 0.0
  %1811 = vmatpush1.msra.mxu0 0.0
  %1812 = vmatprep.subr.mxu0 0.0
  %1813 = vmatpush1.msra.mxu0 0.0
  %1814 = vmatprep.subr.mxu0 0.0
  %1815 = vmatpush1.msra.mxu0 0.0
  %1816 = vmatprep.subr.mxu0 0.0
  %1817 = vmatpush1.msra.mxu0 0.0
  %1818 = vmatprep.subr.mxu0 0.0
  %1819 = vmatpush1.msra.mxu0 0.0
  %1820 = vmatprep.subr.mxu0 %v1787
  %1821 = vmatpush1.msra.mxu0 %v1786
  %1822 = vmatprep.subr.mxu0 %v1783
  %1823 = vmatpush1.msra.mxu0 %v1782
  %1824 = vmatprep.subr.mxu0 %v1779
  %1825 = vmatpush1.msra.mxu0 %v1778
  %1826 = vmatprep.subr.mxu0 %v1775
  %1827 = vmatpush1.msra.mxu0 %v1774
  %1828 = vmatprep.subr.mxu0 0.0
  %1829 = vmatpush2.msra.mxu0 0.0
  %1830 = vmatprep.subr.mxu0 0.0
  %1831 = vmatpush2.msra.mxu0 0.0
  %1832 = vmatprep.subr.mxu0 0.0
  %1833 = vmatpush2.msra.mxu0 0.0
  %1834 = vmatprep.subr.mxu0 0.0
  %1835 = vmatpush2.msra.mxu0 0.0
  %1836 = vmatprep.subr.mxu0 0.0
  %1837 = vmatpush2.msra.mxu0 0.0
  %1838 = vmatprep.subr.mxu0 0.0
  %1839 = vmatpush2.msra.mxu0 0.0
  %1840 = vmatprep.subr.mxu0 0.0
  %1841 = vmatpush2.msra.mxu0 0.0
  %1842 = vmatprep.subr.mxu0 0.0
  %1843 = vmatpush2.msra.mxu0 0.0
  %1844 = vmatprep.subr.mxu0 0.0
  %1845 = vmatpush2.msra.mxu0 0.0
  %1846 = vmatprep.subr.mxu0 0.0
  %1847 = vmatpush2.msra.mxu0 0.0
  %1848 = vmatprep.subr.mxu0 0.0
  %1849 = vmatpush2.msra.mxu0 0.0
  %1850 = vmatprep.subr.mxu0 0.0
  %1851 = vmatpush2.msra.mxu0 0.0
  %1852 = vmatprep.subr.mxu0 0.0
  %1853 = vmatpush2.msra.mxu0 0.0
  %1854 = vmatprep.subr.mxu0 0.0
  %1855 = vmatpush2.msra.mxu0 0.0
  %1856 = vmatprep.subr.mxu0 0.0
  %1857 = vmatpush2.msra.mxu0 0.0
  %1858 = vmatprep.subr.mxu0 0.0
  %1859 = vmatpush2.msra.mxu0 0.0
  %1860 = vmatprep.mubr.f32.mxu0 0.0
  %1861 = vmatmul.mubr.f32.gmra.mxu0 %v1791
  %v1862 = vpop.f32.mrf.mxu0
  %v1863 = vadd.f32 0.0, %v1862
  %v1864 = vpop.f32.mrf.mxu0
  %v1865 = vadd.f32 0.0, %v1864
  %1866 = vmatprep.mubr.f32.mxu0 0.0
  %1867 = vmatmul.mubr.f32.gmra.mxu0 %v1794
  %v1868 = vpop.f32.mrf.mxu0
  %v1869 = vadd.f32 0.0, %v1868
  %v1870 = vpop.f32.mrf.mxu0
  %v1871 = vadd.f32 0.0, %v1870
  %1872 = vdwg.mxu0
  %1873 = vmatprep.subr.mxu0 0.0
  %1874 = vmatpush1.msra.mxu0 0.0
  %1875 = vmatprep.subr.mxu0 0.0
  %1876 = vmatpush1.msra.mxu0 0.0
  %1877 = vmatprep.subr.mxu0 0.0
  %1878 = vmatpush1.msra.mxu0 0.0
  %1879 = vmatprep.subr.mxu0 0.0
  %1880 = vmatpush1.msra.mxu0 0.0
  %1881 = vmatprep.subr.mxu0 0.0
  %1882 = vmatpush1.msra.mxu0 0.0
  %1883 = vmatprep.subr.mxu0 0.0
  %1884 = vmatpush1.msra.mxu0 0.0
  %1885 = vmatprep.subr.mxu0 0.0
  %1886 = vmatpush1.msra.mxu0 0.0
  %1887 = vmatprep.subr.mxu0 0.0
  %1888 = vmatpush1.msra.mxu0 0.0
  %1889 = vmatprep.subr.mxu0 0.0
  %1890 = vmatpush1.msra.mxu0 0.0
  %1891 = vmatprep.subr.mxu0 0.0
  %1892 = vmatpush1.msra.mxu0 0.0
  %1893 = vmatprep.subr.mxu0 0.0
  %1894 = vmatpush1.msra.mxu0 0.0
  %1895 = vmatprep.subr.mxu0 0.0
  %1896 = vmatpush1.msra.mxu0 0.0
  %1897 = vmatprep.subr.mxu0 %v1789
  %1898 = vmatpush1.msra.mxu0 %v1788
  %1899 = vmatprep.subr.mxu0 %v1785
  %1900 = vmatpush1.msra.mxu0 %v1784
  %1901 = vmatprep.subr.mxu0 %v1781
  %1902 = vmatpush1.msra.mxu0 %v1780
  %1903 = vmatprep.subr.mxu0 %v1777
  %1904 = vmatpush1.msra.mxu0 %v1776
  %1905 = vmatprep.subr.mxu0 0.0
  %1906 = vmatpush2.msra.mxu0 0.0
  %1907 = vmatprep.subr.mxu0 0.0
  %1908 = vmatpush2.msra.mxu0 0.0
  %1909 = vmatprep.subr.mxu0 0.0
  %1910 = vmatpush2.msra.mxu0 0.0
  %1911 = vmatprep.subr.mxu0 0.0
  %1912 = vmatpush2.msra.mxu0 0.0
  %1913 = vmatprep.subr.mxu0 0.0
  %1914 = vmatpush2.msra.mxu0 0.0
  %1915 = vmatprep.subr.mxu0 0.0
  %1916 = vmatpush2.msra.mxu0 0.0
  %1917 = vmatprep.subr.mxu0 0.0
  %1918 = vmatpush2.msra.mxu0 0.0
  %1919 = vmatprep.subr.mxu0 0.0
  %1920 = vmatpush2.msra.mxu0 0.0
  %1921 = vmatprep.subr.mxu0 0.0
  %1922 = vmatpush2.msra.mxu0 0.0
  %1923 = vmatprep.subr.mxu0 0.0
  %1924 = vmatpush2.msra.mxu0 0.0
  %1925 = vmatprep.subr.mxu0 0.0
  %1926 = vmatpush2.msra.mxu0 0.0
  %1927 = vmatprep.subr.mxu0 0.0
  %1928 = vmatpush2.msra.mxu0 0.0
  %1929 = vmatprep.subr.mxu0 0.0
  %1930 = vmatpush2.msra.mxu0 0.0
  %1931 = vmatprep.subr.mxu0 0.0
  %1932 = vmatpush2.msra.mxu0 0.0
  %1933 = vmatprep.subr.mxu0 0.0
  %1934 = vmatpush2.msra.mxu0 0.0
  %1935 = vmatprep.subr.mxu0 0.0
  %1936 = vmatpush2.msra.mxu0 0.0
  %1937 = vmatprep.mubr.f32.mxu0 0.0
  %1938 = vmatmul.mubr.f32.gmra.mxu0 %v1791
  %v1939 = vpop.f32.mrf.mxu0
  %v1940 = vadd.f32 0.0, %v1939
  %v1941 = vpop.f32.mrf.mxu0
  %v1942 = vadd.f32 0.0, %v1941
  %1943 = vmatprep.mubr.f32.mxu0 0.0
  %1944 = vmatmul.mubr.f32.gmra.mxu0 %v1794
  %v1945 = vpop.f32.mrf.mxu0
  %v1946 = vadd.f32 0.0, %v1945
  %v1947 = vpop.f32.mrf.mxu0
  %v1948 = vadd.f32 0.0, %v1947
  %1949 = vdwg.mxu0
  %v1951 = vsel %vm562, %v1673, 0
  %v1954 = vsel %vm562, %v1678, 0
  %1956 = vmatprep.subr.mxu0 0.0
  %1957 = vmatpush1.msra.mxu0 0.0
  %1958 = vmatprep.subr.mxu0 0.0
  %1959 = vmatpush1.msra.mxu0 0.0
  %1960 = vmatprep.subr.mxu0 0.0
  %1961 = vmatpush1.msra.mxu0 0.0
  %1962 = vmatprep.subr.mxu0 0.0
  %1963 = vmatpush1.msra.mxu0 0.0
  %1964 = vmatprep.subr.mxu0 0.0
  %1965 = vmatpush1.msra.mxu0 0.0
  %1966 = vmatprep.subr.mxu0 0.0
  %1967 = vmatpush1.msra.mxu0 0.0
  %1968 = vmatprep.subr.mxu0 0.0
  %1969 = vmatpush1.msra.mxu0 0.0
  %1970 = vmatprep.subr.mxu0 0.0
  %1971 = vmatpush1.msra.mxu0 0.0
  %1972 = vmatprep.subr.mxu0 0.0
  %1973 = vmatpush1.msra.mxu0 0.0
  %1974 = vmatprep.subr.mxu0 0.0
  %1975 = vmatpush1.msra.mxu0 0.0
  %1976 = vmatprep.subr.mxu0 0.0
  %1977 = vmatpush1.msra.mxu0 0.0
  %1978 = vmatprep.subr.mxu0 0.0
  %1979 = vmatpush1.msra.mxu0 0.0
  %1980 = vmatprep.subr.mxu0 %v1770
  %1981 = vmatpush1.msra.mxu0 %v1769
  %1982 = vmatprep.subr.mxu0 %v1766
  %1983 = vmatpush1.msra.mxu0 %v1765
  %1984 = vmatprep.subr.mxu0 %v1762
  %1985 = vmatpush1.msra.mxu0 %v1761
  %1986 = vmatprep.subr.mxu0 %v1758
  %1987 = vmatpush1.msra.mxu0 %v1757
  %1988 = vmatprep.subr.mxu0 0.0
  %1989 = vmatpush2.msra.mxu0 0.0
  %1990 = vmatprep.subr.mxu0 0.0
  %1991 = vmatpush2.msra.mxu0 0.0
  %1992 = vmatprep.subr.mxu0 0.0
  %1993 = vmatpush2.msra.mxu0 0.0
  %1994 = vmatprep.subr.mxu0 0.0
  %1995 = vmatpush2.msra.mxu0 0.0
  %1996 = vmatprep.subr.mxu0 0.0
  %1997 = vmatpush2.msra.mxu0 0.0
  %1998 = vmatprep.subr.mxu0 0.0
  %1999 = vmatpush2.msra.mxu0 0.0
  %2000 = vmatprep.subr.mxu0 0.0
  %2001 = vmatpush2.msra.mxu0 0.0
  %2002 = vmatprep.subr.mxu0 0.0
  %2003 = vmatpush2.msra.mxu0 0.0
  %2004 = vmatprep.subr.mxu0 0.0
  %2005 = vmatpush2.msra.mxu0 0.0
  %2006 = vmatprep.subr.mxu0 0.0
  %2007 = vmatpush2.msra.mxu0 0.0
  %2008 = vmatprep.subr.mxu0 0.0
  %2009 = vmatpush2.msra.mxu0 0.0
  %2010 = vmatprep.subr.mxu0 0.0
  %2011 = vmatpush2.msra.mxu0 0.0
  %2012 = vmatprep.subr.mxu0 0.0
  %2013 = vmatpush2.msra.mxu0 0.0
  %2014 = vmatprep.subr.mxu0 0.0
  %2015 = vmatpush2.msra.mxu0 0.0
  %2016 = vmatprep.subr.mxu0 0.0
  %2017 = vmatpush2.msra.mxu0 0.0
  %2018 = vmatprep.subr.mxu0 0.0
  %2019 = vmatpush2.msra.mxu0 0.0
  %2020 = vmatprep.mubr.f32.mxu0 0.0
  %2021 = vmatmul.mubr.f32.gmra.mxu0 %v1951
  %v2022 = vpop.f32.mrf.mxu0
  %v2023 = vadd.f32 %v1863, %v2022
  %v2024 = vpop.f32.mrf.mxu0
  %v2025 = vadd.f32 %v1865, %v2024
  %2026 = vmatprep.mubr.f32.mxu0 0.0
  %2027 = vmatmul.mubr.f32.gmra.mxu0 %v1954
  %v2028 = vpop.f32.mrf.mxu0
  %v2029 = vadd.f32 %v1869, %v2028
  %v2030 = vpop.f32.mrf.mxu0
  %v2031 = vadd.f32 %v1871, %v2030
  %2032 = vdwg.mxu0
  %2033 = vmatprep.subr.mxu0 0.0
  %2034 = vmatpush1.msra.mxu0 0.0
  %2035 = vmatprep.subr.mxu0 0.0
  %2036 = vmatpush1.msra.mxu0 0.0
  %2037 = vmatprep.subr.mxu0 0.0
  %2038 = vmatpush1.msra.mxu0 0.0
  %2039 = vmatprep.subr.mxu0 0.0
  %2040 = vmatpush1.msra.mxu0 0.0
  %2041 = vmatprep.subr.mxu0 0.0
  %2042 = vmatpush1.msra.mxu0 0.0
  %2043 = vmatprep.subr.mxu0 0.0
  %2044 = vmatpush1.msra.mxu0 0.0
  %2045 = vmatprep.subr.mxu0 0.0
  %2046 = vmatpush1.msra.mxu0 0.0
  %2047 = vmatprep.subr.mxu0 0.0
  %2048 = vmatpush1.msra.mxu0 0.0
  %2049 = vmatprep.subr.mxu0 0.0
  %2050 = vmatpush1.msra.mxu0 0.0
  %2051 = vmatprep.subr.mxu0 0.0
  %2052 = vmatpush1.msra.mxu0 0.0
  %2053 = vmatprep.subr.mxu0 0.0
  %2054 = vmatpush1.msra.mxu0 0.0
  %2055 = vmatprep.subr.mxu0 0.0
  %2056 = vmatpush1.msra.mxu0 0.0
  %2057 = vmatprep.subr.mxu0 %v1772
  %2058 = vmatpush1.msra.mxu0 %v1771
  %2059 = vmatprep.subr.mxu0 %v1768
  %2060 = vmatpush1.msra.mxu0 %v1767
  %2061 = vmatprep.subr.mxu0 %v1764
  %2062 = vmatpush1.msra.mxu0 %v1763
  %2063 = vmatprep.subr.mxu0 %v1760
  %2064 = vmatpush1.msra.mxu0 %v1759
  %2065 = vmatprep.subr.mxu0 0.0
  %2066 = vmatpush2.msra.mxu0 0.0
  %2067 = vmatprep.subr.mxu0 0.0
  %2068 = vmatpush2.msra.mxu0 0.0
  %2069 = vmatprep.subr.mxu0 0.0
  %2070 = vmatpush2.msra.mxu0 0.0
  %2071 = vmatprep.subr.mxu0 0.0
  %2072 = vmatpush2.msra.mxu0 0.0
  %2073 = vmatprep.subr.mxu0 0.0
  %2074 = vmatpush2.msra.mxu0 0.0
  %2075 = vmatprep.subr.mxu0 0.0
  %2076 = vmatpush2.msra.mxu0 0.0
  %2077 = vmatprep.subr.mxu0 0.0
  %2078 = vmatpush2.msra.mxu0 0.0
  %2079 = vmatprep.subr.mxu0 0.0
  %2080 = vmatpush2.msra.mxu0 0.0
  %2081 = vmatprep.subr.mxu0 0.0
  %2082 = vmatpush2.msra.mxu0 0.0
  %2083 = vmatprep.subr.mxu0 0.0
  %2084 = vmatpush2.msra.mxu0 0.0
  %2085 = vmatprep.subr.mxu0 0.0
  %2086 = vmatpush2.msra.mxu0 0.0
  %2087 = vmatprep.subr.mxu0 0.0
  %2088 = vmatpush2.msra.mxu0 0.0
  %2089 = vmatprep.subr.mxu0 0.0
  %2090 = vmatpush2.msra.mxu0 0.0
  %2091 = vmatprep.subr.mxu0 0.0
  %2092 = vmatpush2.msra.mxu0 0.0
  %2093 = vmatprep.subr.mxu0 0.0
  %2094 = vmatpush2.msra.mxu0 0.0
  %2095 = vmatprep.subr.mxu0 0.0
  %2096 = vmatpush2.msra.mxu0 0.0
  %2097 = vmatprep.mubr.f32.mxu0 0.0
  %2098 = vmatmul.mubr.f32.gmra.mxu0 %v1951
  %v2099 = vpop.f32.mrf.mxu0
  %v2100 = vadd.f32 %v1940, %v2099
  %v2101 = vpop.f32.mrf.mxu0
  %v2102 = vadd.f32 %v1942, %v2101
  %2103 = vmatprep.mubr.f32.mxu0 0.0
  %2104 = vmatmul.mubr.f32.gmra.mxu0 %v1954
  %v2105 = vpop.f32.mrf.mxu0
  %v2106 = vadd.f32 %v1946, %v2105
  %v2107 = vpop.f32.mrf.mxu0
  %v2108 = vadd.f32 %v1948, %v2107
  %2109 = vdwg.mxu0
  %v2110 = vmul.f32 %v2023, %v231
  %v2111 = vmul.f32 %v2025, %v232
  %v2112 = vmul.f32 %v2100, %v233
  %v2113 = vmul.f32 %v2102, %v234
  %v2114 = vmul.f32 %v2029, %v235
  %v2115 = vmul.f32 %v2031, %v236
  %v2116 = vmul.f32 %v2106, %v237
  %v2117 = vmul.f32 %v2108, %v238
  %2118 = vmatprep.subr.mxu0 0.0
  %2119 = vmatpush1.msra.mxu0 %v254
  %2120 = vmatprep.subr.mxu0 0.0
  %2121 = vmatpush1.msra.mxu0 %v253
  %2122 = vmatprep.subr.mxu0 0.0
  %2123 = vmatpush1.msra.mxu0 %v252
  %2124 = vmatprep.subr.mxu0 0.0
  %2125 = vmatpush1.msra.mxu0 %v251
  %2126 = vmatprep.subr.mxu0 0.0
  %2127 = vmatpush1.msra.mxu0 %v250
  %2128 = vmatprep.subr.mxu0 0.0
  %2129 = vmatpush1.msra.mxu0 %v249
  %2130 = vmatprep.subr.mxu0 0.0
  %2131 = vmatpush1.msra.mxu0 %v248
  %2132 = vmatprep.subr.mxu0 0.0
  %2133 = vmatpush1.msra.mxu0 %v247
  %2134 = vmatprep.subr.mxu0 0.0
  %2135 = vmatpush1.msra.mxu0 %v246
  %2136 = vmatprep.subr.mxu0 0.0
  %2137 = vmatpush1.msra.mxu0 %v245
  %2138 = vmatprep.subr.mxu0 0.0
  %2139 = vmatpush1.msra.mxu0 %v244
  %2140 = vmatprep.subr.mxu0 0.0
  %2141 = vmatpush1.msra.mxu0 %v243
  %2142 = vmatprep.subr.mxu0 0.0
  %2143 = vmatpush1.msra.mxu0 %v242
  %2144 = vmatprep.subr.mxu0 0.0
  %2145 = vmatpush1.msra.mxu0 %v241
  %2146 = vmatprep.subr.mxu0 0.0
  %2147 = vmatpush1.msra.mxu0 %v240
  %2148 = vmatprep.subr.mxu0 0.0
  %2149 = vmatpush1.msra.mxu0 %v239
  %2150 = vmatprep.subr.mxu0 0.0
  %2151 = vmatpush2.msra.mxu0 %v270
  %2152 = vmatprep.subr.mxu0 0.0
  %2153 = vmatpush2.msra.mxu0 %v269
  %2154 = vmatprep.subr.mxu0 0.0
  %2155 = vmatpush2.msra.mxu0 %v268
  %2156 = vmatprep.subr.mxu0 0.0
  %2157 = vmatpush2.msra.mxu0 %v267
  %2158 = vmatprep.subr.mxu0 0.0
  %2159 = vmatpush2.msra.mxu0 %v266
  %2160 = vmatprep.subr.mxu0 0.0
  %2161 = vmatpush2.msra.mxu0 %v265
  %2162 = vmatprep.subr.mxu0 0.0
  %2163 = vmatpush2.msra.mxu0 %v264
  %2164 = vmatprep.subr.mxu0 0.0
  %2165 = vmatpush2.msra.mxu0 %v263
  %2166 = vmatprep.subr.mxu0 0.0
  %2167 = vmatpush2.msra.mxu0 %v262
  %2168 = vmatprep.subr.mxu0 0.0
  %2169 = vmatpush2.msra.mxu0 %v261
  %2170 = vmatprep.subr.mxu0 0.0
  %2171 = vmatpush2.msra.mxu0 %v260
  %2172 = vmatprep.subr.mxu0 0.0
  %2173 = vmatpush2.msra.mxu0 %v259
  %2174 = vmatprep.subr.mxu0 0.0
  %2175 = vmatpush2.msra.mxu0 %v258
  %2176 = vmatprep.subr.mxu0 0.0
  %2177 = vmatpush2.msra.mxu0 %v257
  %2178 = vmatprep.subr.mxu0 0.0
  %2179 = vmatpush2.msra.mxu0 %v256
  %2180 = vmatprep.subr.mxu0 0.0
  %2181 = vmatpush2.msra.mxu0 %v255
  %2182 = vmatprep.mubr.f32.mxu0 %v2111
  %2183 = vmatmul.mubr.f32.gmra.mxu0 %v2110
  %v2184 = vpop.f32.mrf.mxu0
  %v2185 = vadd.f32 0.0, %v2184
  %v2186 = vpop.f32.mrf.mxu0
  %2187 = vmatprep.mubr.f32.mxu0 %v2115
  %2188 = vmatmul.mubr.f32.gmra.mxu0 %v2114
  %v2189 = vpop.f32.mrf.mxu0
  %v2190 = vadd.f32 0.0, %v2189
  %v2191 = vpop.f32.mrf.mxu0
  %2192 = vdwg.mxu0
  %2193 = vmatprep.subr.mxu0 0.0
  %2194 = vmatpush1.msra.mxu0 %v286
  %2195 = vmatprep.subr.mxu0 0.0
  %2196 = vmatpush1.msra.mxu0 %v285
  %2197 = vmatprep.subr.mxu0 0.0
  %2198 = vmatpush1.msra.mxu0 %v284
  %2199 = vmatprep.subr.mxu0 0.0
  %2200 = vmatpush1.msra.mxu0 %v283
  %2201 = vmatprep.subr.mxu0 0.0
  %2202 = vmatpush1.msra.mxu0 %v282
  %2203 = vmatprep.subr.mxu0 0.0
  %2204 = vmatpush1.msra.mxu0 %v281
  %2205 = vmatprep.subr.mxu0 0.0
  %2206 = vmatpush1.msra.mxu0 %v280
  %2207 = vmatprep.subr.mxu0 0.0
  %2208 = vmatpush1.msra.mxu0 %v279
  %2209 = vmatprep.subr.mxu0 0.0
  %2210 = vmatpush1.msra.mxu0 %v278
  %2211 = vmatprep.subr.mxu0 0.0
  %2212 = vmatpush1.msra.mxu0 %v277
  %2213 = vmatprep.subr.mxu0 0.0
  %2214 = vmatpush1.msra.mxu0 %v276
  %2215 = vmatprep.subr.mxu0 0.0
  %2216 = vmatpush1.msra.mxu0 %v275
  %2217 = vmatprep.subr.mxu0 0.0
  %2218 = vmatpush1.msra.mxu0 %v274
  %2219 = vmatprep.subr.mxu0 0.0
  %2220 = vmatpush1.msra.mxu0 %v273
  %2221 = vmatprep.subr.mxu0 0.0
  %2222 = vmatpush1.msra.mxu0 %v272
  %2223 = vmatprep.subr.mxu0 0.0
  %2224 = vmatpush1.msra.mxu0 %v271
  %2225 = vmatprep.subr.mxu0 0.0
  %2226 = vmatpush2.msra.mxu0 %v302
  %2227 = vmatprep.subr.mxu0 0.0
  %2228 = vmatpush2.msra.mxu0 %v301
  %2229 = vmatprep.subr.mxu0 0.0
  %2230 = vmatpush2.msra.mxu0 %v300
  %2231 = vmatprep.subr.mxu0 0.0
  %2232 = vmatpush2.msra.mxu0 %v299
  %2233 = vmatprep.subr.mxu0 0.0
  %2234 = vmatpush2.msra.mxu0 %v298
  %2235 = vmatprep.subr.mxu0 0.0
  %2236 = vmatpush2.msra.mxu0 %v297
  %2237 = vmatprep.subr.mxu0 0.0
  %2238 = vmatpush2.msra.mxu0 %v296
  %2239 = vmatprep.subr.mxu0 0.0
  %2240 = vmatpush2.msra.mxu0 %v295
  %2241 = vmatprep.subr.mxu0 0.0
  %2242 = vmatpush2.msra.mxu0 %v294
  %2243 = vmatprep.subr.mxu0 0.0
  %2244 = vmatpush2.msra.mxu0 %v293
  %2245 = vmatprep.subr.mxu0 0.0
  %2246 = vmatpush2.msra.mxu0 %v292
  %2247 = vmatprep.subr.mxu0 0.0
  %2248 = vmatpush2.msra.mxu0 %v291
  %2249 = vmatprep.subr.mxu0 0.0
  %2250 = vmatpush2.msra.mxu0 %v290
  %2251 = vmatprep.subr.mxu0 0.0
  %2252 = vmatpush2.msra.mxu0 %v289
  %2253 = vmatprep.subr.mxu0 0.0
  %2254 = vmatpush2.msra.mxu0 %v288
  %2255 = vmatprep.subr.mxu0 0.0
  %2256 = vmatpush2.msra.mxu0 %v287
  %2257 = vmatprep.mubr.f32.mxu0 %v2113
  %2258 = vmatmul.mubr.f32.gmra.mxu0 %v2112
  %v2259 = vpop.f32.mrf.mxu0
  %v2260 = vadd.f32 %v2185, %v2259
  %v2261 = vpop.f32.mrf.mxu0
  %2262 = vmatprep.mubr.f32.mxu0 %v2117
  %2263 = vmatmul.mubr.f32.gmra.mxu0 %v2116
  %v2264 = vpop.f32.mrf.mxu0
  %v2265 = vadd.f32 %v2190, %v2264
  %v2266 = vpop.f32.mrf.mxu0
  %2267 = vdwg.mxu0
  %2268 = vmatprep.subr.mxu0 0.0
  %2269 = vmatpush1.msra.mxu0 %v318
  %2270 = vmatprep.subr.mxu0 0.0
  %2271 = vmatpush1.msra.mxu0 %v317
  %2272 = vmatprep.subr.mxu0 0.0
  %2273 = vmatpush1.msra.mxu0 %v316
  %2274 = vmatprep.subr.mxu0 0.0
  %2275 = vmatpush1.msra.mxu0 %v315
  %2276 = vmatprep.subr.mxu0 0.0
  %2277 = vmatpush1.msra.mxu0 %v314
  %2278 = vmatprep.subr.mxu0 0.0
  %2279 = vmatpush1.msra.mxu0 %v313
  %2280 = vmatprep.subr.mxu0 0.0
  %2281 = vmatpush1.msra.mxu0 %v312
  %2282 = vmatprep.subr.mxu0 0.0
  %2283 = vmatpush1.msra.mxu0 %v311
  %2284 = vmatprep.subr.mxu0 0.0
  %2285 = vmatpush1.msra.mxu0 %v310
  %2286 = vmatprep.subr.mxu0 0.0
  %2287 = vmatpush1.msra.mxu0 %v309
  %2288 = vmatprep.subr.mxu0 0.0
  %2289 = vmatpush1.msra.mxu0 %v308
  %2290 = vmatprep.subr.mxu0 0.0
  %2291 = vmatpush1.msra.mxu0 %v307
  %2292 = vmatprep.subr.mxu0 0.0
  %2293 = vmatpush1.msra.mxu0 %v306
  %2294 = vmatprep.subr.mxu0 0.0
  %2295 = vmatpush1.msra.mxu0 %v305
  %2296 = vmatprep.subr.mxu0 0.0
  %2297 = vmatpush1.msra.mxu0 %v304
  %2298 = vmatprep.subr.mxu0 0.0
  %2299 = vmatpush1.msra.mxu0 %v303
  %2300 = vmatprep.subr.mxu0 0.0
  %2301 = vmatpush2.msra.mxu0 %v334
  %2302 = vmatprep.subr.mxu0 0.0
  %2303 = vmatpush2.msra.mxu0 %v333
  %2304 = vmatprep.subr.mxu0 0.0
  %2305 = vmatpush2.msra.mxu0 %v332
  %2306 = vmatprep.subr.mxu0 0.0
  %2307 = vmatpush2.msra.mxu0 %v331
  %2308 = vmatprep.subr.mxu0 0.0
  %2309 = vmatpush2.msra.mxu0 %v330
  %2310 = vmatprep.subr.mxu0 0.0
  %2311 = vmatpush2.msra.mxu0 %v329
  %2312 = vmatprep.subr.mxu0 0.0
  %2313 = vmatpush2.msra.mxu0 %v328
  %2314 = vmatprep.subr.mxu0 0.0
  %2315 = vmatpush2.msra.mxu0 %v327
  %2316 = vmatprep.subr.mxu0 0.0
  %2317 = vmatpush2.msra.mxu0 %v326
  %2318 = vmatprep.subr.mxu0 0.0
  %2319 = vmatpush2.msra.mxu0 %v325
  %2320 = vmatprep.subr.mxu0 0.0
  %2321 = vmatpush2.msra.mxu0 %v324
  %2322 = vmatprep.subr.mxu0 0.0
  %2323 = vmatpush2.msra.mxu0 %v323
  %2324 = vmatprep.subr.mxu0 0.0
  %2325 = vmatpush2.msra.mxu0 %v322
  %2326 = vmatprep.subr.mxu0 0.0
  %2327 = vmatpush2.msra.mxu0 %v321
  %2328 = vmatprep.subr.mxu0 0.0
  %2329 = vmatpush2.msra.mxu0 %v320
  %2330 = vmatprep.subr.mxu0 0.0
  %2331 = vmatpush2.msra.mxu0 %v319
  %2332 = vmatprep.mubr.f32.mxu0 %v2111
  %2333 = vmatmul.mubr.f32.gmra.mxu0 %v2110
  %v2334 = vpop.f32.mrf.mxu0
  %v2335 = vadd.f32 0.0, %v2334
  %v2336 = vpop.f32.mrf.mxu0
  %2337 = vmatprep.mubr.f32.mxu0 %v2115
  %2338 = vmatmul.mubr.f32.gmra.mxu0 %v2114
  %v2339 = vpop.f32.mrf.mxu0
  %v2340 = vadd.f32 0.0, %v2339
  %v2341 = vpop.f32.mrf.mxu0
  %2342 = vdwg.mxu0
  %2343 = vmatprep.subr.mxu0 0.0
  %2344 = vmatpush1.msra.mxu0 %v350
  %2345 = vmatprep.subr.mxu0 0.0
  %2346 = vmatpush1.msra.mxu0 %v349
  %2347 = vmatprep.subr.mxu0 0.0
  %2348 = vmatpush1.msra.mxu0 %v348
  %2349 = vmatprep.subr.mxu0 0.0
  %2350 = vmatpush1.msra.mxu0 %v347
  %2351 = vmatprep.subr.mxu0 0.0
  %2352 = vmatpush1.msra.mxu0 %v346
  %2353 = vmatprep.subr.mxu0 0.0
  %2354 = vmatpush1.msra.mxu0 %v345
  %2355 = vmatprep.subr.mxu0 0.0
  %2356 = vmatpush1.msra.mxu0 %v344
  %2357 = vmatprep.subr.mxu0 0.0
  %2358 = vmatpush1.msra.mxu0 %v343
  %2359 = vmatprep.subr.mxu0 0.0
  %2360 = vmatpush1.msra.mxu0 %v342
  %2361 = vmatprep.subr.mxu0 0.0
  %2362 = vmatpush1.msra.mxu0 %v341
  %2363 = vmatprep.subr.mxu0 0.0
  %2364 = vmatpush1.msra.mxu0 %v340
  %2365 = vmatprep.subr.mxu0 0.0
  %2366 = vmatpush1.msra.mxu0 %v339
  %2367 = vmatprep.subr.mxu0 0.0
  %2368 = vmatpush1.msra.mxu0 %v338
  %2369 = vmatprep.subr.mxu0 0.0
  %2370 = vmatpush1.msra.mxu0 %v337
  %2371 = vmatprep.subr.mxu0 0.0
  %2372 = vmatpush1.msra.mxu0 %v336
  %2373 = vmatprep.subr.mxu0 0.0
  %2374 = vmatpush1.msra.mxu0 %v335
  %2375 = vmatprep.subr.mxu0 0.0
  %2376 = vmatpush2.msra.mxu0 %v366
  %2377 = vmatprep.subr.mxu0 0.0
  %2378 = vmatpush2.msra.mxu0 %v365
  %2379 = vmatprep.subr.mxu0 0.0
  %2380 = vmatpush2.msra.mxu0 %v364
  %2381 = vmatprep.subr.mxu0 0.0
  %2382 = vmatpush2.msra.mxu0 %v363
  %2383 = vmatprep.subr.mxu0 0.0
  %2384 = vmatpush2.msra.mxu0 %v362
  %2385 = vmatprep.subr.mxu0 0.0
  %2386 = vmatpush2.msra.mxu0 %v361
  %2387 = vmatprep.subr.mxu0 0.0
  %2388 = vmatpush2.msra.mxu0 %v360
  %2389 = vmatprep.subr.mxu0 0.0
  %2390 = vmatpush2.msra.mxu0 %v359
  %2391 = vmatprep.subr.mxu0 0.0
  %2392 = vmatpush2.msra.mxu0 %v358
  %2393 = vmatprep.subr.mxu0 0.0
  %2394 = vmatpush2.msra.mxu0 %v357
  %2395 = vmatprep.subr.mxu0 0.0
  %2396 = vmatpush2.msra.mxu0 %v356
  %2397 = vmatprep.subr.mxu0 0.0
  %2398 = vmatpush2.msra.mxu0 %v355
  %2399 = vmatprep.subr.mxu0 0.0
  %2400 = vmatpush2.msra.mxu0 %v354
  %2401 = vmatprep.subr.mxu0 0.0
  %2402 = vmatpush2.msra.mxu0 %v353
  %2403 = vmatprep.subr.mxu0 0.0
  %2404 = vmatpush2.msra.mxu0 %v352
  %2405 = vmatprep.subr.mxu0 0.0
  %2406 = vmatpush2.msra.mxu0 %v351
  %2407 = vmatprep.mubr.f32.mxu0 %v2113
  %2408 = vmatmul.mubr.f32.gmra.mxu0 %v2112
  %v2409 = vpop.f32.mrf.mxu0
  %v2410 = vadd.f32 %v2335, %v2409
  %v2411 = vpop.f32.mrf.mxu0
  %2412 = vmatprep.mubr.f32.mxu0 %v2117
  %2413 = vmatmul.mubr.f32.gmra.mxu0 %v2116
  %v2414 = vpop.f32.mrf.mxu0
  %v2415 = vadd.f32 %v2340, %v2414
  %v2416 = vpop.f32.mrf.mxu0
  %2417 = vdwg.mxu0
  %2418 = vmatprep.subr.mxu0 0.0
  %2419 = vmatpush1.msra.mxu0 0.0
  %2420 = vmatprep.subr.mxu0 0.0
  %2421 = vmatpush1.msra.mxu0 0.0
  %2422 = vmatprep.subr.mxu0 0.0
  %2423 = vmatpush1.msra.mxu0 0.0
  %2424 = vmatprep.subr.mxu0 0.0
  %2425 = vmatpush1.msra.mxu0 0.0
  %2426 = vmatprep.subr.mxu0 0.0
  %2427 = vmatpush1.msra.mxu0 0.0
  %2428 = vmatprep.subr.mxu0 0.0
  %2429 = vmatpush1.msra.mxu0 0.0
  %2430 = vmatprep.subr.mxu0 0.0
  %2431 = vmatpush1.msra.mxu0 0.0
  %2432 = vmatprep.subr.mxu0 0.0
  %2433 = vmatpush1.msra.mxu0 0.0
  %2434 = vmatprep.subr.mxu0 0.0
  %2435 = vmatpush1.msra.mxu0 0.0
  %2436 = vmatprep.subr.mxu0 0.0
  %2437 = vmatpush1.msra.mxu0 0.0
  %2438 = vmatprep.subr.mxu0 0.0
  %2439 = vmatpush1.msra.mxu0 0.0
  %2440 = vmatprep.subr.mxu0 0.0
  %2441 = vmatpush1.msra.mxu0 0.0
  %2442 = vmatprep.subr.mxu0 0.0
  %2443 = vmatpush1.msra.mxu0 0.0
  %2444 = vmatprep.subr.mxu0 0.0
  %2445 = vmatpush1.msra.mxu0 0.0
  %2446 = vmatprep.subr.mxu0 0.0
  %2447 = vmatpush1.msra.mxu0 %v2415
  %2448 = vmatprep.subr.mxu0 0.0
  %2449 = vmatpush1.msra.mxu0 %v2410
  %2450 = vmatprep.subr.mxu0 0.0
  %2451 = vmatpush2.msra.mxu0 0.0
  %2452 = vmatprep.subr.mxu0 0.0
  %2453 = vmatpush2.msra.mxu0 0.0
  %2454 = vmatprep.subr.mxu0 0.0
  %2455 = vmatpush2.msra.mxu0 0.0
  %2456 = vmatprep.subr.mxu0 0.0
  %2457 = vmatpush2.msra.mxu0 0.0
  %2458 = vmatprep.subr.mxu0 0.0
  %2459 = vmatpush2.msra.mxu0 0.0
  %2460 = vmatprep.subr.mxu0 0.0
  %2461 = vmatpush2.msra.mxu0 0.0
  %2462 = vmatprep.subr.mxu0 0.0
  %2463 = vmatpush2.msra.mxu0 0.0
  %2464 = vmatprep.subr.mxu0 0.0
  %2465 = vmatpush2.msra.mxu0 0.0
  %2466 = vmatprep.subr.mxu0 0.0
  %2467 = vmatpush2.msra.mxu0 0.0
  %2468 = vmatprep.subr.mxu0 0.0
  %2469 = vmatpush2.msra.mxu0 0.0
  %2470 = vmatprep.subr.mxu0 0.0
  %2471 = vmatpush2.msra.mxu0 0.0
  %2472 = vmatprep.subr.mxu0 0.0
  %2473 = vmatpush2.msra.mxu0 0.0
  %2474 = vmatprep.subr.mxu0 0.0
  %2475 = vmatpush2.msra.mxu0 0.0
  %2476 = vmatprep.subr.mxu0 0.0
  %2477 = vmatpush2.msra.mxu0 0.0
  %2478 = vmatprep.subr.mxu0 0.0
  %2479 = vmatpush2.msra.mxu0 0.0
  %2480 = vmatprep.subr.mxu0 0.0
  %2481 = vmatpush2.msra.mxu0 0.0
  %2482 = vmatprep.mubr.f32.mxu0 0.0
  %2483 = vmatmul.mubr.f32.gmra.mxu0 %v1193
  %v2484 = vpop.f32.mrf.mxu0
  %v2485 = vadd.f32 0.0, %v2484
  %v2486 = vpop.f32.mrf.mxu0
  %2487 = vmatprep.mubr.f32.mxu0 0.0
  %2488 = vmatmul.mubr.f32.gmra.mxu0 %v1196
  %v2489 = vpop.f32.mrf.mxu0
  %v2490 = vadd.f32 0.0, %v2489
  %v2491 = vpop.f32.mrf.mxu0
  %2492 = vmatprep.mubr.f32.mxu0 0.0
  %2493 = vmatmul.mubr.f32.gmra.mxu0 %v1199
  %v2494 = vpop.f32.mrf.mxu0
  %v2495 = vadd.f32 0.0, %v2494
  %v2496 = vpop.f32.mrf.mxu0
  %2497 = vmatprep.mubr.f32.mxu0 0.0
  %2498 = vmatmul.mubr.f32.gmra.mxu0 %v1202
  %v2499 = vpop.f32.mrf.mxu0
  %v2500 = vadd.f32 0.0, %v2499
  %v2501 = vpop.f32.mrf.mxu0
  %2502 = vmatprep.mubr.f32.mxu0 0.0
  %2503 = vmatmul.mubr.f32.gmra.mxu0 %v1205
  %v2504 = vpop.f32.mrf.mxu0
  %v2505 = vadd.f32 0.0, %v2504
  %v2506 = vpop.f32.mrf.mxu0
  %2507 = vmatprep.mubr.f32.mxu0 0.0
  %2508 = vmatmul.mubr.f32.gmra.mxu0 %v1208
  %v2509 = vpop.f32.mrf.mxu0
  %v2510 = vadd.f32 0.0, %v2509
  %v2511 = vpop.f32.mrf.mxu0
  %2512 = vmatprep.mubr.f32.mxu0 0.0
  %2513 = vmatmul.mubr.f32.gmra.mxu0 %v1211
  %v2514 = vpop.f32.mrf.mxu0
  %v2515 = vadd.f32 0.0, %v2514
  %v2516 = vpop.f32.mrf.mxu0
  %2517 = vmatprep.mubr.f32.mxu0 0.0
  %2518 = vmatmul.mubr.f32.gmra.mxu0 %v1214
  %v2519 = vpop.f32.mrf.mxu0
  %v2520 = vadd.f32 0.0, %v2519
  %v2521 = vpop.f32.mrf.mxu0
  %2522 = vdwg.mxu0
  %2523 = vmatprep.subr.mxu0 0.0
  %2524 = vmatpush1.msra.mxu0 0.0
  %2525 = vmatprep.subr.mxu0 0.0
  %2526 = vmatpush1.msra.mxu0 0.0
  %2527 = vmatprep.subr.mxu0 0.0
  %2528 = vmatpush1.msra.mxu0 0.0
  %2529 = vmatprep.subr.mxu0 0.0
  %2530 = vmatpush1.msra.mxu0 0.0
  %2531 = vmatprep.subr.mxu0 0.0
  %2532 = vmatpush1.msra.mxu0 0.0
  %2533 = vmatprep.subr.mxu0 0.0
  %2534 = vmatpush1.msra.mxu0 0.0
  %2535 = vmatprep.subr.mxu0 0.0
  %2536 = vmatpush1.msra.mxu0 0.0
  %2537 = vmatprep.subr.mxu0 0.0
  %2538 = vmatpush1.msra.mxu0 0.0
  %2539 = vmatprep.subr.mxu0 0.0
  %2540 = vmatpush1.msra.mxu0 0.0
  %2541 = vmatprep.subr.mxu0 0.0
  %2542 = vmatpush1.msra.mxu0 0.0
  %2543 = vmatprep.subr.mxu0 0.0
  %2544 = vmatpush1.msra.mxu0 0.0
  %2545 = vmatprep.subr.mxu0 0.0
  %2546 = vmatpush1.msra.mxu0 0.0
  %2547 = vmatprep.subr.mxu0 0.0
  %2548 = vmatpush1.msra.mxu0 0.0
  %2549 = vmatprep.subr.mxu0 0.0
  %2550 = vmatpush1.msra.mxu0 0.0
  %2551 = vmatprep.subr.mxu0 0.0
  %2552 = vmatpush1.msra.mxu0 %v2265
  %2553 = vmatprep.subr.mxu0 0.0
  %2554 = vmatpush1.msra.mxu0 %v2260
  %2555 = vmatprep.subr.mxu0 0.0
  %2556 = vmatpush2.msra.mxu0 0.0
  %2557 = vmatprep.subr.mxu0 0.0
  %2558 = vmatpush2.msra.mxu0 0.0
  %2559 = vmatprep.subr.mxu0 0.0
  %2560 = vmatpush2.msra.mxu0 0.0
  %2561 = vmatprep.subr.mxu0 0.0
  %2562 = vmatpush2.msra.mxu0 0.0
  %2563 = vmatprep.subr.mxu0 0.0
  %2564 = vmatpush2.msra.mxu0 0.0
  %2565 = vmatprep.subr.mxu0 0.0
  %2566 = vmatpush2.msra.mxu0 0.0
  %2567 = vmatprep.subr.mxu0 0.0
  %2568 = vmatpush2.msra.mxu0 0.0
  %2569 = vmatprep.subr.mxu0 0.0
  %2570 = vmatpush2.msra.mxu0 0.0
  %2571 = vmatprep.subr.mxu0 0.0
  %2572 = vmatpush2.msra.mxu0 0.0
  %2573 = vmatprep.subr.mxu0 0.0
  %2574 = vmatpush2.msra.mxu0 0.0
  %2575 = vmatprep.subr.mxu0 0.0
  %2576 = vmatpush2.msra.mxu0 0.0
  %2577 = vmatprep.subr.mxu0 0.0
  %2578 = vmatpush2.msra.mxu0 0.0
  %2579 = vmatprep.subr.mxu0 0.0
  %2580 = vmatpush2.msra.mxu0 0.0
  %2581 = vmatprep.subr.mxu0 0.0
  %2582 = vmatpush2.msra.mxu0 0.0
  %2583 = vmatprep.subr.mxu0 0.0
  %2584 = vmatpush2.msra.mxu0 0.0
  %2585 = vmatprep.subr.mxu0 0.0
  %2586 = vmatpush2.msra.mxu0 0.0
  %2587 = vmatprep.mubr.f32.mxu0 0.0
  %2588 = vmatmul.mubr.f32.gmra.mxu0 %v1322
  %v2589 = vpop.f32.mrf.mxu0
  %v2590 = vadd.f32 %v2485, %v2589
  %v2591 = vpop.f32.mrf.mxu0
  %2592 = vmatprep.mubr.f32.mxu0 0.0
  %2593 = vmatmul.mubr.f32.gmra.mxu0 %v1325
  %v2594 = vpop.f32.mrf.mxu0
  %v2595 = vadd.f32 %v2490, %v2594
  %v2596 = vpop.f32.mrf.mxu0
  %2597 = vmatprep.mubr.f32.mxu0 0.0
  %2598 = vmatmul.mubr.f32.gmra.mxu0 %v1328
  %v2599 = vpop.f32.mrf.mxu0
  %v2600 = vadd.f32 %v2495, %v2599
  %v2601 = vpop.f32.mrf.mxu0
  %2602 = vmatprep.mubr.f32.mxu0 0.0
  %2603 = vmatmul.mubr.f32.gmra.mxu0 %v1331
  %v2604 = vpop.f32.mrf.mxu0
  %v2605 = vadd.f32 %v2500, %v2604
  %v2606 = vpop.f32.mrf.mxu0
  %2607 = vmatprep.mubr.f32.mxu0 0.0
  %2608 = vmatmul.mubr.f32.gmra.mxu0 %v1334
  %v2609 = vpop.f32.mrf.mxu0
  %v2610 = vadd.f32 %v2505, %v2609
  %v2611 = vpop.f32.mrf.mxu0
  %2612 = vmatprep.mubr.f32.mxu0 0.0
  %2613 = vmatmul.mubr.f32.gmra.mxu0 %v1337
  %v2614 = vpop.f32.mrf.mxu0
  %v2615 = vadd.f32 %v2510, %v2614
  %v2616 = vpop.f32.mrf.mxu0
  %2617 = vmatprep.mubr.f32.mxu0 0.0
  %2618 = vmatmul.mubr.f32.gmra.mxu0 %v1340
  %v2619 = vpop.f32.mrf.mxu0
  %v2620 = vadd.f32 %v2515, %v2619
  %v2621 = vpop.f32.mrf.mxu0
  %2622 = vmatprep.mubr.f32.mxu0 0.0
  %2623 = vmatmul.mubr.f32.gmra.mxu0 %v1343
  %v2624 = vpop.f32.mrf.mxu0
  %v2625 = vadd.f32 %v2520, %v2624
  %v2626 = vpop.f32.mrf.mxu0
  %2627 = vdwg.mxu0
  %s2628 = scalar_lea.vmem %s12, 32
  %v2629 = vld [vmem:[%s2628] sm:$0xff]
  %v2630 = vld [vmem:[%s2628 + $0x8] sm:$0xff]
  %v2631 = vld [vmem:[%s2628 + $0x10] sm:$0xff]
  %v2632 = vld [vmem:[%s2628 + $0x18] sm:$0xff]
  %s2633 = scalar_lea.vmem %s13, 1
  %v2634 = vld [vmem:[%s2633] sm:$0x1]
  %v2636 = vlaneseq
  %v2637 = vshrl.u32 %v2636, 7
  %v2638 = vsub.s32 0, %v2637
  %v2639 = vrot.slane %v2634, %v2638
  %v2642 = vsel %vm562, %v1598, 0
  %v2645 = vsel %vm562, %v1599, 0
  %v2648 = vsel %vm562, %v1600, 0
  %v2651 = vsel %vm562, %v1601, 0
  %v2654 = vsel %vm562, %v1602, 0
  %v2657 = vsel %vm562, %v1603, 0
  %v2660 = vsel %vm562, %v1604, 0
  %v2663 = vsel %vm562, %v1605, 0
  %2665 = vmatprep.subr.mxu0 0.0
  %2666 = vmatpush1.msra.mxu0 0.0
  %2667 = vmatprep.subr.mxu0 0.0
  %2668 = vmatpush1.msra.mxu0 0.0
  %2669 = vmatprep.subr.mxu0 0.0
  %2670 = vmatpush1.msra.mxu0 0.0
  %2671 = vmatprep.subr.mxu0 0.0
  %2672 = vmatpush1.msra.mxu0 0.0
  %2673 = vmatprep.subr.mxu0 0.0
  %2674 = vmatpush1.msra.mxu0 0.0
  %2675 = vmatprep.subr.mxu0 0.0
  %2676 = vmatpush1.msra.mxu0 0.0
  %2677 = vmatprep.subr.mxu0 0.0
  %2678 = vmatpush1.msra.mxu0 0.0
  %2679 = vmatprep.subr.mxu0 0.0
  %2680 = vmatpush1.msra.mxu0 0.0
  %2681 = vmatprep.subr.mxu0 0.0
  %2682 = vmatpush1.msra.mxu0 0.0
  %2683 = vmatprep.subr.mxu0 0.0
  %2684 = vmatpush1.msra.mxu0 0.0
  %2685 = vmatprep.subr.mxu0 0.0
  %2686 = vmatpush1.msra.mxu0 0.0
  %2687 = vmatprep.subr.mxu0 0.0
  %2688 = vmatpush1.msra.mxu0 0.0
  %2689 = vmatprep.subr.mxu0 0.0
  %2690 = vmatpush1.msra.mxu0 %v2632
  %2691 = vmatprep.subr.mxu0 0.0
  %2692 = vmatpush1.msra.mxu0 %v2631
  %2693 = vmatprep.subr.mxu0 0.0
  %2694 = vmatpush1.msra.mxu0 %v2630
  %2695 = vmatprep.subr.mxu0 0.0
  %2696 = vmatpush1.msra.mxu0 %v2629
  %2697 = vmatprep.subr.mxu0 0.0
  %2698 = vmatpush2.msra.mxu0 0.0
  %2699 = vmatprep.subr.mxu0 0.0
  %2700 = vmatpush2.msra.mxu0 0.0
  %2701 = vmatprep.subr.mxu0 0.0
  %2702 = vmatpush2.msra.mxu0 0.0
  %2703 = vmatprep.subr.mxu0 0.0
  %2704 = vmatpush2.msra.mxu0 0.0
  %2705 = vmatprep.subr.mxu0 0.0
  %2706 = vmatpush2.msra.mxu0 0.0
  %2707 = vmatprep.subr.mxu0 0.0
  %2708 = vmatpush2.msra.mxu0 0.0
  %2709 = vmatprep.subr.mxu0 0.0
  %2710 = vmatpush2.msra.mxu0 0.0
  %2711 = vmatprep.subr.mxu0 0.0
  %2712 = vmatpush2.msra.mxu0 0.0
  %2713 = vmatprep.subr.mxu0 0.0
  %2714 = vmatpush2.msra.mxu0 0.0
  %2715 = vmatprep.subr.mxu0 0.0
  %2716 = vmatpush2.msra.mxu0 0.0
  %2717 = vmatprep.subr.mxu0 0.0
  %2718 = vmatpush2.msra.mxu0 0.0
  %2719 = vmatprep.subr.mxu0 0.0
  %2720 = vmatpush2.msra.mxu0 0.0
  %2721 = vmatprep.subr.mxu0 0.0
  %2722 = vmatpush2.msra.mxu0 0.0
  %2723 = vmatprep.subr.mxu0 0.0
  %2724 = vmatpush2.msra.mxu0 0.0
  %2725 = vmatprep.subr.mxu0 0.0
  %2726 = vmatpush2.msra.mxu0 0.0
  %2727 = vmatprep.subr.mxu0 0.0
  %2728 = vmatpush2.msra.mxu0 0.0
  %2729 = vmatprep.mubr.f32.mxu0 0.0
  %2730 = vmatmul.mubr.f32.gmra.mxu0 %v2642
  %v2731 = vpop.f32.mrf.mxu0
  %v2732 = vadd.f32 %v2639, %v2731
  %v2733 = vpop.f32.mrf.mxu0
  %2734 = vmatprep.mubr.f32.mxu0 0.0
  %2735 = vmatmul.mubr.f32.gmra.mxu0 %v2645
  %v2736 = vpop.f32.mrf.mxu0
  %v2737 = vadd.f32 %v2639, %v2736
  %v2738 = vpop.f32.mrf.mxu0
  %2739 = vmatprep.mubr.f32.mxu0 0.0
  %2740 = vmatmul.mubr.f32.gmra.mxu0 %v2648
  %v2741 = vpop.f32.mrf.mxu0
  %v2742 = vadd.f32 %v2639, %v2741
  %v2743 = vpop.f32.mrf.mxu0
  %2744 = vmatprep.mubr.f32.mxu0 0.0
  %2745 = vmatmul.mubr.f32.gmra.mxu0 %v2651
  %v2746 = vpop.f32.mrf.mxu0
  %v2747 = vadd.f32 %v2639, %v2746
  %v2748 = vpop.f32.mrf.mxu0
  %2749 = vmatprep.mubr.f32.mxu0 0.0
  %2750 = vmatmul.mubr.f32.gmra.mxu0 %v2654
  %v2751 = vpop.f32.mrf.mxu0
  %v2752 = vadd.f32 %v2639, %v2751
  %v2753 = vpop.f32.mrf.mxu0
  %2754 = vmatprep.mubr.f32.mxu0 0.0
  %2755 = vmatmul.mubr.f32.gmra.mxu0 %v2657
  %v2756 = vpop.f32.mrf.mxu0
  %v2757 = vadd.f32 %v2639, %v2756
  %v2758 = vpop.f32.mrf.mxu0
  %2759 = vmatprep.mubr.f32.mxu0 0.0
  %2760 = vmatmul.mubr.f32.gmra.mxu0 %v2660
  %v2761 = vpop.f32.mrf.mxu0
  %v2762 = vadd.f32 %v2639, %v2761
  %v2763 = vpop.f32.mrf.mxu0
  %2764 = vmatprep.mubr.f32.mxu0 0.0
  %2765 = vmatmul.mubr.f32.gmra.mxu0 %v2663
  %v2766 = vpop.f32.mrf.mxu0
  %v2767 = vadd.f32 %v2639, %v2766
  %v2768 = vpop.f32.mrf.mxu0
  %2769 = vdwg.mxu0
  %v2770 = vadd.f32 %v2590, %v2732
  %v2771 = vadd.f32 %v2595, %v2737
  %v2772 = vadd.f32 %v2600, %v2742
  %v2773 = vadd.f32 %v2605, %v2747
  %v2774 = vadd.f32 %v2610, %v2752
  %v2775 = vadd.f32 %v2615, %v2757
  %v2776 = vadd.f32 %v2620, %v2762
  %v2777 = vadd.f32 %v2625, %v2767
  %v2778 = vmax.f32 %v2770, 0.0
  %v2779 = vmax.f32 %v2771, 0.0
  %v2780 = vmax.f32 %v2772, 0.0
  %v2781 = vmax.f32 %v2773, 0.0
  %v2782 = vmax.f32 %v2774, 0.0
  %v2783 = vmax.f32 %v2775, 0.0
  %v2784 = vmax.f32 %v2776, 0.0
  %v2785 = vmax.f32 %v2777, 0.0
  %v2786 = vld [vmem:[%s14] sm:$0xff]
  %v2787 = vld [vmem:[%s14 + $0x8] sm:$0xff]
  %v2788 = vld [vmem:[%s14 + $0x10] sm:$0xff]
  %v2789 = vld [vmem:[%s14 + $0x18] sm:$0xff]
  %v2790 = vld [vmem:[%s15] sm:$0x1]
  %v2792 = vlaneseq
  %v2793 = vshrl.u32 %v2792, 7
  %v2794 = vsub.s32 0, %v2793
  %v2795 = vrot.slane %v2790, %v2794
  %v2798 = vsel %vm562, %v2778, 0
  %v2801 = vsel %vm562, %v2779, 0
  %v2804 = vsel %vm562, %v2780, 0
  %v2807 = vsel %vm562, %v2781, 0
  %v2810 = vsel %vm562, %v2782, 0
  %v2813 = vsel %vm562, %v2783, 0
  %v2816 = vsel %vm562, %v2784, 0
  %v2819 = vsel %vm562, %v2785, 0
  %2821 = vmatprep.subr.mxu0 0.0
  %2822 = vmatpush1.msra.mxu0 0.0
  %2823 = vmatprep.subr.mxu0 0.0
  %2824 = vmatpush1.msra.mxu0 0.0
  %2825 = vmatprep.subr.mxu0 0.0
  %2826 = vmatpush1.msra.mxu0 0.0
  %2827 = vmatprep.subr.mxu0 0.0
  %2828 = vmatpush1.msra.mxu0 0.0
  %2829 = vmatprep.subr.mxu0 0.0
  %2830 = vmatpush1.msra.mxu0 0.0
  %2831 = vmatprep.subr.mxu0 0.0
  %2832 = vmatpush1.msra.mxu0 0.0
  %2833 = vmatprep.subr.mxu0 0.0
  %2834 = vmatpush1.msra.mxu0 0.0
  %2835 = vmatprep.subr.mxu0 0.0
  %2836 = vmatpush1.msra.mxu0 0.0
  %2837 = vmatprep.subr.mxu0 0.0
  %2838 = vmatpush1.msra.mxu0 0.0
  %2839 = vmatprep.subr.mxu0 0.0
  %2840 = vmatpush1.msra.mxu0 0.0
  %2841 = vmatprep.subr.mxu0 0.0
  %2842 = vmatpush1.msra.mxu0 0.0
  %2843 = vmatprep.subr.mxu0 0.0
  %2844 = vmatpush1.msra.mxu0 0.0
  %2845 = vmatprep.subr.mxu0 0.0
  %2846 = vmatpush1.msra.mxu0 %v2789
  %2847 = vmatprep.subr.mxu0 0.0
  %2848 = vmatpush1.msra.mxu0 %v2788
  %2849 = vmatprep.subr.mxu0 0.0
  %2850 = vmatpush1.msra.mxu0 %v2787
  %2851 = vmatprep.subr.mxu0 0.0
  %2852 = vmatpush1.msra.mxu0 %v2786
  %2853 = vmatprep.subr.mxu0 0.0
  %2854 = vmatpush2.msra.mxu0 0.0
  %2855 = vmatprep.subr.mxu0 0.0
  %2856 = vmatpush2.msra.mxu0 0.0
  %2857 = vmatprep.subr.mxu0 0.0
  %2858 = vmatpush2.msra.mxu0 0.0
  %2859 = vmatprep.subr.mxu0 0.0
  %2860 = vmatpush2.msra.mxu0 0.0
  %2861 = vmatprep.subr.mxu0 0.0
  %2862 = vmatpush2.msra.mxu0 0.0
  %2863 = vmatprep.subr.mxu0 0.0
  %2864 = vmatpush2.msra.mxu0 0.0
  %2865 = vmatprep.subr.mxu0 0.0
  %2866 = vmatpush2.msra.mxu0 0.0
  %2867 = vmatprep.subr.mxu0 0.0
  %2868 = vmatpush2.msra.mxu0 0.0
  %2869 = vmatprep.subr.mxu0 0.0
  %2870 = vmatpush2.msra.mxu0 0.0
  %2871 = vmatprep.subr.mxu0 0.0
  %2872 = vmatpush2.msra.mxu0 0.0
  %2873 = vmatprep.subr.mxu0 0.0
  %2874 = vmatpush2.msra.mxu0 0.0
  %2875 = vmatprep.subr.mxu0 0.0
  %2876 = vmatpush2.msra.mxu0 0.0
  %2877 = vmatprep.subr.mxu0 0.0
  %2878 = vmatpush2.msra.mxu0 0.0
  %2879 = vmatprep.subr.mxu0 0.0
  %2880 = vmatpush2.msra.mxu0 0.0
  %2881 = vmatprep.subr.mxu0 0.0
  %2882 = vmatpush2.msra.mxu0 0.0
  %2883 = vmatprep.subr.mxu0 0.0
  %2884 = vmatpush2.msra.mxu0 0.0
  %2885 = vmatprep.mubr.f32.mxu0 0.0
  %2886 = vmatmul.mubr.f32.gmra.mxu0 %v2798
  %v2887 = vpop.f32.mrf.mxu0
  %v2888 = vadd.f32 %v2795, %v2887
  %v2889 = vpop.f32.mrf.mxu0
  %2890 = vmatprep.mubr.f32.mxu0 0.0
  %2891 = vmatmul.mubr.f32.gmra.mxu0 %v2801
  %v2892 = vpop.f32.mrf.mxu0
  %v2893 = vadd.f32 %v2795, %v2892
  %v2894 = vpop.f32.mrf.mxu0
  %2895 = vmatprep.mubr.f32.mxu0 0.0
  %2896 = vmatmul.mubr.f32.gmra.mxu0 %v2804
  %v2897 = vpop.f32.mrf.mxu0
  %v2898 = vadd.f32 %v2795, %v2897
  %v2899 = vpop.f32.mrf.mxu0
  %2900 = vmatprep.mubr.f32.mxu0 0.0
  %2901 = vmatmul.mubr.f32.gmra.mxu0 %v2807
  %v2902 = vpop.f32.mrf.mxu0
  %v2903 = vadd.f32 %v2795, %v2902
  %v2904 = vpop.f32.mrf.mxu0
  %2905 = vmatprep.mubr.f32.mxu0 0.0
  %2906 = vmatmul.mubr.f32.gmra.mxu0 %v2810
  %v2907 = vpop.f32.mrf.mxu0
  %v2908 = vadd.f32 %v2795, %v2907
  %v2909 = vpop.f32.mrf.mxu0
  %2910 = vmatprep.mubr.f32.mxu0 0.0
  %2911 = vmatmul.mubr.f32.gmra.mxu0 %v2813
  %v2912 = vpop.f32.mrf.mxu0
  %v2913 = vadd.f32 %v2795, %v2912
  %v2914 = vpop.f32.mrf.mxu0
  %2915 = vmatprep.mubr.f32.mxu0 0.0
  %2916 = vmatmul.mubr.f32.gmra.mxu0 %v2816
  %v2917 = vpop.f32.mrf.mxu0
  %v2918 = vadd.f32 %v2795, %v2917
  %v2919 = vpop.f32.mrf.mxu0
  %2920 = vmatprep.mubr.f32.mxu0 0.0
  %2921 = vmatmul.mubr.f32.gmra.mxu0 %v2819
  %v2922 = vpop.f32.mrf.mxu0
  %v2923 = vadd.f32 %v2795, %v2922
  %v2924 = vpop.f32.mrf.mxu0
  %2925 = vdwg.mxu0
  %v2926 = vmax.f32 %v2888, 0.0
  %v2927 = vmax.f32 %v2893, 0.0
  %v2928 = vmax.f32 %v2898, 0.0
  %v2929 = vmax.f32 %v2903, 0.0
  %v2930 = vmax.f32 %v2908, 0.0
  %v2931 = vmax.f32 %v2913, 0.0
  %v2932 = vmax.f32 %v2918, 0.0
  %v2933 = vmax.f32 %v2923, 0.0
  %v2934 = vld [vmem:[%s16] sm:$0xff]
  %v2935 = vld [vmem:[%s16 + $0x8] sm:$0xff]
  %v2936 = vld [vmem:[%s16 + $0x10] sm:$0xff]
  %v2937 = vld [vmem:[%s16 + $0x18] sm:$0xff]
  %v2938 = vld [vmem:[%s16 + $0x20] sm:$0xff]
  %v2939 = vld [vmem:[%s16 + $0x28] sm:$0xff]
  %v2940 = vld [vmem:[%s16 + $0x30] sm:$0xff]
  %v2941 = vld [vmem:[%s16 + $0x38] sm:$0xff]
  %v2942 = vld [vmem:[#allocation2] sm:$0x1]
  %v2944 = vlaneseq
  %v2945 = vshrl.u32 %v2944, 7
  %v2946 = vsub.s32 0, %v2945
  %v2947 = vrot.slane %v2942, %v2946
  %v2950 = vsel %vm367, %v2926, 0
  %v2953 = vsel %vm367, %v2927, 0
  %v2956 = vsel %vm367, %v2928, 0
  %v2959 = vsel %vm367, %v2929, 0
  %v2962 = vsel %vm367, %v2930, 0
  %v2965 = vsel %vm367, %v2931, 0
  %v2968 = vsel %vm367, %v2932, 0
  %v2971 = vsel %vm367, %v2933, 0
  %2973 = vmatprep.subr.mxu0 0.0
  %2974 = vmatpush1.msra.mxu0 0.0
  %2975 = vmatprep.subr.mxu0 0.0
  %2976 = vmatpush1.msra.mxu0 0.0
  %2977 = vmatprep.subr.mxu0 0.0
  %2978 = vmatpush1.msra.mxu0 0.0
  %2979 = vmatprep.subr.mxu0 0.0
  %2980 = vmatpush1.msra.mxu0 0.0
  %2981 = vmatprep.subr.mxu0 0.0
  %2982 = vmatpush1.msra.mxu0 0.0
  %2983 = vmatprep.subr.mxu0 0.0
  %2984 = vmatpush1.msra.mxu0 0.0
  %2985 = vmatprep.subr.mxu0 0.0
  %2986 = vmatpush1.msra.mxu0 0.0
  %2987 = vmatprep.subr.mxu0 0.0
  %2988 = vmatpush1.msra.mxu0 0.0
  %2989 = vmatprep.subr.mxu0 0.0
  %2990 = vmatpush1.msra.mxu0 %v2941
  %2991 = vmatprep.subr.mxu0 0.0
  %2992 = vmatpush1.msra.mxu0 %v2940
  %2993 = vmatprep.subr.mxu0 0.0
  %2994 = vmatpush1.msra.mxu0 %v2939
  %2995 = vmatprep.subr.mxu0 0.0
  %2996 = vmatpush1.msra.mxu0 %v2938
  %2997 = vmatprep.subr.mxu0 0.0
  %2998 = vmatpush1.msra.mxu0 %v2937
  %2999 = vmatprep.subr.mxu0 0.0
  %3000 = vmatpush1.msra.mxu0 %v2936
  %3001 = vmatprep.subr.mxu0 0.0
  %3002 = vmatpush1.msra.mxu0 %v2935
  %3003 = vmatprep.subr.mxu0 0.0
  %3004 = vmatpush1.msra.mxu0 %v2934
  %3005 = vmatprep.subr.mxu0 0.0
  %3006 = vmatpush2.msra.mxu0 0.0
  %3007 = vmatprep.subr.mxu0 0.0
  %3008 = vmatpush2.msra.mxu0 0.0
  %3009 = vmatprep.subr.mxu0 0.0
  %3010 = vmatpush2.msra.mxu0 0.0
  %3011 = vmatprep.subr.mxu0 0.0
  %3012 = vmatpush2.msra.mxu0 0.0
  %3013 = vmatprep.subr.mxu0 0.0
  %3014 = vmatpush2.msra.mxu0 0.0
  %3015 = vmatprep.subr.mxu0 0.0
  %3016 = vmatpush2.msra.mxu0 0.0
  %3017 = vmatprep.subr.mxu0 0.0
  %3018 = vmatpush2.msra.mxu0 0.0
  %3019 = vmatprep.subr.mxu0 0.0
  %3020 = vmatpush2.msra.mxu0 0.0
  %3021 = vmatprep.subr.mxu0 0.0
  %3022 = vmatpush2.msra.mxu0 0.0
  %3023 = vmatprep.subr.mxu0 0.0
  %3024 = vmatpush2.msra.mxu0 0.0
  %3025 = vmatprep.subr.mxu0 0.0
  %3026 = vmatpush2.msra.mxu0 0.0
  %3027 = vmatprep.subr.mxu0 0.0
  %3028 = vmatpush2.msra.mxu0 0.0
  %3029 = vmatprep.subr.mxu0 0.0
  %3030 = vmatpush2.msra.mxu0 0.0
  %3031 = vmatprep.subr.mxu0 0.0
  %3032 = vmatpush2.msra.mxu0 0.0
  %3033 = vmatprep.subr.mxu0 0.0
  %3034 = vmatpush2.msra.mxu0 0.0
  %3035 = vmatprep.subr.mxu0 0.0
  %3036 = vmatpush2.msra.mxu0 0.0
  %3037 = vmatprep.mubr.f32.mxu0 0.0
  %3038 = vmatmul.mubr.f32.gmra.mxu0 %v2950
  %v3039 = vpop.f32.mrf.mxu0
  %v3040 = vadd.f32 %v2947, %v3039
  %v3041 = vpop.f32.mrf.mxu0
  %3042 = vmatprep.mubr.f32.mxu0 0.0
  %3043 = vmatmul.mubr.f32.gmra.mxu0 %v2953
  %v3044 = vpop.f32.mrf.mxu0
  %v3045 = vadd.f32 %v2947, %v3044
  %v3046 = vpop.f32.mrf.mxu0
  %3047 = vmatprep.mubr.f32.mxu0 0.0
  %3048 = vmatmul.mubr.f32.gmra.mxu0 %v2956
  %v3049 = vpop.f32.mrf.mxu0
  %v3050 = vadd.f32 %v2947, %v3049
  %v3051 = vpop.f32.mrf.mxu0
  %3052 = vmatprep.mubr.f32.mxu0 0.0
  %3053 = vmatmul.mubr.f32.gmra.mxu0 %v2959
  %v3054 = vpop.f32.mrf.mxu0
  %v3055 = vadd.f32 %v2947, %v3054
  %v3056 = vpop.f32.mrf.mxu0
  %3057 = vmatprep.mubr.f32.mxu0 0.0
  %3058 = vmatmul.mubr.f32.gmra.mxu0 %v2962
  %v3059 = vpop.f32.mrf.mxu0
  %v3060 = vadd.f32 %v2947, %v3059
  %v3061 = vpop.f32.mrf.mxu0
  %3062 = vmatprep.mubr.f32.mxu0 0.0
  %3063 = vmatmul.mubr.f32.gmra.mxu0 %v2965
  %v3064 = vpop.f32.mrf.mxu0
  %v3065 = vadd.f32 %v2947, %v3064
  %v3066 = vpop.f32.mrf.mxu0
  %3067 = vmatprep.mubr.f32.mxu0 0.0
  %3068 = vmatmul.mubr.f32.gmra.mxu0 %v2968
  %v3069 = vpop.f32.mrf.mxu0
  %v3070 = vadd.f32 %v2947, %v3069
  %v3071 = vpop.f32.mrf.mxu0
  %3072 = vmatprep.mubr.f32.mxu0 0.0
  %3073 = vmatmul.mubr.f32.gmra.mxu0 %v2971
  %v3074 = vpop.f32.mrf.mxu0
  %v3075 = vadd.f32 %v2947, %v3074
  %v3076 = vpop.f32.mrf.mxu0
  %3077 = vdwg.mxu0
  %vm3078 = vcmask 7168
  %3079 = vst.msk [vmem:[%s18] sm:$0xff] %vm3078, %v3040
  %3080 = vst.msk [vmem:[%s18 + $0x8] sm:$0xff] %vm3078, %v3045
  %3081 = vst.msk [vmem:[%s18 + $0x10] sm:$0xff] %vm3078, %v3050
  %3082 = vst.msk [vmem:[%s18 + $0x18] sm:$0xff] %vm3078, %v3055
  %3083 = vst.msk [vmem:[%s18 + $0x20] sm:$0xff] %vm3078, %v3060
  %3084 = vst.msk [vmem:[%s18 + $0x28] sm:$0xff] %vm3078, %v3065
  %3085 = vst.msk [vmem:[%s18 + $0x30] sm:$0xff] %vm3078, %v3070
  %3086 = vst.msk [vmem:[%s18 + $0x38] sm:$0xff] %vm3078, %v3075
  // Predicated region
  $region74: #{tpu_custom_call.1} parent=0 // pred_check
    _
  $region75: #{tpu_custom_call.1} parent=0 // pred_check_branch
    %3088 = sbr.rel (0) target = $region77
  $region76: #{tpu_custom_call.1} parent=0 // pred_region
    _
  $region77: #{tpu_custom_call.1} parent=0 // pred_fallthru
    _
  // Predicated region
  $region78: #{tpu_custom_call.1} parent=0 // pred_check
    _
  $region79: #{tpu_custom_call.1} parent=0 // pred_check_branch
    %3090 = sbr.rel (0) target = $region81
  $region80: #{tpu_custom_call.1} parent=0 // pred_region
    _
  $region81: #{tpu_custom_call.1} parent=0 // pred_fallthru
    _

</llo_original>
